<compile_context>
chip_gen: v7x
topology: tpu7x:2x2x1
jax: 0.10.0
libtpu: 0.0.40
codegen_flags: <defaults>
</compile_context>

<pallas_src>
import functools

import jax
import jax.numpy as jnp
from jax import lax
from jax.experimental import pallas as pl
from jax.experimental.pallas import tpu as pltpu


def _har_kernel(x_ref, cw_ref, cb_ref,
                wih1_ref, whh1_ref, b1_ref,
                wih2_ref, whh2_ref, b2_ref,
                wlin_ref, blin_ref,
                logits_ref, embed_ref,
                *, hidden, seq_len, batch_p):
    H, T, Bp = hidden, seq_len, batch_p
    bf16 = jnp.bfloat16
    f32 = jnp.float32

    # ---- Phase 0: conv (pure VPU broadcast mul-add + relu) and the batched
    # layer-1 input projection over all timesteps (off the recurrent chain).
    feat = jnp.maximum(x_ref[...] * cw_ref[...] + cb_ref[...], 0.0)    # [T*Bp, 64W]
    g1x = (jnp.dot(feat.astype(bf16), wih1_ref[...],
                   preferred_element_type=f32) + b1_ref[...])          # [T*Bp, 4H]

    # Hoisted weight / bias reads (read once, live across the unrolled loop).
    whh1 = whh1_ref[...]
    wih2 = wih2_ref[...]
    whh2 = whh2_ref[...]
    b2 = b2_ref[...]

    def cell(gx, h, c, whh):
        # gx already carries x@Wih + (bih + bhh); only the tiny K=H recurrent
        # dot sits on the serial path.  PyTorch gate order is i, f, g, o; the
        # g block of the weights/bias was pre-scaled by 2 in prepare_params,
        # so tanh(z) = 2*sigmoid(2z) - 1 falls out of the single full-width
        # sigmoid pass (2 EUP pushes per cell instead of 3).
        g = jnp.dot(h.astype(bf16), whh, preferred_element_type=f32) + gx
        sg = jax.nn.sigmoid(g)                       # one EUP pass, all 4 gates
        i = sg[:, 0 * H:1 * H]
        f = sg[:, 1 * H:2 * H]
        gg = 2.0 * sg[:, 2 * H:3 * H] - 1.0          # tanh via sigmoid identity
        o = sg[:, 3 * H:4 * H]
        c = f * c + i * gg
        h = o * jnp.tanh(c)
        return h, c

    # ---- Wavefronted recurrence: layer-2 step t directly follows layer-1
    # step t; layer-1 step t+1 is independent of layer-2 step t, so the LLO
    # scheduler can overlap them.  No VMEM staging of h1.
    h1 = jnp.zeros((Bp, H), f32)
    c1 = jnp.zeros((Bp, H), f32)
    h2 = jnp.zeros((Bp, H), f32)
    c2 = jnp.zeros((Bp, H), f32)
    acc = jnp.zeros((Bp, H), f32)
    for t in range(T):
        h1, c1 = cell(g1x[t * Bp:(t + 1) * Bp, :], h1, c1, whh1)
        g2x = jnp.dot(h1.astype(bf16), wih2, preferred_element_type=f32) + b2
        h2, c2 = cell(g2x, h2, c2, whh2)
        acc = acc + h2

    # ---- Temporal mean + final linear.
    embed = acc * (1.0 / T)
    embed_ref[...] = embed
    logits_ref[...] = (jnp.dot(embed.astype(bf16), wlin_ref[...],
                               preferred_element_type=f32) + blin_ref[...])


# ------------------- one-time parameter preprocessing ------------------------
def prepare_params(p, *, spatial):
    """All weight massaging hoisted out of the per-call path (run once)."""
    W = spatial
    H4 = p['wih0'].shape[0]
    H = H4 // 4
    bf16 = jnp.bfloat16

    def scale_g_cols(mT):                       # mT: [in, 4H]; scale g block by 2
        return mT.at[:, 2 * H:3 * H].multiply(2.0)

    def scale_g_bias(b):                        # b: [4H]
        return b.at[2 * H:3 * H].multiply(2.0)

    # conv 1x1x1 as lane-replicated VPU scale/shift: cw[c*W + w] = conv_w[c].
    cw = jnp.repeat(p['conv_w'], W)[None, :].astype(jnp.float32)
    cb = jnp.repeat(p['conv_b'], W)[None, :].astype(jnp.float32)

    return dict(
        cw=cw, cb=cb,
        wih1T=scale_g_cols(p['wih0'].T).astype(bf16),
        whh1T=scale_g_cols(p['whh0'].T).astype(bf16),
        b1=scale_g_bias(p['bih0'] + p['bhh0'])[None, :].astype(jnp.float32),
        wih2T=scale_g_cols(p['wih1'].T).astype(bf16),
        whh2T=scale_g_cols(p['whh1'].T).astype(bf16),
        b2=scale_g_bias(p['bih1'] + p['bhh1'])[None, :].astype(jnp.float32),
        wlinT=p['wlin'].T.astype(bf16),
        blin=p['blin'][None, :].astype(jnp.float32),
    )


# ------------------------------- forward -------------------------------------
@functools.partial(jax.jit, static_argnames=("seq_len", "hidden", "logits_len"))
def har_forward(x, prep, *, seq_len, hidden, logits_len):
    """x: [B, 1, T, 1, W] float32 (PyTorch NCDHW)."""
    B = x.shape[0]
    W = x.shape[-1]
    T = seq_len
    Bp = ((B + 7) // 8) * 8                              # pad batch to 8 sublanes
    conv_out = prep['cw'].shape[1] // W

    # Layout plumbing only: squeeze channel & H, go time-major, zero-pad batch,
    # lane-replicate the W features so row t*Bp + b is a lane-dense
    # [64*W]-vector with index c*W + w -> x[t, b, w].
    # TODO(synk): fold this into the pallas_call via
    # CompilerParams(allow_input_fusion=...) once measured worthwhile.
    x_t = jnp.transpose(x[:, 0, :, 0, :], (1, 0, 2)).astype(jnp.float32)   # [T,B,W]
    x_t = jnp.pad(x_t, ((0, 0), (0, Bp - B), (0, 0)))                      # [T,Bp,W]
    x_rep = jnp.tile(x_t, (1, 1, conv_out)).reshape(T * Bp, conv_out * W)

    vmem = pl.BlockSpec(memory_space=pltpu.MemorySpace.VMEM)
    kernel = functools.partial(_har_kernel, hidden=hidden, seq_len=T, batch_p=Bp)

    # TODO(synk): for large production batch on v7x, add a padded-batch grid
    # axis with dimension_semantics=("parallel",) so both TensorCores are used.
    logits_p, embed_p = pl.pallas_call(
        kernel,
        out_shape=(jax.ShapeDtypeStruct((Bp, logits_len), jnp.float32),
                   jax.ShapeDtypeStruct((Bp, hidden), jnp.float32)),
        in_specs=[vmem] * 11,
        out_specs=(vmem, vmem),
    )(x_rep, prep['cw'], prep['cb'],
      prep['wih1T'], prep['whh1T'], prep['b1'],
      prep['wih2T'], prep['whh2T'], prep['b2'],
      prep['wlinT'], prep['blin'])

    return logits_p[:B], embed_p[:B]          # drop zero-padded batch rows


# ------------------------- pure-JAX reference (f32) --------------------------
def reference_forward(x, p, *, hidden):
    H = hidden
    xs = x[:, 0, :, 0, :].astype(jnp.float32)                   # [B, T, W]
    B, T, W = xs.shape
    conv_out = p['conv_w'].shape[0]
    feat = jax.nn.relu(p['conv_w'][None, None, :, None] * xs[:, :, None, :]
                       + p['conv_b'][None, None, :, None])      # [B, T, C, W]
    feat = jnp.transpose(feat, (1, 0, 2, 3)).reshape(T, B, conv_out * W)

    def lstm_layer(inp, wih, whh, bih, bhh):
        def step(carry, x_t):
            h, c = carry
            g = x_t @ wih.T + bih + h @ whh.T + bhh
            i = jax.nn.sigmoid(g[:, :H])
            f = jax.nn.sigmoid(g[:, H:2 * H])
            gg = jnp.tanh(g[:, 2 * H:3 * H])
            o = jax.nn.sigmoid(g[:, 3 * H:])
            c = f * c + i * gg
            h = o * jnp.tanh(c)
            return (h, c), h
        init = (jnp.zeros((B, H), jnp.float32), jnp.zeros((B, H), jnp.float32))
        _, ys = lax.scan(step, init, inp)
        return ys

    y1 = lstm_layer(feat, p['wih0'], p['whh0'], p['bih0'], p['bhh0'])
    y2 = lstm_layer(y1, p['wih1'], p['whh1'], p['bih1'], p['bhh1'])
    embed = jnp.mean(jnp.transpose(y2, (1, 0, 2)), axis=1)
    logits = embed @ p['wlin'].T + p['blin']
    return logits, embed


# ------------------------- deterministic params ------------------------------
def init_params(key, *, conv_out, spatial, hidden, logits_len):
    ks = jax.random.split(key, 12)

    def u(k, shape, scale):
        return jax.random.uniform(k, shape, jnp.float32, -scale, scale)

    in_feat = conv_out * spatial
    s_in = 1.0 / (in_feat ** 0.5)
    s_h = 1.0 / (hidden ** 0.5)
    return dict(
        conv_w=u(ks[0], (conv_out,), 0.5),
        conv_b=u(ks[1], (conv_out,), 0.1),
        wih0=u(ks[2], (4 * hidden, in_feat), s_in),
        whh0=u(ks[3], (4 * hidden, hidden), s_h),
        bih0=u(ks[4], (4 * hidden,), s_h),
        bhh0=u(ks[5], (4 * hidden,), s_h),
        wih1=u(ks[6], (4 * hidden, hidden), s_h),
        whh1=u(ks[7], (4 * hidden, hidden), s_h),
        bih1=u(ks[8], (4 * hidden,), s_h),
        bhh1=u(ks[9], (4 * hidden,), s_h),
        wlin=u(ks[10], (logits_len, hidden), s_h),
        blin=u(ks[11], (logits_len,), s_h),
    )


if __name__ == "__main__":
    B, T, Hh, Ww = 2, 8, 1, 4          # batch, seq_len, H, W  (64*1*4 = LSTM input)
    hidden, logits_len = 32, 6         # embed_len, logits_len
    key = jax.random.PRNGKey(0)
    kx, kp = jax.random.split(key)

    x = jax.random.normal(kx, (B, 1, T, Hh, Ww), jnp.float32)
    params = init_params(kp, conv_out=64, spatial=Hh * Ww,
                         hidden=hidden, logits_len=logits_len)

    prep = prepare_params(params, spatial=Hh * Ww)     # one-time weight prep

    logits, embed = jax.block_until_ready(
        har_forward(x, prep, seq_len=T, hidden=hidden, logits_len=logits_len))

    ref_logits, ref_embed = reference_forward(x, params, hidden=hidden)

    assert logits.shape == (B, logits_len) and embed.shape == (B, hidden)
    # bf16 MXU operands (f32 accumulate / f32 gate math) vs an all-f32
    # reference: tolerance 1e-2.
    assert jnp.allclose(logits, ref_logits, atol=1e-2, rtol=1e-2)
    assert jnp.allclose(embed, ref_embed, atol=1e-2, rtol=1e-2)
    print("KERNEL_OK")
</pallas_src>

<mosaic_0001>
module attributes {stable_mosaic.version = 11 : i64} {
  func.func @_har_kernel(%arg0: memref<64x256xf32, #tpu.memory_space<vmem>>, %arg1: memref<1x256xf32, #tpu.memory_space<vmem>>, %arg2: memref<1x256xf32, #tpu.memory_space<vmem>>, %arg3: memref<256x128xbf16, #tpu.memory_space<vmem>>, %arg4: memref<32x128xbf16, #tpu.memory_space<vmem>>, %arg5: memref<1x128xf32, #tpu.memory_space<vmem>>, %arg6: memref<32x128xbf16, #tpu.memory_space<vmem>>, %arg7: memref<32x128xbf16, #tpu.memory_space<vmem>>, %arg8: memref<1x128xf32, #tpu.memory_space<vmem>>, %arg9: memref<32x6xbf16, #tpu.memory_space<vmem>>, %arg10: memref<1x6xf32, #tpu.memory_space<vmem>>, %arg11: memref<8x6xf32, #tpu.memory_space<vmem>>, %arg12: memref<8x32xf32, #tpu.memory_space<vmem>>) attributes {dimension_semantics = [], scalar_prefetch = 0 : i64, scratch_operands = 0 : i64, tpu.core_type = #tpu.core_type<tc>} {
    %c0 = arith.constant 0 : index
    %c0_0 = arith.constant 0 : index
    %0 = vector.load %arg0[%c0, %c0_0] : memref<64x256xf32, #tpu.memory_space<vmem>>, vector<64x256xf32>
    %c0_1 = arith.constant 0 : index
    %c0_2 = arith.constant 0 : index
    %1 = vector.load %arg1[%c0_1, %c0_2] : memref<1x256xf32, #tpu.memory_space<vmem>>, vector<1x256xf32>
    %2 = vector.broadcast %1 : vector<1x256xf32> to vector<64x256xf32>
    %3 = arith.mulf %0, %2 : vector<64x256xf32>
    %c0_3 = arith.constant 0 : index
    %c0_4 = arith.constant 0 : index
    %4 = vector.load %arg2[%c0_3, %c0_4] : memref<1x256xf32, #tpu.memory_space<vmem>>, vector<1x256xf32>
    %5 = vector.broadcast %4 : vector<1x256xf32> to vector<64x256xf32>
    %6 = arith.addf %3, %5 : vector<64x256xf32>
    %cst = arith.constant 0.000000e+00 : f32
    %7 = vector.broadcast %cst : f32 to vector<64x256xf32>
    %8 = arith.maximumf %6, %7 : vector<64x256xf32>
    %9 = arith.truncf %8 : vector<64x256xf32> to vector<64x256xbf16>
    %c0_5 = arith.constant 0 : index
    %c0_6 = arith.constant 0 : index
    %10 = vector.load %arg3[%c0_5, %c0_6] : memref<256x128xbf16, #tpu.memory_space<vmem>>, vector<256x128xbf16>
    %cst_7 = arith.constant dense<0.000000e+00> : vector<64x128xf32>
    %11 = tpu.matmul %9, %10, %cst_7 {dimension_numbers = #tpu.dot_dimension_numbers<[1], [0], [0], [1], [0, 0, 1, 1], [], []>} : vector<64x256xbf16>, vector<256x128xbf16>, vector<64x128xf32> -> vector<64x128xf32>
    %c0_8 = arith.constant 0 : index
    %c0_9 = arith.constant 0 : index
    %12 = vector.load %arg5[%c0_8, %c0_9] : memref<1x128xf32, #tpu.memory_space<vmem>>, vector<1x128xf32>
    %13 = vector.broadcast %12 : vector<1x128xf32> to vector<64x128xf32>
    %14 = arith.addf %11, %13 : vector<64x128xf32>
    %c0_10 = arith.constant 0 : index
    %c0_11 = arith.constant 0 : index
    %15 = vector.load %arg4[%c0_10, %c0_11] : memref<32x128xbf16, #tpu.memory_space<vmem>>, vector<32x128xbf16>
    %c0_12 = arith.constant 0 : index
    %c0_13 = arith.constant 0 : index
    %16 = vector.load %arg6[%c0_12, %c0_13] : memref<32x128xbf16, #tpu.memory_space<vmem>>, vector<32x128xbf16>
    %c0_14 = arith.constant 0 : index
    %c0_15 = arith.constant 0 : index
    %17 = vector.load %arg7[%c0_14, %c0_15] : memref<32x128xbf16, #tpu.memory_space<vmem>>, vector<32x128xbf16>
    %c0_16 = arith.constant 0 : index
    %c0_17 = arith.constant 0 : index
    %18 = vector.load %arg8[%c0_16, %c0_17] : memref<1x128xf32, #tpu.memory_space<vmem>>, vector<1x128xf32>
    %cst_18 = arith.constant 0.000000e+00 : f32
    %19 = vector.broadcast %cst_18 : f32 to vector<8x32xf32>
    %cst_19 = arith.constant 0.000000e+00 : f32
    %20 = vector.broadcast %cst_19 : f32 to vector<8x32xf32>
    %cst_20 = arith.constant 0.000000e+00 : f32
    %21 = vector.broadcast %cst_20 : f32 to vector<8x32xf32>
    %cst_21 = arith.constant 0.000000e+00 : f32
    %22 = vector.broadcast %cst_21 : f32 to vector<8x32xf32>
    %cst_22 = arith.constant 0.000000e+00 : f32
    %23 = vector.broadcast %cst_22 : f32 to vector<8x32xf32>
    %24 = vector.extract_strided_slice %14 {offsets = [0, 0], sizes = [8, 128], strides = [1, 1]} : vector<64x128xf32> to vector<8x128xf32>
    %25 = arith.truncf %19 : vector<8x32xf32> to vector<8x32xbf16>
    %cst_23 = arith.constant dense<0.000000e+00> : vector<8x128xf32>
    %26 = tpu.matmul %25, %15, %cst_23 {dimension_numbers = #tpu.dot_dimension_numbers<[1], [0], [0], [1], [0, 0, 1, 1], [], []>} : vector<8x32xbf16>, vector<32x128xbf16>, vector<8x128xf32> -> vector<8x128xf32>
    %27 = arith.addf %26, %24 : vector<8x128xf32>
    %28 = arith.negf %27 : vector<8x128xf32>
    %29 = math.exp %28 : vector<8x128xf32>
    %cst_24 = arith.constant 1.000000e+00 : f32
    %30 = vector.broadcast %cst_24 : f32 to vector<8x128xf32>
    %31 = arith.addf %30, %29 : vector<8x128xf32>
    %32 = arith.divf %30, %31 : vector<8x128xf32>
    %33 = vector.extract_strided_slice %32 {offsets = [0, 0], sizes = [8, 32], strides = [1, 1]} : vector<8x128xf32> to vector<8x32xf32>
    %34 = vector.extract_strided_slice %32 {offsets = [0, 32], sizes = [8, 32], strides = [1, 1]} : vector<8x128xf32> to vector<8x32xf32>
    %35 = vector.extract_strided_slice %32 {offsets = [0, 64], sizes = [8, 32], strides = [1, 1]} : vector<8x128xf32> to vector<8x32xf32>
    %cst_25 = arith.constant 2.000000e+00 : f32
    %36 = vector.broadcast %cst_25 : f32 to vector<8x32xf32>
    %37 = arith.mulf %36, %35 : vector<8x32xf32>
    %cst_26 = arith.constant 1.000000e+00 : f32
    %38 = vector.broadcast %cst_26 : f32 to vector<8x32xf32>
    %39 = arith.subf %37, %38 : vector<8x32xf32>
    %40 = vector.extract_strided_slice %32 {offsets = [0, 96], sizes = [8, 32], strides = [1, 1]} : vector<8x128xf32> to vector<8x32xf32>
    %41 = arith.mulf %34, %20 : vector<8x32xf32>
    %42 = arith.mulf %33, %39 : vector<8x32xf32>
    %43 = arith.addf %41, %42 : vector<8x32xf32>
    %44 = math.tanh %43 : vector<8x32xf32>
    %45 = arith.mulf %40, %44 : vector<8x32xf32>
    %46 = arith.truncf %45 : vector<8x32xf32> to vector<8x32xbf16>
    %cst_27 = arith.constant dense<0.000000e+00> : vector<8x128xf32>
    %47 = tpu.matmul %46, %16, %cst_27 {dimension_numbers = #tpu.dot_dimension_numbers<[1], [0], [0], [1], [0, 0, 1, 1], [], []>} : vector<8x32xbf16>, vector<32x128xbf16>, vector<8x128xf32> -> vector<8x128xf32>
    %48 = vector.broadcast %18 : vector<1x128xf32> to vector<8x128xf32>
    %49 = arith.addf %47, %48 : vector<8x128xf32>
    %50 = arith.truncf %21 : vector<8x32xf32> to vector<8x32xbf16>
    %cst_28 = arith.constant dense<0.000000e+00> : vector<8x128xf32>
    %51 = tpu.matmul %50, %17, %cst_28 {dimension_numbers = #tpu.dot_dimension_numbers<[1], [0], [0], [1], [0, 0, 1, 1], [], []>} : vector<8x32xbf16>, vector<32x128xbf16>, vector<8x128xf32> -> vector<8x128xf32>
    %52 = arith.addf %51, %49 : vector<8x128xf32>
    %53 = arith.negf %52 : vector<8x128xf32>
    %54 = math.exp %53 : vector<8x128xf32>
    %cst_29 = arith.constant 1.000000e+00 : f32
    %55 = vector.broadcast %cst_29 : f32 to vector<8x128xf32>
    %56 = arith.addf %55, %54 : vector<8x128xf32>
    %57 = arith.divf %55, %56 : vector<8x128xf32>
    %58 = vector.extract_strided_slice %57 {offsets = [0, 0], sizes = [8, 32], strides = [1, 1]} : vector<8x128xf32> to vector<8x32xf32>
    %59 = vector.extract_strided_slice %57 {offsets = [0, 32], sizes = [8, 32], strides = [1, 1]} : vector<8x128xf32> to vector<8x32xf32>
    %60 = vector.extract_strided_slice %57 {offsets = [0, 64], sizes = [8, 32], strides = [1, 1]} : vector<8x128xf32> to vector<8x32xf32>
    %cst_30 = arith.constant 2.000000e+00 : f32
    %61 = vector.broadcast %cst_30 : f32 to vector<8x32xf32>
    %62 = arith.mulf %61, %60 : vector<8x32xf32>
    %cst_31 = arith.constant 1.000000e+00 : f32
    %63 = vector.broadcast %cst_31 : f32 to vector<8x32xf32>
    %64 = arith.subf %62, %63 : vector<8x32xf32>
    %65 = vector.extract_strided_slice %57 {offsets = [0, 96], sizes = [8, 32], strides = [1, 1]} : vector<8x128xf32> to vector<8x32xf32>
    %66 = arith.mulf %59, %22 : vector<8x32xf32>
    %67 = arith.mulf %58, %64 : vector<8x32xf32>
    %68 = arith.addf %66, %67 : vector<8x32xf32>
    %69 = math.tanh %68 : vector<8x32xf32>
    %70 = arith.mulf %65, %69 : vector<8x32xf32>
    %71 = arith.addf %23, %70 : vector<8x32xf32>
    %72 = vector.extract_strided_slice %14 {offsets = [8, 0], sizes = [8, 128], strides = [1, 1]} : vector<64x128xf32> to vector<8x128xf32>
    %73 = arith.truncf %45 : vector<8x32xf32> to vector<8x32xbf16>
    %cst_32 = arith.constant dense<0.000000e+00> : vector<8x128xf32>
    %74 = tpu.matmul %73, %15, %cst_32 {dimension_numbers = #tpu.dot_dimension_numbers<[1], [0], [0], [1], [0, 0, 1, 1], [], []>} : vector<8x32xbf16>, vector<32x128xbf16>, vector<8x128xf32> -> vector<8x128xf32>
    %75 = arith.addf %74, %72 : vector<8x128xf32>
    %76 = arith.negf %75 : vector<8x128xf32>
    %77 = math.exp %76 : vector<8x128xf32>
    %cst_33 = arith.constant 1.000000e+00 : f32
    %78 = vector.broadcast %cst_33 : f32 to vector<8x128xf32>
    %79 = arith.addf %78, %77 : vector<8x128xf32>
    %80 = arith.divf %78, %79 : vector<8x128xf32>
    %81 = vector.extract_strided_slice %80 {offsets = [0, 0], sizes = [8, 32], strides = [1, 1]} : vector<8x128xf32> to vector<8x32xf32>
    %82 = vector.extract_strided_slice %80 {offsets = [0, 32], sizes = [8, 32], strides = [1, 1]} : vector<8x128xf32> to vector<8x32xf32>
    %83 = vector.extract_strided_slice %80 {offsets = [0, 64], sizes = [8, 32], strides = [1, 1]} : vector<8x128xf32> to vector<8x32xf32>
    %cst_34 = arith.constant 2.000000e+00 : f32
    %84 = vector.broadcast %cst_34 : f32 to vector<8x32xf32>
    %85 = arith.mulf %84, %83 : vector<8x32xf32>
    %cst_35 = arith.constant 1.000000e+00 : f32
    %86 = vector.broadcast %cst_35 : f32 to vector<8x32xf32>
    %87 = arith.subf %85, %86 : vector<8x32xf32>
    %88 = vector.extract_strided_slice %80 {offsets = [0, 96], sizes = [8, 32], strides = [1, 1]} : vector<8x128xf32> to vector<8x32xf32>
    %89 = arith.mulf %82, %43 : vector<8x32xf32>
    %90 = arith.mulf %81, %87 : vector<8x32xf32>
    %91 = arith.addf %89, %90 : vector<8x32xf32>
    %92 = math.tanh %91 : vector<8x32xf32>
    %93 = arith.mulf %88, %92 : vector<8x32xf32>
    %94 = arith.truncf %93 : vector<8x32xf32> to vector<8x32xbf16>
    %cst_36 = arith.constant dense<0.000000e+00> : vector<8x128xf32>
    %95 = tpu.matmul %94, %16, %cst_36 {dimension_numbers = #tpu.dot_dimension_numbers<[1], [0], [0], [1], [0, 0, 1, 1], [], []>} : vector<8x32xbf16>, vector<32x128xbf16>, vector<8x128xf32> -> vector<8x128xf32>
    %96 = vector.broadcast %18 : vector<1x128xf32> to vector<8x128xf32>
    %97 = arith.addf %95, %96 : vector<8x128xf32>
    %98 = arith.truncf %70 : vector<8x32xf32> to vector<8x32xbf16>
    %cst_37 = arith.constant dense<0.000000e+00> : vector<8x128xf32>
    %99 = tpu.matmul %98, %17, %cst_37 {dimension_numbers = #tpu.dot_dimension_numbers<[1], [0], [0], [1], [0, 0, 1, 1], [], []>} : vector<8x32xbf16>, vector<32x128xbf16>, vector<8x128xf32> -> vector<8x128xf32>
    %100 = arith.addf %99, %97 : vector<8x128xf32>
    %101 = arith.negf %100 : vector<8x128xf32>
    %102 = math.exp %101 : vector<8x128xf32>
    %cst_38 = arith.constant 1.000000e+00 : f32
    %103 = vector.broadcast %cst_38 : f32 to vector<8x128xf32>
    %104 = arith.addf %103, %102 : vector<8x128xf32>
    %105 = arith.divf %103, %104 : vector<8x128xf32>
    %106 = vector.extract_strided_slice %105 {offsets = [0, 0], sizes = [8, 32], strides = [1, 1]} : vector<8x128xf32> to vector<8x32xf32>
    %107 = vector.extract_strided_slice %105 {offsets = [0, 32], sizes = [8, 32], strides = [1, 1]} : vector<8x128xf32> to vector<8x32xf32>
    %108 = vector.extract_strided_slice %105 {offsets = [0, 64], sizes = [8, 32], strides = [1, 1]} : vector<8x128xf32> to vector<8x32xf32>
    %cst_39 = arith.constant 2.000000e+00 : f32
    %109 = vector.broadcast %cst_39 : f32 to vector<8x32xf32>
    %110 = arith.mulf %109, %108 : vector<8x32xf32>
    %cst_40 = arith.constant 1.000000e+00 : f32
    %111 = vector.broadcast %cst_40 : f32 to vector<8x32xf32>
    %112 = arith.subf %110, %111 : vector<8x32xf32>
    %113 = vector.extract_strided_slice %105 {offsets = [0, 96], sizes = [8, 32], strides = [1, 1]} : vector<8x128xf32> to vector<8x32xf32>
    %114 = arith.mulf %107, %68 : vector<8x32xf32>
    %115 = arith.mulf %106, %112 : vector<8x32xf32>
    %116 = arith.addf %114, %115 : vector<8x32xf32>
    %117 = math.tanh %116 : vector<8x32xf32>
    %118 = arith.mulf %113, %117 : vector<8x32xf32>
    %119 = arith.addf %71, %118 : vector<8x32xf32>
    %120 = vector.extract_strided_slice %14 {offsets = [16, 0], sizes = [8, 128], strides = [1, 1]} : vector<64x128xf32> to vector<8x128xf32>
    %121 = arith.truncf %93 : vector<8x32xf32> to vector<8x32xbf16>
    %cst_41 = arith.constant dense<0.000000e+00> : vector<8x128xf32>
    %122 = tpu.matmul %121, %15, %cst_41 {dimension_numbers = #tpu.dot_dimension_numbers<[1], [0], [0], [1], [0, 0, 1, 1], [], []>} : vector<8x32xbf16>, vector<32x128xbf16>, vector<8x128xf32> -> vector<8x128xf32>
    %123 = arith.addf %122, %120 : vector<8x128xf32>
    %124 = arith.negf %123 : vector<8x128xf32>
    %125 = math.exp %124 : vector<8x128xf32>
    %cst_42 = arith.constant 1.000000e+00 : f32
    %126 = vector.broadcast %cst_42 : f32 to vector<8x128xf32>
    %127 = arith.addf %126, %125 : vector<8x128xf32>
    %128 = arith.divf %126, %127 : vector<8x128xf32>
    %129 = vector.extract_strided_slice %128 {offsets = [0, 0], sizes = [8, 32], strides = [1, 1]} : vector<8x128xf32> to vector<8x32xf32>
    %130 = vector.extract_strided_slice %128 {offsets = [0, 32], sizes = [8, 32], strides = [1, 1]} : vector<8x128xf32> to vector<8x32xf32>
    %131 = vector.extract_strided_slice %128 {offsets = [0, 64], sizes = [8, 32], strides = [1, 1]} : vector<8x128xf32> to vector<8x32xf32>
    %cst_43 = arith.constant 2.000000e+00 : f32
    %132 = vector.broadcast %cst_43 : f32 to vector<8x32xf32>
    %133 = arith.mulf %132, %131 : vector<8x32xf32>
    %cst_44 = arith.constant 1.000000e+00 : f32
    %134 = vector.broadcast %cst_44 : f32 to vector<8x32xf32>
    %135 = arith.subf %133, %134 : vector<8x32xf32>
    %136 = vector.extract_strided_slice %128 {offsets = [0, 96], sizes = [8, 32], strides = [1, 1]} : vector<8x128xf32> to vector<8x32xf32>
    %137 = arith.mulf %130, %91 : vector<8x32xf32>
    %138 = arith.mulf %129, %135 : vector<8x32xf32>
    %139 = arith.addf %137, %138 : vector<8x32xf32>
    %140 = math.tanh %139 : vector<8x32xf32>
    %141 = arith.mulf %136, %140 : vector<8x32xf32>
    %142 = arith.truncf %141 : vector<8x32xf32> to vector<8x32xbf16>
    %cst_45 = arith.constant dense<0.000000e+00> : vector<8x128xf32>
    %143 = tpu.matmul %142, %16, %cst_45 {dimension_numbers = #tpu.dot_dimension_numbers<[1], [0], [0], [1], [0, 0, 1, 1], [], []>} : vector<8x32xbf16>, vector<32x128xbf16>, vector<8x128xf32> -> vector<8x128xf32>
    %144 = vector.broadcast %18 : vector<1x128xf32> to vector<8x128xf32>
    %145 = arith.addf %143, %144 : vector<8x128xf32>
    %146 = arith.truncf %118 : vector<8x32xf32> to vector<8x32xbf16>
    %cst_46 = arith.constant dense<0.000000e+00> : vector<8x128xf32>
    %147 = tpu.matmul %146, %17, %cst_46 {dimension_numbers = #tpu.dot_dimension_numbers<[1], [0], [0], [1], [0, 0, 1, 1], [], []>} : vector<8x32xbf16>, vector<32x128xbf16>, vector<8x128xf32> -> vector<8x128xf32>
    %148 = arith.addf %147, %145 : vector<8x128xf32>
    %149 = arith.negf %148 : vector<8x128xf32>
    %150 = math.exp %149 : vector<8x128xf32>
    %cst_47 = arith.constant 1.000000e+00 : f32
    %151 = vector.broadcast %cst_47 : f32 to vector<8x128xf32>
    %152 = arith.addf %151, %150 : vector<8x128xf32>
    %153 = arith.divf %151, %152 : vector<8x128xf32>
    %154 = vector.extract_strided_slice %153 {offsets = [0, 0], sizes = [8, 32], strides = [1, 1]} : vector<8x128xf32> to vector<8x32xf32>
    %155 = vector.extract_strided_slice %153 {offsets = [0, 32], sizes = [8, 32], strides = [1, 1]} : vector<8x128xf32> to vector<8x32xf32>
    %156 = vector.extract_strided_slice %153 {offsets = [0, 64], sizes = [8, 32], strides = [1, 1]} : vector<8x128xf32> to vector<8x32xf32>
    %cst_48 = arith.constant 2.000000e+00 : f32
    %157 = vector.broadcast %cst_48 : f32 to vector<8x32xf32>
    %158 = arith.mulf %157, %156 : vector<8x32xf32>
    %cst_49 = arith.constant 1.000000e+00 : f32
    %159 = vector.broadcast %cst_49 : f32 to vector<8x32xf32>
    %160 = arith.subf %158, %159 : vector<8x32xf32>
    %161 = vector.extract_strided_slice %153 {offsets = [0, 96], sizes = [8, 32], strides = [1, 1]} : vector<8x128xf32> to vector<8x32xf32>
    %162 = arith.mulf %155, %116 : vector<8x32xf32>
    %163 = arith.mulf %154, %160 : vector<8x32xf32>
    %164 = arith.addf %162, %163 : vector<8x32xf32>
    %165 = math.tanh %164 : vector<8x32xf32>
    %166 = arith.mulf %161, %165 : vector<8x32xf32>
    %167 = arith.addf %119, %166 : vector<8x32xf32>
    %168 = vector.extract_strided_slice %14 {offsets = [24, 0], sizes = [8, 128], strides = [1, 1]} : vector<64x128xf32> to vector<8x128xf32>
    %169 = arith.truncf %141 : vector<8x32xf32> to vector<8x32xbf16>
    %cst_50 = arith.constant dense<0.000000e+00> : vector<8x128xf32>
    %170 = tpu.matmul %169, %15, %cst_50 {dimension_numbers = #tpu.dot_dimension_numbers<[1], [0], [0], [1], [0, 0, 1, 1], [], []>} : vector<8x32xbf16>, vector<32x128xbf16>, vector<8x128xf32> -> vector<8x128xf32>
    %171 = arith.addf %170, %168 : vector<8x128xf32>
    %172 = arith.negf %171 : vector<8x128xf32>
    %173 = math.exp %172 : vector<8x128xf32>
    %cst_51 = arith.constant 1.000000e+00 : f32
    %174 = vector.broadcast %cst_51 : f32 to vector<8x128xf32>
    %175 = arith.addf %174, %173 : vector<8x128xf32>
    %176 = arith.divf %174, %175 : vector<8x128xf32>
    %177 = vector.extract_strided_slice %176 {offsets = [0, 0], sizes = [8, 32], strides = [1, 1]} : vector<8x128xf32> to vector<8x32xf32>
    %178 = vector.extract_strided_slice %176 {offsets = [0, 32], sizes = [8, 32], strides = [1, 1]} : vector<8x128xf32> to vector<8x32xf32>
    %179 = vector.extract_strided_slice %176 {offsets = [0, 64], sizes = [8, 32], strides = [1, 1]} : vector<8x128xf32> to vector<8x32xf32>
    %cst_52 = arith.constant 2.000000e+00 : f32
    %180 = vector.broadcast %cst_52 : f32 to vector<8x32xf32>
    %181 = arith.mulf %180, %179 : vector<8x32xf32>
    %cst_53 = arith.constant 1.000000e+00 : f32
    %182 = vector.broadcast %cst_53 : f32 to vector<8x32xf32>
    %183 = arith.subf %181, %182 : vector<8x32xf32>
    %184 = vector.extract_strided_slice %176 {offsets = [0, 96], sizes = [8, 32], strides = [1, 1]} : vector<8x128xf32> to vector<8x32xf32>
    %185 = arith.mulf %178, %139 : vector<8x32xf32>
    %186 = arith.mulf %177, %183 : vector<8x32xf32>
    %187 = arith.addf %185, %186 : vector<8x32xf32>
    %188 = math.tanh %187 : vector<8x32xf32>
    %189 = arith.mulf %184, %188 : vector<8x32xf32>
    %190 = arith.truncf %189 : vector<8x32xf32> to vector<8x32xbf16>
    %cst_54 = arith.constant dense<0.000000e+00> : vector<8x128xf32>
    %191 = tpu.matmul %190, %16, %cst_54 {dimension_numbers = #tpu.dot_dimension_numbers<[1], [0], [0], [1], [0, 0, 1, 1], [], []>} : vector<8x32xbf16>, vector<32x128xbf16>, vector<8x128xf32> -> vector<8x128xf32>
    %192 = vector.broadcast %18 : vector<1x128xf32> to vector<8x128xf32>
    %193 = arith.addf %191, %192 : vector<8x128xf32>
    %194 = arith.truncf %166 : vector<8x32xf32> to vector<8x32xbf16>
    %cst_55 = arith.constant dense<0.000000e+00> : vector<8x128xf32>
    %195 = tpu.matmul %194, %17, %cst_55 {dimension_numbers = #tpu.dot_dimension_numbers<[1], [0], [0], [1], [0, 0, 1, 1], [], []>} : vector<8x32xbf16>, vector<32x128xbf16>, vector<8x128xf32> -> vector<8x128xf32>
    %196 = arith.addf %195, %193 : vector<8x128xf32>
    %197 = arith.negf %196 : vector<8x128xf32>
    %198 = math.exp %197 : vector<8x128xf32>
    %cst_56 = arith.constant 1.000000e+00 : f32
    %199 = vector.broadcast %cst_56 : f32 to vector<8x128xf32>
    %200 = arith.addf %199, %198 : vector<8x128xf32>
    %201 = arith.divf %199, %200 : vector<8x128xf32>
    %202 = vector.extract_strided_slice %201 {offsets = [0, 0], sizes = [8, 32], strides = [1, 1]} : vector<8x128xf32> to vector<8x32xf32>
    %203 = vector.extract_strided_slice %201 {offsets = [0, 32], sizes = [8, 32], strides = [1, 1]} : vector<8x128xf32> to vector<8x32xf32>
    %204 = vector.extract_strided_slice %201 {offsets = [0, 64], sizes = [8, 32], strides = [1, 1]} : vector<8x128xf32> to vector<8x32xf32>
    %cst_57 = arith.constant 2.000000e+00 : f32
    %205 = vector.broadcast %cst_57 : f32 to vector<8x32xf32>
    %206 = arith.mulf %205, %204 : vector<8x32xf32>
    %cst_58 = arith.constant 1.000000e+00 : f32
    %207 = vector.broadcast %cst_58 : f32 to vector<8x32xf32>
    %208 = arith.subf %206, %207 : vector<8x32xf32>
    %209 = vector.extract_strided_slice %201 {offsets = [0, 96], sizes = [8, 32], strides = [1, 1]} : vector<8x128xf32> to vector<8x32xf32>
    %210 = arith.mulf %203, %164 : vector<8x32xf32>
    %211 = arith.mulf %202, %208 : vector<8x32xf32>
    %212 = arith.addf %210, %211 : vector<8x32xf32>
    %213 = math.tanh %212 : vector<8x32xf32>
    %214 = arith.mulf %209, %213 : vector<8x32xf32>
    %215 = arith.addf %167, %214 : vector<8x32xf32>
    %216 = vector.extract_strided_slice %14 {offsets = [32, 0], sizes = [8, 128], strides = [1, 1]} : vector<64x128xf32> to vector<8x128xf32>
    %217 = arith.truncf %189 : vector<8x32xf32> to vector<8x32xbf16>
    %cst_59 = arith.constant dense<0.000000e+00> : vector<8x128xf32>
    %218 = tpu.matmul %217, %15, %cst_59 {dimension_numbers = #tpu.dot_dimension_numbers<[1], [0], [0], [1], [0, 0, 1, 1], [], []>} : vector<8x32xbf16>, vector<32x128xbf16>, vector<8x128xf32> -> vector<8x128xf32>
    %219 = arith.addf %218, %216 : vector<8x128xf32>
    %220 = arith.negf %219 : vector<8x128xf32>
    %221 = math.exp %220 : vector<8x128xf32>
    %cst_60 = arith.constant 1.000000e+00 : f32
    %222 = vector.broadcast %cst_60 : f32 to vector<8x128xf32>
    %223 = arith.addf %222, %221 : vector<8x128xf32>
    %224 = arith.divf %222, %223 : vector<8x128xf32>
    %225 = vector.extract_strided_slice %224 {offsets = [0, 0], sizes = [8, 32], strides = [1, 1]} : vector<8x128xf32> to vector<8x32xf32>
    %226 = vector.extract_strided_slice %224 {offsets = [0, 32], sizes = [8, 32], strides = [1, 1]} : vector<8x128xf32> to vector<8x32xf32>
    %227 = vector.extract_strided_slice %224 {offsets = [0, 64], sizes = [8, 32], strides = [1, 1]} : vector<8x128xf32> to vector<8x32xf32>
    %cst_61 = arith.constant 2.000000e+00 : f32
    %228 = vector.broadcast %cst_61 : f32 to vector<8x32xf32>
    %229 = arith.mulf %228, %227 : vector<8x32xf32>
    %cst_62 = arith.constant 1.000000e+00 : f32
    %230 = vector.broadcast %cst_62 : f32 to vector<8x32xf32>
    %231 = arith.subf %229, %230 : vector<8x32xf32>
    %232 = vector.extract_strided_slice %224 {offsets = [0, 96], sizes = [8, 32], strides = [1, 1]} : vector<8x128xf32> to vector<8x32xf32>
    %233 = arith.mulf %226, %187 : vector<8x32xf32>
    %234 = arith.mulf %225, %231 : vector<8x32xf32>
    %235 = arith.addf %233, %234 : vector<8x32xf32>
    %236 = math.tanh %235 : vector<8x32xf32>
    %237 = arith.mulf %232, %236 : vector<8x32xf32>
    %238 = arith.truncf %237 : vector<8x32xf32> to vector<8x32xbf16>
    %cst_63 = arith.constant dense<0.000000e+00> : vector<8x128xf32>
    %239 = tpu.matmul %238, %16, %cst_63 {dimension_numbers = #tpu.dot_dimension_numbers<[1], [0], [0], [1], [0, 0, 1, 1], [], []>} : vector<8x32xbf16>, vector<32x128xbf16>, vector<8x128xf32> -> vector<8x128xf32>
    %240 = vector.broadcast %18 : vector<1x128xf32> to vector<8x128xf32>
    %241 = arith.addf %239, %240 : vector<8x128xf32>
    %242 = arith.truncf %214 : vector<8x32xf32> to vector<8x32xbf16>
    %cst_64 = arith.constant dense<0.000000e+00> : vector<8x128xf32>
    %243 = tpu.matmul %242, %17, %cst_64 {dimension_numbers = #tpu.dot_dimension_numbers<[1], [0], [0], [1], [0, 0, 1, 1], [], []>} : vector<8x32xbf16>, vector<32x128xbf16>, vector<8x128xf32> -> vector<8x128xf32>
    %244 = arith.addf %243, %241 : vector<8x128xf32>
    %245 = arith.negf %244 : vector<8x128xf32>
    %246 = math.exp %245 : vector<8x128xf32>
    %cst_65 = arith.constant 1.000000e+00 : f32
    %247 = vector.broadcast %cst_65 : f32 to vector<8x128xf32>
    %248 = arith.addf %247, %246 : vector<8x128xf32>
    %249 = arith.divf %247, %248 : vector<8x128xf32>
    %250 = vector.extract_strided_slice %249 {offsets = [0, 0], sizes = [8, 32], strides = [1, 1]} : vector<8x128xf32> to vector<8x32xf32>
    %251 = vector.extract_strided_slice %249 {offsets = [0, 32], sizes = [8, 32], strides = [1, 1]} : vector<8x128xf32> to vector<8x32xf32>
    %252 = vector.extract_strided_slice %249 {offsets = [0, 64], sizes = [8, 32], strides = [1, 1]} : vector<8x128xf32> to vector<8x32xf32>
    %cst_66 = arith.constant 2.000000e+00 : f32
    %253 = vector.broadcast %cst_66 : f32 to vector<8x32xf32>
    %254 = arith.mulf %253, %252 : vector<8x32xf32>
    %cst_67 = arith.constant 1.000000e+00 : f32
    %255 = vector.broadcast %cst_67 : f32 to vector<8x32xf32>
    %256 = arith.subf %254, %255 : vector<8x32xf32>
    %257 = vector.extract_strided_slice %249 {offsets = [0, 96], sizes = [8, 32], strides = [1, 1]} : vector<8x128xf32> to vector<8x32xf32>
    %258 = arith.mulf %251, %212 : vector<8x32xf32>
    %259 = arith.mulf %250, %256 : vector<8x32xf32>
    %260 = arith.addf %258, %259 : vector<8x32xf32>
    %261 = math.tanh %260 : vector<8x32xf32>
    %262 = arith.mulf %257, %261 : vector<8x32xf32>
    %263 = arith.addf %215, %262 : vector<8x32xf32>
    %264 = vector.extract_strided_slice %14 {offsets = [40, 0], sizes = [8, 128], strides = [1, 1]} : vector<64x128xf32> to vector<8x128xf32>
    %265 = arith.truncf %237 : vector<8x32xf32> to vector<8x32xbf16>
    %cst_68 = arith.constant dense<0.000000e+00> : vector<8x128xf32>
    %266 = tpu.matmul %265, %15, %cst_68 {dimension_numbers = #tpu.dot_dimension_numbers<[1], [0], [0], [1], [0, 0, 1, 1], [], []>} : vector<8x32xbf16>, vector<32x128xbf16>, vector<8x128xf32> -> vector<8x128xf32>
    %267 = arith.addf %266, %264 : vector<8x128xf32>
    %268 = arith.negf %267 : vector<8x128xf32>
    %269 = math.exp %268 : vector<8x128xf32>
    %cst_69 = arith.constant 1.000000e+00 : f32
    %270 = vector.broadcast %cst_69 : f32 to vector<8x128xf32>
    %271 = arith.addf %270, %269 : vector<8x128xf32>
    %272 = arith.divf %270, %271 : vector<8x128xf32>
    %273 = vector.extract_strided_slice %272 {offsets = [0, 0], sizes = [8, 32], strides = [1, 1]} : vector<8x128xf32> to vector<8x32xf32>
    %274 = vector.extract_strided_slice %272 {offsets = [0, 32], sizes = [8, 32], strides = [1, 1]} : vector<8x128xf32> to vector<8x32xf32>
    %275 = vector.extract_strided_slice %272 {offsets = [0, 64], sizes = [8, 32], strides = [1, 1]} : vector<8x128xf32> to vector<8x32xf32>
    %cst_70 = arith.constant 2.000000e+00 : f32
    %276 = vector.broadcast %cst_70 : f32 to vector<8x32xf32>
    %277 = arith.mulf %276, %275 : vector<8x32xf32>
    %cst_71 = arith.constant 1.000000e+00 : f32
    %278 = vector.broadcast %cst_71 : f32 to vector<8x32xf32>
    %279 = arith.subf %277, %278 : vector<8x32xf32>
    %280 = vector.extract_strided_slice %272 {offsets = [0, 96], sizes = [8, 32], strides = [1, 1]} : vector<8x128xf32> to vector<8x32xf32>
    %281 = arith.mulf %274, %235 : vector<8x32xf32>
    %282 = arith.mulf %273, %279 : vector<8x32xf32>
    %283 = arith.addf %281, %282 : vector<8x32xf32>
    %284 = math.tanh %283 : vector<8x32xf32>
    %285 = arith.mulf %280, %284 : vector<8x32xf32>
    %286 = arith.truncf %285 : vector<8x32xf32> to vector<8x32xbf16>
    %cst_72 = arith.constant dense<0.000000e+00> : vector<8x128xf32>
    %287 = tpu.matmul %286, %16, %cst_72 {dimension_numbers = #tpu.dot_dimension_numbers<[1], [0], [0], [1], [0, 0, 1, 1], [], []>} : vector<8x32xbf16>, vector<32x128xbf16>, vector<8x128xf32> -> vector<8x128xf32>
    %288 = vector.broadcast %18 : vector<1x128xf32> to vector<8x128xf32>
    %289 = arith.addf %287, %288 : vector<8x128xf32>
    %290 = arith.truncf %262 : vector<8x32xf32> to vector<8x32xbf16>
    %cst_73 = arith.constant dense<0.000000e+00> : vector<8x128xf32>
    %291 = tpu.matmul %290, %17, %cst_73 {dimension_numbers = #tpu.dot_dimension_numbers<[1], [0], [0], [1], [0, 0, 1, 1], [], []>} : vector<8x32xbf16>, vector<32x128xbf16>, vector<8x128xf32> -> vector<8x128xf32>
    %292 = arith.addf %291, %289 : vector<8x128xf32>
    %293 = arith.negf %292 : vector<8x128xf32>
    %294 = math.exp %293 : vector<8x128xf32>
    %cst_74 = arith.constant 1.000000e+00 : f32
    %295 = vector.broadcast %cst_74 : f32 to vector<8x128xf32>
    %296 = arith.addf %295, %294 : vector<8x128xf32>
    %297 = arith.divf %295, %296 : vector<8x128xf32>
    %298 = vector.extract_strided_slice %297 {offsets = [0, 0], sizes = [8, 32], strides = [1, 1]} : vector<8x128xf32> to vector<8x32xf32>
    %299 = vector.extract_strided_slice %297 {offsets = [0, 32], sizes = [8, 32], strides = [1, 1]} : vector<8x128xf32> to vector<8x32xf32>
    %300 = vector.extract_strided_slice %297 {offsets = [0, 64], sizes = [8, 32], strides = [1, 1]} : vector<8x128xf32> to vector<8x32xf32>
    %cst_75 = arith.constant 2.000000e+00 : f32
    %301 = vector.broadcast %cst_75 : f32 to vector<8x32xf32>
    %302 = arith.mulf %301, %300 : vector<8x32xf32>
    %cst_76 = arith.constant 1.000000e+00 : f32
    %303 = vector.broadcast %cst_76 : f32 to vector<8x32xf32>
    %304 = arith.subf %302, %303 : vector<8x32xf32>
    %305 = vector.extract_strided_slice %297 {offsets = [0, 96], sizes = [8, 32], strides = [1, 1]} : vector<8x128xf32> to vector<8x32xf32>
    %306 = arith.mulf %299, %260 : vector<8x32xf32>
    %307 = arith.mulf %298, %304 : vector<8x32xf32>
    %308 = arith.addf %306, %307 : vector<8x32xf32>
    %309 = math.tanh %308 : vector<8x32xf32>
    %310 = arith.mulf %305, %309 : vector<8x32xf32>
    %311 = arith.addf %263, %310 : vector<8x32xf32>
    %312 = vector.extract_strided_slice %14 {offsets = [48, 0], sizes = [8, 128], strides = [1, 1]} : vector<64x128xf32> to vector<8x128xf32>
    %313 = arith.truncf %285 : vector<8x32xf32> to vector<8x32xbf16>
    %cst_77 = arith.constant dense<0.000000e+00> : vector<8x128xf32>
    %314 = tpu.matmul %313, %15, %cst_77 {dimension_numbers = #tpu.dot_dimension_numbers<[1], [0], [0], [1], [0, 0, 1, 1], [], []>} : vector<8x32xbf16>, vector<32x128xbf16>, vector<8x128xf32> -> vector<8x128xf32>
    %315 = arith.addf %314, %312 : vector<8x128xf32>
    %316 = arith.negf %315 : vector<8x128xf32>
    %317 = math.exp %316 : vector<8x128xf32>
    %cst_78 = arith.constant 1.000000e+00 : f32
    %318 = vector.broadcast %cst_78 : f32 to vector<8x128xf32>
    %319 = arith.addf %318, %317 : vector<8x128xf32>
    %320 = arith.divf %318, %319 : vector<8x128xf32>
    %321 = vector.extract_strided_slice %320 {offsets = [0, 0], sizes = [8, 32], strides = [1, 1]} : vector<8x128xf32> to vector<8x32xf32>
    %322 = vector.extract_strided_slice %320 {offsets = [0, 32], sizes = [8, 32], strides = [1, 1]} : vector<8x128xf32> to vector<8x32xf32>
    %323 = vector.extract_strided_slice %320 {offsets = [0, 64], sizes = [8, 32], strides = [1, 1]} : vector<8x128xf32> to vector<8x32xf32>
    %cst_79 = arith.constant 2.000000e+00 : f32
    %324 = vector.broadcast %cst_79 : f32 to vector<8x32xf32>
    %325 = arith.mulf %324, %323 : vector<8x32xf32>
    %cst_80 = arith.constant 1.000000e+00 : f32
    %326 = vector.broadcast %cst_80 : f32 to vector<8x32xf32>
    %327 = arith.subf %325, %326 : vector<8x32xf32>
    %328 = vector.extract_strided_slice %320 {offsets = [0, 96], sizes = [8, 32], strides = [1, 1]} : vector<8x128xf32> to vector<8x32xf32>
    %329 = arith.mulf %322, %283 : vector<8x32xf32>
    %330 = arith.mulf %321, %327 : vector<8x32xf32>
    %331 = arith.addf %329, %330 : vector<8x32xf32>
    %332 = math.tanh %331 : vector<8x32xf32>
    %333 = arith.mulf %328, %332 : vector<8x32xf32>
    %334 = arith.truncf %333 : vector<8x32xf32> to vector<8x32xbf16>
    %cst_81 = arith.constant dense<0.000000e+00> : vector<8x128xf32>
    %335 = tpu.matmul %334, %16, %cst_81 {dimension_numbers = #tpu.dot_dimension_numbers<[1], [0], [0], [1], [0, 0, 1, 1], [], []>} : vector<8x32xbf16>, vector<32x128xbf16>, vector<8x128xf32> -> vector<8x128xf32>
    %336 = vector.broadcast %18 : vector<1x128xf32> to vector<8x128xf32>
    %337 = arith.addf %335, %336 : vector<8x128xf32>
    %338 = arith.truncf %310 : vector<8x32xf32> to vector<8x32xbf16>
    %cst_82 = arith.constant dense<0.000000e+00> : vector<8x128xf32>
    %339 = tpu.matmul %338, %17, %cst_82 {dimension_numbers = #tpu.dot_dimension_numbers<[1], [0], [0], [1], [0, 0, 1, 1], [], []>} : vector<8x32xbf16>, vector<32x128xbf16>, vector<8x128xf32> -> vector<8x128xf32>
    %340 = arith.addf %339, %337 : vector<8x128xf32>
    %341 = arith.negf %340 : vector<8x128xf32>
    %342 = math.exp %341 : vector<8x128xf32>
    %cst_83 = arith.constant 1.000000e+00 : f32
    %343 = vector.broadcast %cst_83 : f32 to vector<8x128xf32>
    %344 = arith.addf %343, %342 : vector<8x128xf32>
    %345 = arith.divf %343, %344 : vector<8x128xf32>
    %346 = vector.extract_strided_slice %345 {offsets = [0, 0], sizes = [8, 32], strides = [1, 1]} : vector<8x128xf32> to vector<8x32xf32>
    %347 = vector.extract_strided_slice %345 {offsets = [0, 32], sizes = [8, 32], strides = [1, 1]} : vector<8x128xf32> to vector<8x32xf32>
    %348 = vector.extract_strided_slice %345 {offsets = [0, 64], sizes = [8, 32], strides = [1, 1]} : vector<8x128xf32> to vector<8x32xf32>
    %cst_84 = arith.constant 2.000000e+00 : f32
    %349 = vector.broadcast %cst_84 : f32 to vector<8x32xf32>
    %350 = arith.mulf %349, %348 : vector<8x32xf32>
    %cst_85 = arith.constant 1.000000e+00 : f32
    %351 = vector.broadcast %cst_85 : f32 to vector<8x32xf32>
    %352 = arith.subf %350, %351 : vector<8x32xf32>
    %353 = vector.extract_strided_slice %345 {offsets = [0, 96], sizes = [8, 32], strides = [1, 1]} : vector<8x128xf32> to vector<8x32xf32>
    %354 = arith.mulf %347, %308 : vector<8x32xf32>
    %355 = arith.mulf %346, %352 : vector<8x32xf32>
    %356 = arith.addf %354, %355 : vector<8x32xf32>
    %357 = math.tanh %356 : vector<8x32xf32>
    %358 = arith.mulf %353, %357 : vector<8x32xf32>
    %359 = arith.addf %311, %358 : vector<8x32xf32>
    %360 = vector.extract_strided_slice %14 {offsets = [56, 0], sizes = [8, 128], strides = [1, 1]} : vector<64x128xf32> to vector<8x128xf32>
    %361 = arith.truncf %333 : vector<8x32xf32> to vector<8x32xbf16>
    %cst_86 = arith.constant dense<0.000000e+00> : vector<8x128xf32>
    %362 = tpu.matmul %361, %15, %cst_86 {dimension_numbers = #tpu.dot_dimension_numbers<[1], [0], [0], [1], [0, 0, 1, 1], [], []>} : vector<8x32xbf16>, vector<32x128xbf16>, vector<8x128xf32> -> vector<8x128xf32>
    %363 = arith.addf %362, %360 : vector<8x128xf32>
    %364 = arith.negf %363 : vector<8x128xf32>
    %365 = math.exp %364 : vector<8x128xf32>
    %cst_87 = arith.constant 1.000000e+00 : f32
    %366 = vector.broadcast %cst_87 : f32 to vector<8x128xf32>
    %367 = arith.addf %366, %365 : vector<8x128xf32>
    %368 = arith.divf %366, %367 : vector<8x128xf32>
    %369 = vector.extract_strided_slice %368 {offsets = [0, 0], sizes = [8, 32], strides = [1, 1]} : vector<8x128xf32> to vector<8x32xf32>
    %370 = vector.extract_strided_slice %368 {offsets = [0, 32], sizes = [8, 32], strides = [1, 1]} : vector<8x128xf32> to vector<8x32xf32>
    %371 = vector.extract_strided_slice %368 {offsets = [0, 64], sizes = [8, 32], strides = [1, 1]} : vector<8x128xf32> to vector<8x32xf32>
    %cst_88 = arith.constant 2.000000e+00 : f32
    %372 = vector.broadcast %cst_88 : f32 to vector<8x32xf32>
    %373 = arith.mulf %372, %371 : vector<8x32xf32>
    %cst_89 = arith.constant 1.000000e+00 : f32
    %374 = vector.broadcast %cst_89 : f32 to vector<8x32xf32>
    %375 = arith.subf %373, %374 : vector<8x32xf32>
    %376 = vector.extract_strided_slice %368 {offsets = [0, 96], sizes = [8, 32], strides = [1, 1]} : vector<8x128xf32> to vector<8x32xf32>
    %377 = arith.mulf %370, %331 : vector<8x32xf32>
    %378 = arith.mulf %369, %375 : vector<8x32xf32>
    %379 = arith.addf %377, %378 : vector<8x32xf32>
    %380 = math.tanh %379 : vector<8x32xf32>
    %381 = arith.mulf %376, %380 : vector<8x32xf32>
    %382 = arith.truncf %381 : vector<8x32xf32> to vector<8x32xbf16>
    %cst_90 = arith.constant dense<0.000000e+00> : vector<8x128xf32>
    %383 = tpu.matmul %382, %16, %cst_90 {dimension_numbers = #tpu.dot_dimension_numbers<[1], [0], [0], [1], [0, 0, 1, 1], [], []>} : vector<8x32xbf16>, vector<32x128xbf16>, vector<8x128xf32> -> vector<8x128xf32>
    %384 = vector.broadcast %18 : vector<1x128xf32> to vector<8x128xf32>
    %385 = arith.addf %383, %384 : vector<8x128xf32>
    %386 = arith.truncf %358 : vector<8x32xf32> to vector<8x32xbf16>
    %cst_91 = arith.constant dense<0.000000e+00> : vector<8x128xf32>
    %387 = tpu.matmul %386, %17, %cst_91 {dimension_numbers = #tpu.dot_dimension_numbers<[1], [0], [0], [1], [0, 0, 1, 1], [], []>} : vector<8x32xbf16>, vector<32x128xbf16>, vector<8x128xf32> -> vector<8x128xf32>
    %388 = arith.addf %387, %385 : vector<8x128xf32>
    %389 = arith.negf %388 : vector<8x128xf32>
    %390 = math.exp %389 : vector<8x128xf32>
    %cst_92 = arith.constant 1.000000e+00 : f32
    %391 = vector.broadcast %cst_92 : f32 to vector<8x128xf32>
    %392 = arith.addf %391, %390 : vector<8x128xf32>
    %393 = arith.divf %391, %392 : vector<8x128xf32>
    %394 = vector.extract_strided_slice %393 {offsets = [0, 0], sizes = [8, 32], strides = [1, 1]} : vector<8x128xf32> to vector<8x32xf32>
    %395 = vector.extract_strided_slice %393 {offsets = [0, 32], sizes = [8, 32], strides = [1, 1]} : vector<8x128xf32> to vector<8x32xf32>
    %396 = vector.extract_strided_slice %393 {offsets = [0, 64], sizes = [8, 32], strides = [1, 1]} : vector<8x128xf32> to vector<8x32xf32>
    %cst_93 = arith.constant 2.000000e+00 : f32
    %397 = vector.broadcast %cst_93 : f32 to vector<8x32xf32>
    %398 = arith.mulf %397, %396 : vector<8x32xf32>
    %cst_94 = arith.constant 1.000000e+00 : f32
    %399 = vector.broadcast %cst_94 : f32 to vector<8x32xf32>
    %400 = arith.subf %398, %399 : vector<8x32xf32>
    %401 = vector.extract_strided_slice %393 {offsets = [0, 96], sizes = [8, 32], strides = [1, 1]} : vector<8x128xf32> to vector<8x32xf32>
    %402 = arith.mulf %395, %356 : vector<8x32xf32>
    %403 = arith.mulf %394, %400 : vector<8x32xf32>
    %404 = arith.addf %402, %403 : vector<8x32xf32>
    %405 = math.tanh %404 : vector<8x32xf32>
    %406 = arith.mulf %401, %405 : vector<8x32xf32>
    %407 = arith.addf %359, %406 : vector<8x32xf32>
    %cst_95 = arith.constant 1.250000e-01 : f32
    %408 = vector.broadcast %cst_95 : f32 to vector<8x32xf32>
    %409 = arith.mulf %407, %408 : vector<8x32xf32>
    %c0_96 = arith.constant 0 : index
    %c0_97 = arith.constant 0 : index
    %410 = vector.load %arg12[%c0_96, %c0_97] : memref<8x32xf32, #tpu.memory_space<vmem>>, vector<8x32xf32>
    tpu.vector_store %arg12[%c0_96, %c0_97], %409 {strides = array<i32>} : memref<8x32xf32, #tpu.memory_space<vmem>>, vector<8x32xf32>,
    %411 = arith.truncf %409 : vector<8x32xf32> to vector<8x32xbf16>
    %c0_98 = arith.constant 0 : index
    %c0_99 = arith.constant 0 : index
    %412 = vector.load %arg9[%c0_98, %c0_99] : memref<32x6xbf16, #tpu.memory_space<vmem>>, vector<32x6xbf16>
    %cst_100 = arith.constant dense<0.000000e+00> : vector<8x6xf32>
    %413 = tpu.matmul %411, %412, %cst_100 {dimension_numbers = #tpu.dot_dimension_numbers<[1], [0], [0], [1], [0, 0, 1, 1], [], []>} : vector<8x32xbf16>, vector<32x6xbf16>, vector<8x6xf32> -> vector<8x6xf32>
    %c0_101 = arith.constant 0 : index
    %c0_102 = arith.constant 0 : index
    %414 = vector.load %arg10[%c0_101, %c0_102] : memref<1x6xf32, #tpu.memory_space<vmem>>, vector<1x6xf32>
    %415 = vector.broadcast %414 : vector<1x6xf32> to vector<8x6xf32>
    %416 = arith.addf %413, %415 : vector<8x6xf32>
    %c0_103 = arith.constant 0 : index
    %c0_104 = arith.constant 0 : index
    %417 = vector.load %arg11[%c0_103, %c0_104] : memref<8x6xf32, #tpu.memory_space<vmem>>, vector<8x6xf32>
    tpu.vector_store %arg11[%c0_103, %c0_104], %416 {strides = array<i32>} : memref<8x6xf32, #tpu.memory_space<vmem>>, vector<8x6xf32>,
    return
  }
}

</mosaic_0001>

<llo_original>
// kernel: tile.9
$region0: #{tile.9}
  %s0 = inlined_call_operand.vmem [shape: f32[8,1,8,64,4], index: 0, kind: input, shape index: {}]
  %s1 = inlined_call_operand.vmem [shape: f32[64,256], index: 1, kind: output, shape index: {}]
  %v2 = vld [vmem:[%s0] ss:$8 sm:$0xf]
  %v3 = vld [vmem:[%s0] ss:$8 sm:$0xf0]
  %vm4 = vcmask 1047556
  %v5 = vsel %vm4, %v3, %v2
  %vm6 = vcmask 64512
  %7 = vst.msk [vmem:[%s1] sm:$0xff] %vm6, %v5
  %s8 = scalar_lea.vmem %s0, 64
  %v9 = vld [vmem:[%s8] ss:$8 sm:$0xf]
  %s10 = scalar_lea.vmem %s0, 64
  %v11 = vld [vmem:[%s10] ss:$8 sm:$0xf0]
  %vm12 = vcmask 1047556
  %v13 = vsel %vm12, %v11, %v9
  %vm14 = vcmask 64512
  %s15 = scalar_lea.vmem %s1, 8
  %16 = vst.msk [vmem:[%s15] sm:$0xff] %vm14, %v13
  %s17 = scalar_lea.vmem %s0, 128
  %v18 = vld [vmem:[%s17] ss:$8 sm:$0xf]
  %s19 = scalar_lea.vmem %s0, 128
  %v20 = vld [vmem:[%s19] ss:$8 sm:$0xf0]
  %vm21 = vcmask 1047556
  %v22 = vsel %vm21, %v20, %v18
  %vm23 = vcmask 64512
  %s24 = scalar_lea.vmem %s1, 16
  %25 = vst.msk [vmem:[%s24] sm:$0xff] %vm23, %v22
  %s26 = scalar_lea.vmem %s0, 192
  %v27 = vld [vmem:[%s26] ss:$8 sm:$0xf]
  %s28 = scalar_lea.vmem %s0, 192
  %v29 = vld [vmem:[%s28] ss:$8 sm:$0xf0]
  %vm30 = vcmask 1047556
  %v31 = vsel %vm30, %v29, %v27
  %vm32 = vcmask 64512
  %s33 = scalar_lea.vmem %s1, 24
  %34 = vst.msk [vmem:[%s33] sm:$0xff] %vm32, %v31
  %s35 = scalar_lea.vmem %s0, 256
  %v36 = vld [vmem:[%s35] ss:$8 sm:$0xf]
  %s37 = scalar_lea.vmem %s0, 256
  %v38 = vld [vmem:[%s37] ss:$8 sm:$0xf0]
  %vm39 = vcmask 1047556
  %v40 = vsel %vm39, %v38, %v36
  %vm41 = vcmask 64512
  %s42 = scalar_lea.vmem %s1, 32
  %43 = vst.msk [vmem:[%s42] sm:$0xff] %vm41, %v40
  %s44 = scalar_lea.vmem %s0, 320
  %v45 = vld [vmem:[%s44] ss:$8 sm:$0xf]
  %s46 = scalar_lea.vmem %s0, 320
  %v47 = vld [vmem:[%s46] ss:$8 sm:$0xf0]
  %vm48 = vcmask 1047556
  %v49 = vsel %vm48, %v47, %v45
  %vm50 = vcmask 64512
  %s51 = scalar_lea.vmem %s1, 40
  %52 = vst.msk [vmem:[%s51] sm:$0xff] %vm50, %v49
  %s53 = scalar_lea.vmem %s0, 384
  %v54 = vld [vmem:[%s53] ss:$8 sm:$0xf]
  %s55 = scalar_lea.vmem %s0, 384
  %v56 = vld [vmem:[%s55] ss:$8 sm:$0xf0]
  %vm57 = vcmask 1047556
  %v58 = vsel %vm57, %v56, %v54
  %vm59 = vcmask 64512
  %s60 = scalar_lea.vmem %s1, 48
  %61 = vst.msk [vmem:[%s60] sm:$0xff] %vm59, %v58
  %s62 = scalar_lea.vmem %s0, 448
  %v63 = vld [vmem:[%s62] ss:$8 sm:$0xf]
  %s64 = scalar_lea.vmem %s0, 448
  %v65 = vld [vmem:[%s64] ss:$8 sm:$0xf0]
  %vm66 = vcmask 1047556
  %v67 = vsel %vm66, %v65, %v63
  %vm68 = vcmask 64512
  %s69 = scalar_lea.vmem %s1, 56
  %70 = vst.msk [vmem:[%s69] sm:$0xff] %vm68, %v67
  %s71 = scalar_lea.vmem %s0, 512
  %v72 = vld [vmem:[%s71] ss:$8 sm:$0xf]
  %s73 = scalar_lea.vmem %s0, 512
  %v74 = vld [vmem:[%s73] ss:$8 sm:$0xf0]
  %vm75 = vcmask 1047556
  %v76 = vsel %vm75, %v74, %v72
  %vm77 = vcmask 64512
  %s78 = scalar_lea.vmem %s1, 64
  %79 = vst.msk [vmem:[%s78] sm:$0xff] %vm77, %v76
  %s80 = scalar_lea.vmem %s0, 576
  %v81 = vld [vmem:[%s80] ss:$8 sm:$0xf]
  %s82 = scalar_lea.vmem %s0, 576
  %v83 = vld [vmem:[%s82] ss:$8 sm:$0xf0]
  %vm84 = vcmask 1047556
  %v85 = vsel %vm84, %v83, %v81
  %vm86 = vcmask 64512
  %s87 = scalar_lea.vmem %s1, 72
  %88 = vst.msk [vmem:[%s87] sm:$0xff] %vm86, %v85
  %s89 = scalar_lea.vmem %s0, 640
  %v90 = vld [vmem:[%s89] ss:$8 sm:$0xf]
  %s91 = scalar_lea.vmem %s0, 640
  %v92 = vld [vmem:[%s91] ss:$8 sm:$0xf0]
  %vm93 = vcmask 1047556
  %v94 = vsel %vm93, %v92, %v90
  %vm95 = vcmask 64512
  %s96 = scalar_lea.vmem %s1, 80
  %97 = vst.msk [vmem:[%s96] sm:$0xff] %vm95, %v94
  %s98 = scalar_lea.vmem %s0, 704
  %v99 = vld [vmem:[%s98] ss:$8 sm:$0xf]
  %s100 = scalar_lea.vmem %s0, 704
  %v101 = vld [vmem:[%s100] ss:$8 sm:$0xf0]
  %vm102 = vcmask 1047556
  %v103 = vsel %vm102, %v101, %v99
  %vm104 = vcmask 64512
  %s105 = scalar_lea.vmem %s1, 88
  %106 = vst.msk [vmem:[%s105] sm:$0xff] %vm104, %v103
  %s107 = scalar_lea.vmem %s0, 768
  %v108 = vld [vmem:[%s107] ss:$8 sm:$0xf]
  %s109 = scalar_lea.vmem %s0, 768
  %v110 = vld [vmem:[%s109] ss:$8 sm:$0xf0]
  %vm111 = vcmask 1047556
  %v112 = vsel %vm111, %v110, %v108
  %vm113 = vcmask 64512
  %s114 = scalar_lea.vmem %s1, 96
  %115 = vst.msk [vmem:[%s114] sm:$0xff] %vm113, %v112
  %s116 = scalar_lea.vmem %s0, 832
  %v117 = vld [vmem:[%s116] ss:$8 sm:$0xf]
  %s118 = scalar_lea.vmem %s0, 832
  %v119 = vld [vmem:[%s118] ss:$8 sm:$0xf0]
  %vm120 = vcmask 1047556
  %v121 = vsel %vm120, %v119, %v117
  %vm122 = vcmask 64512
  %s123 = scalar_lea.vmem %s1, 104
  %124 = vst.msk [vmem:[%s123] sm:$0xff] %vm122, %v121
  %s125 = scalar_lea.vmem %s0, 896
  %v126 = vld [vmem:[%s125] ss:$8 sm:$0xf]
  %s127 = scalar_lea.vmem %s0, 896
  %v128 = vld [vmem:[%s127] ss:$8 sm:$0xf0]
  %vm129 = vcmask 1047556
  %v130 = vsel %vm129, %v128, %v126
  %vm131 = vcmask 64512
  %s132 = scalar_lea.vmem %s1, 112
  %133 = vst.msk [vmem:[%s132] sm:$0xff] %vm131, %v130
  %s134 = scalar_lea.vmem %s0, 960
  %v135 = vld [vmem:[%s134] ss:$8 sm:$0xf]
  %s136 = scalar_lea.vmem %s0, 960
  %v137 = vld [vmem:[%s136] ss:$8 sm:$0xf0]
  %vm138 = vcmask 1047556
  %v139 = vsel %vm138, %v137, %v135
  %vm140 = vcmask 64512
  %s141 = scalar_lea.vmem %s1, 120
  %142 = vst.msk [vmem:[%s141] sm:$0xff] %vm140, %v139
  %s143 = scalar_lea.vmem %s0, 1024
  %v144 = vld [vmem:[%s143] ss:$8 sm:$0xf]
  %s145 = scalar_lea.vmem %s0, 1024
  %v146 = vld [vmem:[%s145] ss:$8 sm:$0xf0]
  %vm147 = vcmask 1047556
  %v148 = vsel %vm147, %v146, %v144
  %vm149 = vcmask 64512
  %s150 = scalar_lea.vmem %s1, 128
  %151 = vst.msk [vmem:[%s150] sm:$0xff] %vm149, %v148
  %s152 = scalar_lea.vmem %s0, 1088
  %v153 = vld [vmem:[%s152] ss:$8 sm:$0xf]
  %s154 = scalar_lea.vmem %s0, 1088
  %v155 = vld [vmem:[%s154] ss:$8 sm:$0xf0]
  %vm156 = vcmask 1047556
  %v157 = vsel %vm156, %v155, %v153
  %vm158 = vcmask 64512
  %s159 = scalar_lea.vmem %s1, 136
  %160 = vst.msk [vmem:[%s159] sm:$0xff] %vm158, %v157
  %s161 = scalar_lea.vmem %s0, 1152
  %v162 = vld [vmem:[%s161] ss:$8 sm:$0xf]
  %s163 = scalar_lea.vmem %s0, 1152
  %v164 = vld [vmem:[%s163] ss:$8 sm:$0xf0]
  %vm165 = vcmask 1047556
  %v166 = vsel %vm165, %v164, %v162
  %vm167 = vcmask 64512
  %s168 = scalar_lea.vmem %s1, 144
  %169 = vst.msk [vmem:[%s168] sm:$0xff] %vm167, %v166
  %s170 = scalar_lea.vmem %s0, 1216
  %v171 = vld [vmem:[%s170] ss:$8 sm:$0xf]
  %s172 = scalar_lea.vmem %s0, 1216
  %v173 = vld [vmem:[%s172] ss:$8 sm:$0xf0]
  %vm174 = vcmask 1047556
  %v175 = vsel %vm174, %v173, %v171
  %vm176 = vcmask 64512
  %s177 = scalar_lea.vmem %s1, 152
  %178 = vst.msk [vmem:[%s177] sm:$0xff] %vm176, %v175
  %s179 = scalar_lea.vmem %s0, 1280
  %v180 = vld [vmem:[%s179] ss:$8 sm:$0xf]
  %s181 = scalar_lea.vmem %s0, 1280
  %v182 = vld [vmem:[%s181] ss:$8 sm:$0xf0]
  %vm183 = vcmask 1047556
  %v184 = vsel %vm183, %v182, %v180
  %vm185 = vcmask 64512
  %s186 = scalar_lea.vmem %s1, 160
  %187 = vst.msk [vmem:[%s186] sm:$0xff] %vm185, %v184
  %s188 = scalar_lea.vmem %s0, 1344
  %v189 = vld [vmem:[%s188] ss:$8 sm:$0xf]
  %s190 = scalar_lea.vmem %s0, 1344
  %v191 = vld [vmem:[%s190] ss:$8 sm:$0xf0]
  %vm192 = vcmask 1047556
  %v193 = vsel %vm192, %v191, %v189
  %vm194 = vcmask 64512
  %s195 = scalar_lea.vmem %s1, 168
  %196 = vst.msk [vmem:[%s195] sm:$0xff] %vm194, %v193
  %s197 = scalar_lea.vmem %s0, 1408
  %v198 = vld [vmem:[%s197] ss:$8 sm:$0xf]
  %s199 = scalar_lea.vmem %s0, 1408
  %v200 = vld [vmem:[%s199] ss:$8 sm:$0xf0]
  %vm201 = vcmask 1047556
  %v202 = vsel %vm201, %v200, %v198
  %vm203 = vcmask 64512
  %s204 = scalar_lea.vmem %s1, 176
  %205 = vst.msk [vmem:[%s204] sm:$0xff] %vm203, %v202
  %s206 = scalar_lea.vmem %s0, 1472
  %v207 = vld [vmem:[%s206] ss:$8 sm:$0xf]
  %s208 = scalar_lea.vmem %s0, 1472
  %v209 = vld [vmem:[%s208] ss:$8 sm:$0xf0]
  %vm210 = vcmask 1047556
  %v211 = vsel %vm210, %v209, %v207
  %vm212 = vcmask 64512
  %s213 = scalar_lea.vmem %s1, 184
  %214 = vst.msk [vmem:[%s213] sm:$0xff] %vm212, %v211
  %s215 = scalar_lea.vmem %s0, 1536
  %v216 = vld [vmem:[%s215] ss:$8 sm:$0xf]
  %s217 = scalar_lea.vmem %s0, 1536
  %v218 = vld [vmem:[%s217] ss:$8 sm:$0xf0]
  %vm219 = vcmask 1047556
  %v220 = vsel %vm219, %v218, %v216
  %vm221 = vcmask 64512
  %s222 = scalar_lea.vmem %s1, 192
  %223 = vst.msk [vmem:[%s222] sm:$0xff] %vm221, %v220
  %s224 = scalar_lea.vmem %s0, 1600
  %v225 = vld [vmem:[%s224] ss:$8 sm:$0xf]
  %s226 = scalar_lea.vmem %s0, 1600
  %v227 = vld [vmem:[%s226] ss:$8 sm:$0xf0]
  %vm228 = vcmask 1047556
  %v229 = vsel %vm228, %v227, %v225
  %vm230 = vcmask 64512
  %s231 = scalar_lea.vmem %s1, 200
  %232 = vst.msk [vmem:[%s231] sm:$0xff] %vm230, %v229
  %s233 = scalar_lea.vmem %s0, 1664
  %v234 = vld [vmem:[%s233] ss:$8 sm:$0xf]
  %s235 = scalar_lea.vmem %s0, 1664
  %v236 = vld [vmem:[%s235] ss:$8 sm:$0xf0]
  %vm237 = vcmask 1047556
  %v238 = vsel %vm237, %v236, %v234
  %vm239 = vcmask 64512
  %s240 = scalar_lea.vmem %s1, 208
  %241 = vst.msk [vmem:[%s240] sm:$0xff] %vm239, %v238
  %s242 = scalar_lea.vmem %s0, 1728
  %v243 = vld [vmem:[%s242] ss:$8 sm:$0xf]
  %s244 = scalar_lea.vmem %s0, 1728
  %v245 = vld [vmem:[%s244] ss:$8 sm:$0xf0]
  %vm246 = vcmask 1047556
  %v247 = vsel %vm246, %v245, %v243
  %vm248 = vcmask 64512
  %s249 = scalar_lea.vmem %s1, 216
  %250 = vst.msk [vmem:[%s249] sm:$0xff] %vm248, %v247
  %s251 = scalar_lea.vmem %s0, 1792
  %v252 = vld [vmem:[%s251] ss:$8 sm:$0xf]
  %s253 = scalar_lea.vmem %s0, 1792
  %v254 = vld [vmem:[%s253] ss:$8 sm:$0xf0]
  %vm255 = vcmask 1047556
  %v256 = vsel %vm255, %v254, %v252
  %vm257 = vcmask 64512
  %s258 = scalar_lea.vmem %s1, 224
  %259 = vst.msk [vmem:[%s258] sm:$0xff] %vm257, %v256
  %s260 = scalar_lea.vmem %s0, 1856
  %v261 = vld [vmem:[%s260] ss:$8 sm:$0xf]
  %s262 = scalar_lea.vmem %s0, 1856
  %v263 = vld [vmem:[%s262] ss:$8 sm:$0xf0]
  %vm264 = vcmask 1047556
  %v265 = vsel %vm264, %v263, %v261
  %vm266 = vcmask 64512
  %s267 = scalar_lea.vmem %s1, 232
  %268 = vst.msk [vmem:[%s267] sm:$0xff] %vm266, %v265
  %s269 = scalar_lea.vmem %s0, 1920
  %v270 = vld [vmem:[%s269] ss:$8 sm:$0xf]
  %s271 = scalar_lea.vmem %s0, 1920
  %v272 = vld [vmem:[%s271] ss:$8 sm:$0xf0]
  %vm273 = vcmask 1047556
  %v274 = vsel %vm273, %v272, %v270
  %vm275 = vcmask 64512
  %s276 = scalar_lea.vmem %s1, 240
  %277 = vst.msk [vmem:[%s276] sm:$0xff] %vm275, %v274
  %s278 = scalar_lea.vmem %s0, 1984
  %v279 = vld [vmem:[%s278] ss:$8 sm:$0xf]
  %s280 = scalar_lea.vmem %s0, 1984
  %v281 = vld [vmem:[%s280] ss:$8 sm:$0xf0]
  %vm282 = vcmask 1047556
  %v283 = vsel %vm282, %v281, %v279
  %vm284 = vcmask 64512
  %s285 = scalar_lea.vmem %s1, 248
  %286 = vst.msk [vmem:[%s285] sm:$0xff] %vm284, %v283
  %s287 = scalar_lea.vmem %s0, 7
  %v288 = vld [vmem:[%s287] ss:$8 sm:$0xf]
  %s289 = scalar_lea.vmem %s0, 7
  %v290 = vld [vmem:[%s289] ss:$8 sm:$0xf0]
  %vm291 = vcmask 1047556
  %v292 = vsel %vm291, %v290, %v288
  %293 = vrot.lane.b32.xlu0 %v292, 56
  %v294 = vpop.permute.xlu0 %293
  %vm295 = vcmask 523712
  %296 = vst.msk [vmem:[%s1] sm:$0xff] %vm295, %v294
  %s297 = scalar_lea.vmem %s0, 263
  %v298 = vld [vmem:[%s297] ss:$8 sm:$0xf]
  %s299 = scalar_lea.vmem %s0, 263
  %v300 = vld [vmem:[%s299] ss:$8 sm:$0xf0]
  %vm301 = vcmask 1047556
  %v302 = vsel %vm301, %v300, %v298
  %303 = vrot.lane.b32.xlu0 %v302, 56
  %v304 = vpop.permute.xlu0 %303
  %vm305 = vcmask 523712
  %s306 = scalar_lea.vmem %s1, 32
  %307 = vst.msk [vmem:[%s306] sm:$0xff] %vm305, %v304
  %s308 = scalar_lea.vmem %s0, 519
  %v309 = vld [vmem:[%s308] ss:$8 sm:$0xf]
  %s310 = scalar_lea.vmem %s0, 519
  %v311 = vld [vmem:[%s310] ss:$8 sm:$0xf0]
  %vm312 = vcmask 1047556
  %v313 = vsel %vm312, %v311, %v309
  %314 = vrot.lane.b32.xlu0 %v313, 56
  %v315 = vpop.permute.xlu0 %314
  %vm316 = vcmask 523712
  %s317 = scalar_lea.vmem %s1, 64
  %318 = vst.msk [vmem:[%s317] sm:$0xff] %vm316, %v315
  %s319 = scalar_lea.vmem %s0, 775
  %v320 = vld [vmem:[%s319] ss:$8 sm:$0xf]
  %s321 = scalar_lea.vmem %s0, 775
  %v322 = vld [vmem:[%s321] ss:$8 sm:$0xf0]
  %vm323 = vcmask 1047556
  %v324 = vsel %vm323, %v322, %v320
  %325 = vrot.lane.b32.xlu0 %v324, 56
  %v326 = vpop.permute.xlu0 %325
  %vm327 = vcmask 523712
  %s328 = scalar_lea.vmem %s1, 96
  %329 = vst.msk [vmem:[%s328] sm:$0xff] %vm327, %v326
  %s330 = scalar_lea.vmem %s0, 1031
  %v331 = vld [vmem:[%s330] ss:$8 sm:$0xf]
  %s332 = scalar_lea.vmem %s0, 1031
  %v333 = vld [vmem:[%s332] ss:$8 sm:$0xf0]
  %vm334 = vcmask 1047556
  %v335 = vsel %vm334, %v333, %v331
  %336 = vrot.lane.b32.xlu0 %v335, 56
  %v337 = vpop.permute.xlu0 %336
  %vm338 = vcmask 523712
  %s339 = scalar_lea.vmem %s1, 128
  %340 = vst.msk [vmem:[%s339] sm:$0xff] %vm338, %v337
  %s341 = scalar_lea.vmem %s0, 1287
  %v342 = vld [vmem:[%s341] ss:$8 sm:$0xf]
  %s343 = scalar_lea.vmem %s0, 1287
  %v344 = vld [vmem:[%s343] ss:$8 sm:$0xf0]
  %vm345 = vcmask 1047556
  %v346 = vsel %vm345, %v344, %v342
  %347 = vrot.lane.b32.xlu0 %v346, 56
  %v348 = vpop.permute.xlu0 %347
  %vm349 = vcmask 523712
  %s350 = scalar_lea.vmem %s1, 160
  %351 = vst.msk [vmem:[%s350] sm:$0xff] %vm349, %v348
  %s352 = scalar_lea.vmem %s0, 1543
  %v353 = vld [vmem:[%s352] ss:$8 sm:$0xf]
  %s354 = scalar_lea.vmem %s0, 1543
  %v355 = vld [vmem:[%s354] ss:$8 sm:$0xf0]
  %vm356 = vcmask 1047556
  %v357 = vsel %vm356, %v355, %v353
  %358 = vrot.lane.b32.xlu0 %v357, 56
  %v359 = vpop.permute.xlu0 %358
  %vm360 = vcmask 523712
  %s361 = scalar_lea.vmem %s1, 192
  %362 = vst.msk [vmem:[%s361] sm:$0xff] %vm360, %v359
  %s363 = scalar_lea.vmem %s0, 1799
  %v364 = vld [vmem:[%s363] ss:$8 sm:$0xf]
  %s365 = scalar_lea.vmem %s0, 1799
  %v366 = vld [vmem:[%s365] ss:$8 sm:$0xf0]
  %vm367 = vcmask 1047556
  %v368 = vsel %vm367, %v366, %v364
  %369 = vrot.lane.b32.xlu0 %v368, 56
  %v370 = vpop.permute.xlu0 %369
  %vm371 = vcmask 523712
  %s372 = scalar_lea.vmem %s1, 224
  %373 = vst.msk [vmem:[%s372] sm:$0xff] %vm371, %v370
  %s374 = scalar_lea.vmem %s0, 71
  %v375 = vld [vmem:[%s374] ss:$8 sm:$0xf]
  %s376 = scalar_lea.vmem %s0, 71
  %v377 = vld [vmem:[%s376] ss:$8 sm:$0xf0]
  %vm378 = vcmask 1047556
  %v379 = vsel %vm378, %v377, %v375
  %380 = vrot.lane.b32.xlu0 %v379, 56
  %v381 = vpop.permute.xlu0 %380
  %vm382 = vcmask 523712
  %s383 = scalar_lea.vmem %s1, 8
  %384 = vst.msk [vmem:[%s383] sm:$0xff] %vm382, %v381
  %s385 = scalar_lea.vmem %s0, 327
  %v386 = vld [vmem:[%s385] ss:$8 sm:$0xf]
  %s387 = scalar_lea.vmem %s0, 327
  %v388 = vld [vmem:[%s387] ss:$8 sm:$0xf0]
  %vm389 = vcmask 1047556
  %v390 = vsel %vm389, %v388, %v386
  %391 = vrot.lane.b32.xlu0 %v390, 56
  %v392 = vpop.permute.xlu0 %391
  %vm393 = vcmask 523712
  %s394 = scalar_lea.vmem %s1, 40
  %395 = vst.msk [vmem:[%s394] sm:$0xff] %vm393, %v392
  %s396 = scalar_lea.vmem %s0, 583
  %v397 = vld [vmem:[%s396] ss:$8 sm:$0xf]
  %s398 = scalar_lea.vmem %s0, 583
  %v399 = vld [vmem:[%s398] ss:$8 sm:$0xf0]
  %vm400 = vcmask 1047556
  %v401 = vsel %vm400, %v399, %v397
  %402 = vrot.lane.b32.xlu0 %v401, 56
  %v403 = vpop.permute.xlu0 %402
  %vm404 = vcmask 523712
  %s405 = scalar_lea.vmem %s1, 72
  %406 = vst.msk [vmem:[%s405] sm:$0xff] %vm404, %v403
  %s407 = scalar_lea.vmem %s0, 839
  %v408 = vld [vmem:[%s407] ss:$8 sm:$0xf]
  %s409 = scalar_lea.vmem %s0, 839
  %v410 = vld [vmem:[%s409] ss:$8 sm:$0xf0]
  %vm411 = vcmask 1047556
  %v412 = vsel %vm411, %v410, %v408
  %413 = vrot.lane.b32.xlu0 %v412, 56
  %v414 = vpop.permute.xlu0 %413
  %vm415 = vcmask 523712
  %s416 = scalar_lea.vmem %s1, 104
  %417 = vst.msk [vmem:[%s416] sm:$0xff] %vm415, %v414
  %s418 = scalar_lea.vmem %s0, 1095
  %v419 = vld [vmem:[%s418] ss:$8 sm:$0xf]
  %s420 = scalar_lea.vmem %s0, 1095
  %v421 = vld [vmem:[%s420] ss:$8 sm:$0xf0]
  %vm422 = vcmask 1047556
  %v423 = vsel %vm422, %v421, %v419
  %424 = vrot.lane.b32.xlu0 %v423, 56
  %v425 = vpop.permute.xlu0 %424
  %vm426 = vcmask 523712
  %s427 = scalar_lea.vmem %s1, 136
  %428 = vst.msk [vmem:[%s427] sm:$0xff] %vm426, %v425
  %s429 = scalar_lea.vmem %s0, 1351
  %v430 = vld [vmem:[%s429] ss:$8 sm:$0xf]
  %s431 = scalar_lea.vmem %s0, 1351
  %v432 = vld [vmem:[%s431] ss:$8 sm:$0xf0]
  %vm433 = vcmask 1047556
  %v434 = vsel %vm433, %v432, %v430
  %435 = vrot.lane.b32.xlu0 %v434, 56
  %v436 = vpop.permute.xlu0 %435
  %vm437 = vcmask 523712
  %s438 = scalar_lea.vmem %s1, 168
  %439 = vst.msk [vmem:[%s438] sm:$0xff] %vm437, %v436
  %s440 = scalar_lea.vmem %s0, 1607
  %v441 = vld [vmem:[%s440] ss:$8 sm:$0xf]
  %s442 = scalar_lea.vmem %s0, 1607
  %v443 = vld [vmem:[%s442] ss:$8 sm:$0xf0]
  %vm444 = vcmask 1047556
  %v445 = vsel %vm444, %v443, %v441
  %446 = vrot.lane.b32.xlu0 %v445, 56
  %v447 = vpop.permute.xlu0 %446
  %vm448 = vcmask 523712
  %s449 = scalar_lea.vmem %s1, 200
  %450 = vst.msk [vmem:[%s449] sm:$0xff] %vm448, %v447
  %s451 = scalar_lea.vmem %s0, 1863
  %v452 = vld [vmem:[%s451] ss:$8 sm:$0xf]
  %s453 = scalar_lea.vmem %s0, 1863
  %v454 = vld [vmem:[%s453] ss:$8 sm:$0xf0]
  %vm455 = vcmask 1047556
  %v456 = vsel %vm455, %v454, %v452
  %457 = vrot.lane.b32.xlu0 %v456, 56
  %v458 = vpop.permute.xlu0 %457
  %vm459 = vcmask 523712
  %s460 = scalar_lea.vmem %s1, 232
  %461 = vst.msk [vmem:[%s460] sm:$0xff] %vm459, %v458
  %s462 = scalar_lea.vmem %s0, 135
  %v463 = vld [vmem:[%s462] ss:$8 sm:$0xf]
  %s464 = scalar_lea.vmem %s0, 135
  %v465 = vld [vmem:[%s464] ss:$8 sm:$0xf0]
  %vm466 = vcmask 1047556
  %v467 = vsel %vm466, %v465, %v463
  %468 = vrot.lane.b32.xlu0 %v467, 56
  %v469 = vpop.permute.xlu0 %468
  %vm470 = vcmask 523712
  %s471 = scalar_lea.vmem %s1, 16
  %472 = vst.msk [vmem:[%s471] sm:$0xff] %vm470, %v469
  %s473 = scalar_lea.vmem %s0, 391
  %v474 = vld [vmem:[%s473] ss:$8 sm:$0xf]
  %s475 = scalar_lea.vmem %s0, 391
  %v476 = vld [vmem:[%s475] ss:$8 sm:$0xf0]
  %vm477 = vcmask 1047556
  %v478 = vsel %vm477, %v476, %v474
  %479 = vrot.lane.b32.xlu0 %v478, 56
  %v480 = vpop.permute.xlu0 %479
  %vm481 = vcmask 523712
  %s482 = scalar_lea.vmem %s1, 48
  %483 = vst.msk [vmem:[%s482] sm:$0xff] %vm481, %v480
  %s484 = scalar_lea.vmem %s0, 647
  %v485 = vld [vmem:[%s484] ss:$8 sm:$0xf]
  %s486 = scalar_lea.vmem %s0, 647
  %v487 = vld [vmem:[%s486] ss:$8 sm:$0xf0]
  %vm488 = vcmask 1047556
  %v489 = vsel %vm488, %v487, %v485
  %490 = vrot.lane.b32.xlu0 %v489, 56
  %v491 = vpop.permute.xlu0 %490
  %vm492 = vcmask 523712
  %s493 = scalar_lea.vmem %s1, 80
  %494 = vst.msk [vmem:[%s493] sm:$0xff] %vm492, %v491
  %s495 = scalar_lea.vmem %s0, 903
  %v496 = vld [vmem:[%s495] ss:$8 sm:$0xf]
  %s497 = scalar_lea.vmem %s0, 903
  %v498 = vld [vmem:[%s497] ss:$8 sm:$0xf0]
  %vm499 = vcmask 1047556
  %v500 = vsel %vm499, %v498, %v496
  %501 = vrot.lane.b32.xlu0 %v500, 56
  %v502 = vpop.permute.xlu0 %501
  %vm503 = vcmask 523712
  %s504 = scalar_lea.vmem %s1, 112
  %505 = vst.msk [vmem:[%s504] sm:$0xff] %vm503, %v502
  %s506 = scalar_lea.vmem %s0, 1159
  %v507 = vld [vmem:[%s506] ss:$8 sm:$0xf]
  %s508 = scalar_lea.vmem %s0, 1159
  %v509 = vld [vmem:[%s508] ss:$8 sm:$0xf0]
  %vm510 = vcmask 1047556
  %v511 = vsel %vm510, %v509, %v507
  %512 = vrot.lane.b32.xlu0 %v511, 56
  %v513 = vpop.permute.xlu0 %512
  %vm514 = vcmask 523712
  %s515 = scalar_lea.vmem %s1, 144
  %516 = vst.msk [vmem:[%s515] sm:$0xff] %vm514, %v513
  %s517 = scalar_lea.vmem %s0, 1415
  %v518 = vld [vmem:[%s517] ss:$8 sm:$0xf]
  %s519 = scalar_lea.vmem %s0, 1415
  %v520 = vld [vmem:[%s519] ss:$8 sm:$0xf0]
  %vm521 = vcmask 1047556
  %v522 = vsel %vm521, %v520, %v518
  %523 = vrot.lane.b32.xlu0 %v522, 56
  %v524 = vpop.permute.xlu0 %523
  %vm525 = vcmask 523712
  %s526 = scalar_lea.vmem %s1, 176
  %527 = vst.msk [vmem:[%s526] sm:$0xff] %vm525, %v524
  %s528 = scalar_lea.vmem %s0, 1671
  %v529 = vld [vmem:[%s528] ss:$8 sm:$0xf]
  %s530 = scalar_lea.vmem %s0, 1671
  %v531 = vld [vmem:[%s530] ss:$8 sm:$0xf0]
  %vm532 = vcmask 1047556
  %v533 = vsel %vm532, %v531, %v529
  %534 = vrot.lane.b32.xlu0 %v533, 56
  %v535 = vpop.permute.xlu0 %534
  %vm536 = vcmask 523712
  %s537 = scalar_lea.vmem %s1, 208
  %538 = vst.msk [vmem:[%s537] sm:$0xff] %vm536, %v535
  %s539 = scalar_lea.vmem %s0, 1927
  %v540 = vld [vmem:[%s539] ss:$8 sm:$0xf]
  %s541 = scalar_lea.vmem %s0, 1927
  %v542 = vld [vmem:[%s541] ss:$8 sm:$0xf0]
  %vm543 = vcmask 1047556
  %v544 = vsel %vm543, %v542, %v540
  %545 = vrot.lane.b32.xlu0 %v544, 56
  %v546 = vpop.permute.xlu0 %545
  %vm547 = vcmask 523712
  %s548 = scalar_lea.vmem %s1, 240
  %549 = vst.msk [vmem:[%s548] sm:$0xff] %vm547, %v546
  %s550 = scalar_lea.vmem %s0, 199
  %v551 = vld [vmem:[%s550] ss:$8 sm:$0xf]
  %s552 = scalar_lea.vmem %s0, 199
  %v553 = vld [vmem:[%s552] ss:$8 sm:$0xf0]
  %vm554 = vcmask 1047556
  %v555 = vsel %vm554, %v553, %v551
  %556 = vrot.lane.b32.xlu0 %v555, 56
  %v557 = vpop.permute.xlu0 %556
  %vm558 = vcmask 523712
  %s559 = scalar_lea.vmem %s1, 24
  %560 = vst.msk [vmem:[%s559] sm:$0xff] %vm558, %v557
  %s561 = scalar_lea.vmem %s0, 455
  %v562 = vld [vmem:[%s561] ss:$8 sm:$0xf]
  %s563 = scalar_lea.vmem %s0, 455
  %v564 = vld [vmem:[%s563] ss:$8 sm:$0xf0]
  %vm565 = vcmask 1047556
  %v566 = vsel %vm565, %v564, %v562
  %567 = vrot.lane.b32.xlu0 %v566, 56
  %v568 = vpop.permute.xlu0 %567
  %vm569 = vcmask 523712
  %s570 = scalar_lea.vmem %s1, 56
  %571 = vst.msk [vmem:[%s570] sm:$0xff] %vm569, %v568
  %s572 = scalar_lea.vmem %s0, 711
  %v573 = vld [vmem:[%s572] ss:$8 sm:$0xf]
  %s574 = scalar_lea.vmem %s0, 711
  %v575 = vld [vmem:[%s574] ss:$8 sm:$0xf0]
  %vm576 = vcmask 1047556
  %v577 = vsel %vm576, %v575, %v573
  %578 = vrot.lane.b32.xlu0 %v577, 56
  %v579 = vpop.permute.xlu0 %578
  %vm580 = vcmask 523712
  %s581 = scalar_lea.vmem %s1, 88
  %582 = vst.msk [vmem:[%s581] sm:$0xff] %vm580, %v579
  %s583 = scalar_lea.vmem %s0, 967
  %v584 = vld [vmem:[%s583] ss:$8 sm:$0xf]
  %s585 = scalar_lea.vmem %s0, 967
  %v586 = vld [vmem:[%s585] ss:$8 sm:$0xf0]
  %vm587 = vcmask 1047556
  %v588 = vsel %vm587, %v586, %v584
  %589 = vrot.lane.b32.xlu0 %v588, 56
  %v590 = vpop.permute.xlu0 %589
  %vm591 = vcmask 523712
  %s592 = scalar_lea.vmem %s1, 120
  %593 = vst.msk [vmem:[%s592] sm:$0xff] %vm591, %v590
  %s594 = scalar_lea.vmem %s0, 1223
  %v595 = vld [vmem:[%s594] ss:$8 sm:$0xf]
  %s596 = scalar_lea.vmem %s0, 1223
  %v597 = vld [vmem:[%s596] ss:$8 sm:$0xf0]
  %vm598 = vcmask 1047556
  %v599 = vsel %vm598, %v597, %v595
  %600 = vrot.lane.b32.xlu0 %v599, 56
  %v601 = vpop.permute.xlu0 %600
  %vm602 = vcmask 523712
  %s603 = scalar_lea.vmem %s1, 152
  %604 = vst.msk [vmem:[%s603] sm:$0xff] %vm602, %v601
  %s605 = scalar_lea.vmem %s0, 1479
  %v606 = vld [vmem:[%s605] ss:$8 sm:$0xf]
  %s607 = scalar_lea.vmem %s0, 1479
  %v608 = vld [vmem:[%s607] ss:$8 sm:$0xf0]
  %vm609 = vcmask 1047556
  %v610 = vsel %vm609, %v608, %v606
  %611 = vrot.lane.b32.xlu0 %v610, 56
  %v612 = vpop.permute.xlu0 %611
  %vm613 = vcmask 523712
  %s614 = scalar_lea.vmem %s1, 184
  %615 = vst.msk [vmem:[%s614] sm:$0xff] %vm613, %v612
  %s616 = scalar_lea.vmem %s0, 1735
  %v617 = vld [vmem:[%s616] ss:$8 sm:$0xf]
  %s618 = scalar_lea.vmem %s0, 1735
  %v619 = vld [vmem:[%s618] ss:$8 sm:$0xf0]
  %vm620 = vcmask 1047556
  %v621 = vsel %vm620, %v619, %v617
  %622 = vrot.lane.b32.xlu0 %v621, 56
  %v623 = vpop.permute.xlu0 %622
  %vm624 = vcmask 523712
  %s625 = scalar_lea.vmem %s1, 216
  %626 = vst.msk [vmem:[%s625] sm:$0xff] %vm624, %v623
  %s627 = scalar_lea.vmem %s0, 1991
  %v628 = vld [vmem:[%s627] ss:$8 sm:$0xf]
  %s629 = scalar_lea.vmem %s0, 1991
  %v630 = vld [vmem:[%s629] ss:$8 sm:$0xf0]
  %vm631 = vcmask 1047556
  %v632 = vsel %vm631, %v630, %v628
  %633 = vrot.lane.b32.xlu0 %v632, 56
  %v634 = vpop.permute.xlu0 %633
  %vm635 = vcmask 523712
  %s636 = scalar_lea.vmem %s1, 248
  %637 = vst.msk [vmem:[%s636] sm:$0xff] %vm635, %v634
  %s638 = scalar_lea.vmem %s0, 6
  %v639 = vld [vmem:[%s638] ss:$8 sm:$0xf]
  %s640 = scalar_lea.vmem %s0, 6
  %v641 = vld [vmem:[%s640] ss:$8 sm:$0xf0]
  %vm642 = vcmask 1047556
  %v643 = vsel %vm642, %v641, %v639
  %644 = vrot.lane.b32.xlu0 %v643, 48
  %v645 = vpop.permute.xlu0 %644
  %vm646 = vcmask 458112
  %647 = vst.msk [vmem:[%s1] sm:$0xff] %vm646, %v645
  %s648 = scalar_lea.vmem %s0, 262
  %v649 = vld [vmem:[%s648] ss:$8 sm:$0xf]
  %s650 = scalar_lea.vmem %s0, 262
  %v651 = vld [vmem:[%s650] ss:$8 sm:$0xf0]
  %vm652 = vcmask 1047556
  %v653 = vsel %vm652, %v651, %v649
  %654 = vrot.lane.b32.xlu0 %v653, 48
  %v655 = vpop.permute.xlu0 %654
  %vm656 = vcmask 458112
  %s657 = scalar_lea.vmem %s1, 32
  %658 = vst.msk [vmem:[%s657] sm:$0xff] %vm656, %v655
  %s659 = scalar_lea.vmem %s0, 518
  %v660 = vld [vmem:[%s659] ss:$8 sm:$0xf]
  %s661 = scalar_lea.vmem %s0, 518
  %v662 = vld [vmem:[%s661] ss:$8 sm:$0xf0]
  %vm663 = vcmask 1047556
  %v664 = vsel %vm663, %v662, %v660
  %665 = vrot.lane.b32.xlu0 %v664, 48
  %v666 = vpop.permute.xlu0 %665
  %vm667 = vcmask 458112
  %s668 = scalar_lea.vmem %s1, 64
  %669 = vst.msk [vmem:[%s668] sm:$0xff] %vm667, %v666
  %s670 = scalar_lea.vmem %s0, 774
  %v671 = vld [vmem:[%s670] ss:$8 sm:$0xf]
  %s672 = scalar_lea.vmem %s0, 774
  %v673 = vld [vmem:[%s672] ss:$8 sm:$0xf0]
  %vm674 = vcmask 1047556
  %v675 = vsel %vm674, %v673, %v671
  %676 = vrot.lane.b32.xlu0 %v675, 48
  %v677 = vpop.permute.xlu0 %676
  %vm678 = vcmask 458112
  %s679 = scalar_lea.vmem %s1, 96
  %680 = vst.msk [vmem:[%s679] sm:$0xff] %vm678, %v677
  %s681 = scalar_lea.vmem %s0, 1030
  %v682 = vld [vmem:[%s681] ss:$8 sm:$0xf]
  %s683 = scalar_lea.vmem %s0, 1030
  %v684 = vld [vmem:[%s683] ss:$8 sm:$0xf0]
  %vm685 = vcmask 1047556
  %v686 = vsel %vm685, %v684, %v682
  %687 = vrot.lane.b32.xlu0 %v686, 48
  %v688 = vpop.permute.xlu0 %687
  %vm689 = vcmask 458112
  %s690 = scalar_lea.vmem %s1, 128
  %691 = vst.msk [vmem:[%s690] sm:$0xff] %vm689, %v688
  %s692 = scalar_lea.vmem %s0, 1286
  %v693 = vld [vmem:[%s692] ss:$8 sm:$0xf]
  %s694 = scalar_lea.vmem %s0, 1286
  %v695 = vld [vmem:[%s694] ss:$8 sm:$0xf0]
  %vm696 = vcmask 1047556
  %v697 = vsel %vm696, %v695, %v693
  %698 = vrot.lane.b32.xlu0 %v697, 48
  %v699 = vpop.permute.xlu0 %698
  %vm700 = vcmask 458112
  %s701 = scalar_lea.vmem %s1, 160
  %702 = vst.msk [vmem:[%s701] sm:$0xff] %vm700, %v699
  %s703 = scalar_lea.vmem %s0, 1542
  %v704 = vld [vmem:[%s703] ss:$8 sm:$0xf]
  %s705 = scalar_lea.vmem %s0, 1542
  %v706 = vld [vmem:[%s705] ss:$8 sm:$0xf0]
  %vm707 = vcmask 1047556
  %v708 = vsel %vm707, %v706, %v704
  %709 = vrot.lane.b32.xlu0 %v708, 48
  %v710 = vpop.permute.xlu0 %709
  %vm711 = vcmask 458112
  %s712 = scalar_lea.vmem %s1, 192
  %713 = vst.msk [vmem:[%s712] sm:$0xff] %vm711, %v710
  %s714 = scalar_lea.vmem %s0, 1798
  %v715 = vld [vmem:[%s714] ss:$8 sm:$0xf]
  %s716 = scalar_lea.vmem %s0, 1798
  %v717 = vld [vmem:[%s716] ss:$8 sm:$0xf0]
  %vm718 = vcmask 1047556
  %v719 = vsel %vm718, %v717, %v715
  %720 = vrot.lane.b32.xlu0 %v719, 48
  %v721 = vpop.permute.xlu0 %720
  %vm722 = vcmask 458112
  %s723 = scalar_lea.vmem %s1, 224
  %724 = vst.msk [vmem:[%s723] sm:$0xff] %vm722, %v721
  %s725 = scalar_lea.vmem %s0, 70
  %v726 = vld [vmem:[%s725] ss:$8 sm:$0xf]
  %s727 = scalar_lea.vmem %s0, 70
  %v728 = vld [vmem:[%s727] ss:$8 sm:$0xf0]
  %vm729 = vcmask 1047556
  %v730 = vsel %vm729, %v728, %v726
  %731 = vrot.lane.b32.xlu0 %v730, 48
  %v732 = vpop.permute.xlu0 %731
  %vm733 = vcmask 458112
  %s734 = scalar_lea.vmem %s1, 8
  %735 = vst.msk [vmem:[%s734] sm:$0xff] %vm733, %v732
  %s736 = scalar_lea.vmem %s0, 326
  %v737 = vld [vmem:[%s736] ss:$8 sm:$0xf]
  %s738 = scalar_lea.vmem %s0, 326
  %v739 = vld [vmem:[%s738] ss:$8 sm:$0xf0]
  %vm740 = vcmask 1047556
  %v741 = vsel %vm740, %v739, %v737
  %742 = vrot.lane.b32.xlu0 %v741, 48
  %v743 = vpop.permute.xlu0 %742
  %vm744 = vcmask 458112
  %s745 = scalar_lea.vmem %s1, 40
  %746 = vst.msk [vmem:[%s745] sm:$0xff] %vm744, %v743
  %s747 = scalar_lea.vmem %s0, 582
  %v748 = vld [vmem:[%s747] ss:$8 sm:$0xf]
  %s749 = scalar_lea.vmem %s0, 582
  %v750 = vld [vmem:[%s749] ss:$8 sm:$0xf0]
  %vm751 = vcmask 1047556
  %v752 = vsel %vm751, %v750, %v748
  %753 = vrot.lane.b32.xlu0 %v752, 48
  %v754 = vpop.permute.xlu0 %753
  %vm755 = vcmask 458112
  %s756 = scalar_lea.vmem %s1, 72
  %757 = vst.msk [vmem:[%s756] sm:$0xff] %vm755, %v754
  %s758 = scalar_lea.vmem %s0, 838
  %v759 = vld [vmem:[%s758] ss:$8 sm:$0xf]
  %s760 = scalar_lea.vmem %s0, 838
  %v761 = vld [vmem:[%s760] ss:$8 sm:$0xf0]
  %vm762 = vcmask 1047556
  %v763 = vsel %vm762, %v761, %v759
  %764 = vrot.lane.b32.xlu0 %v763, 48
  %v765 = vpop.permute.xlu0 %764
  %vm766 = vcmask 458112
  %s767 = scalar_lea.vmem %s1, 104
  %768 = vst.msk [vmem:[%s767] sm:$0xff] %vm766, %v765
  %s769 = scalar_lea.vmem %s0, 1094
  %v770 = vld [vmem:[%s769] ss:$8 sm:$0xf]
  %s771 = scalar_lea.vmem %s0, 1094
  %v772 = vld [vmem:[%s771] ss:$8 sm:$0xf0]
  %vm773 = vcmask 1047556
  %v774 = vsel %vm773, %v772, %v770
  %775 = vrot.lane.b32.xlu0 %v774, 48
  %v776 = vpop.permute.xlu0 %775
  %vm777 = vcmask 458112
  %s778 = scalar_lea.vmem %s1, 136
  %779 = vst.msk [vmem:[%s778] sm:$0xff] %vm777, %v776
  %s780 = scalar_lea.vmem %s0, 1350
  %v781 = vld [vmem:[%s780] ss:$8 sm:$0xf]
  %s782 = scalar_lea.vmem %s0, 1350
  %v783 = vld [vmem:[%s782] ss:$8 sm:$0xf0]
  %vm784 = vcmask 1047556
  %v785 = vsel %vm784, %v783, %v781
  %786 = vrot.lane.b32.xlu0 %v785, 48
  %v787 = vpop.permute.xlu0 %786
  %vm788 = vcmask 458112
  %s789 = scalar_lea.vmem %s1, 168
  %790 = vst.msk [vmem:[%s789] sm:$0xff] %vm788, %v787
  %s791 = scalar_lea.vmem %s0, 1606
  %v792 = vld [vmem:[%s791] ss:$8 sm:$0xf]
  %s793 = scalar_lea.vmem %s0, 1606
  %v794 = vld [vmem:[%s793] ss:$8 sm:$0xf0]
  %vm795 = vcmask 1047556
  %v796 = vsel %vm795, %v794, %v792
  %797 = vrot.lane.b32.xlu0 %v796, 48
  %v798 = vpop.permute.xlu0 %797
  %vm799 = vcmask 458112
  %s800 = scalar_lea.vmem %s1, 200
  %801 = vst.msk [vmem:[%s800] sm:$0xff] %vm799, %v798
  %s802 = scalar_lea.vmem %s0, 1862
  %v803 = vld [vmem:[%s802] ss:$8 sm:$0xf]
  %s804 = scalar_lea.vmem %s0, 1862
  %v805 = vld [vmem:[%s804] ss:$8 sm:$0xf0]
  %vm806 = vcmask 1047556
  %v807 = vsel %vm806, %v805, %v803
  %808 = vrot.lane.b32.xlu0 %v807, 48
  %v809 = vpop.permute.xlu0 %808
  %vm810 = vcmask 458112
  %s811 = scalar_lea.vmem %s1, 232
  %812 = vst.msk [vmem:[%s811] sm:$0xff] %vm810, %v809
  %s813 = scalar_lea.vmem %s0, 134
  %v814 = vld [vmem:[%s813] ss:$8 sm:$0xf]
  %s815 = scalar_lea.vmem %s0, 134
  %v816 = vld [vmem:[%s815] ss:$8 sm:$0xf0]
  %vm817 = vcmask 1047556
  %v818 = vsel %vm817, %v816, %v814
  %819 = vrot.lane.b32.xlu0 %v818, 48
  %v820 = vpop.permute.xlu0 %819
  %vm821 = vcmask 458112
  %s822 = scalar_lea.vmem %s1, 16
  %823 = vst.msk [vmem:[%s822] sm:$0xff] %vm821, %v820
  %s824 = scalar_lea.vmem %s0, 390
  %v825 = vld [vmem:[%s824] ss:$8 sm:$0xf]
  %s826 = scalar_lea.vmem %s0, 390
  %v827 = vld [vmem:[%s826] ss:$8 sm:$0xf0]
  %vm828 = vcmask 1047556
  %v829 = vsel %vm828, %v827, %v825
  %830 = vrot.lane.b32.xlu0 %v829, 48
  %v831 = vpop.permute.xlu0 %830
  %vm832 = vcmask 458112
  %s833 = scalar_lea.vmem %s1, 48
  %834 = vst.msk [vmem:[%s833] sm:$0xff] %vm832, %v831
  %s835 = scalar_lea.vmem %s0, 646
  %v836 = vld [vmem:[%s835] ss:$8 sm:$0xf]
  %s837 = scalar_lea.vmem %s0, 646
  %v838 = vld [vmem:[%s837] ss:$8 sm:$0xf0]
  %vm839 = vcmask 1047556
  %v840 = vsel %vm839, %v838, %v836
  %841 = vrot.lane.b32.xlu0 %v840, 48
  %v842 = vpop.permute.xlu0 %841
  %vm843 = vcmask 458112
  %s844 = scalar_lea.vmem %s1, 80
  %845 = vst.msk [vmem:[%s844] sm:$0xff] %vm843, %v842
  %s846 = scalar_lea.vmem %s0, 902
  %v847 = vld [vmem:[%s846] ss:$8 sm:$0xf]
  %s848 = scalar_lea.vmem %s0, 902
  %v849 = vld [vmem:[%s848] ss:$8 sm:$0xf0]
  %vm850 = vcmask 1047556
  %v851 = vsel %vm850, %v849, %v847
  %852 = vrot.lane.b32.xlu0 %v851, 48
  %v853 = vpop.permute.xlu0 %852
  %vm854 = vcmask 458112
  %s855 = scalar_lea.vmem %s1, 112
  %856 = vst.msk [vmem:[%s855] sm:$0xff] %vm854, %v853
  %s857 = scalar_lea.vmem %s0, 1158
  %v858 = vld [vmem:[%s857] ss:$8 sm:$0xf]
  %s859 = scalar_lea.vmem %s0, 1158
  %v860 = vld [vmem:[%s859] ss:$8 sm:$0xf0]
  %vm861 = vcmask 1047556
  %v862 = vsel %vm861, %v860, %v858
  %863 = vrot.lane.b32.xlu0 %v862, 48
  %v864 = vpop.permute.xlu0 %863
  %vm865 = vcmask 458112
  %s866 = scalar_lea.vmem %s1, 144
  %867 = vst.msk [vmem:[%s866] sm:$0xff] %vm865, %v864
  %s868 = scalar_lea.vmem %s0, 1414
  %v869 = vld [vmem:[%s868] ss:$8 sm:$0xf]
  %s870 = scalar_lea.vmem %s0, 1414
  %v871 = vld [vmem:[%s870] ss:$8 sm:$0xf0]
  %vm872 = vcmask 1047556
  %v873 = vsel %vm872, %v871, %v869
  %874 = vrot.lane.b32.xlu0 %v873, 48
  %v875 = vpop.permute.xlu0 %874
  %vm876 = vcmask 458112
  %s877 = scalar_lea.vmem %s1, 176
  %878 = vst.msk [vmem:[%s877] sm:$0xff] %vm876, %v875
  %s879 = scalar_lea.vmem %s0, 1670
  %v880 = vld [vmem:[%s879] ss:$8 sm:$0xf]
  %s881 = scalar_lea.vmem %s0, 1670
  %v882 = vld [vmem:[%s881] ss:$8 sm:$0xf0]
  %vm883 = vcmask 1047556
  %v884 = vsel %vm883, %v882, %v880
  %885 = vrot.lane.b32.xlu0 %v884, 48
  %v886 = vpop.permute.xlu0 %885
  %vm887 = vcmask 458112
  %s888 = scalar_lea.vmem %s1, 208
  %889 = vst.msk [vmem:[%s888] sm:$0xff] %vm887, %v886
  %s890 = scalar_lea.vmem %s0, 1926
  %v891 = vld [vmem:[%s890] ss:$8 sm:$0xf]
  %s892 = scalar_lea.vmem %s0, 1926
  %v893 = vld [vmem:[%s892] ss:$8 sm:$0xf0]
  %vm894 = vcmask 1047556
  %v895 = vsel %vm894, %v893, %v891
  %896 = vrot.lane.b32.xlu0 %v895, 48
  %v897 = vpop.permute.xlu0 %896
  %vm898 = vcmask 458112
  %s899 = scalar_lea.vmem %s1, 240
  %900 = vst.msk [vmem:[%s899] sm:$0xff] %vm898, %v897
  %s901 = scalar_lea.vmem %s0, 198
  %v902 = vld [vmem:[%s901] ss:$8 sm:$0xf]
  %s903 = scalar_lea.vmem %s0, 198
  %v904 = vld [vmem:[%s903] ss:$8 sm:$0xf0]
  %vm905 = vcmask 1047556
  %v906 = vsel %vm905, %v904, %v902
  %907 = vrot.lane.b32.xlu0 %v906, 48
  %v908 = vpop.permute.xlu0 %907
  %vm909 = vcmask 458112
  %s910 = scalar_lea.vmem %s1, 24
  %911 = vst.msk [vmem:[%s910] sm:$0xff] %vm909, %v908
  %s912 = scalar_lea.vmem %s0, 454
  %v913 = vld [vmem:[%s912] ss:$8 sm:$0xf]
  %s914 = scalar_lea.vmem %s0, 454
  %v915 = vld [vmem:[%s914] ss:$8 sm:$0xf0]
  %vm916 = vcmask 1047556
  %v917 = vsel %vm916, %v915, %v913
  %918 = vrot.lane.b32.xlu0 %v917, 48
  %v919 = vpop.permute.xlu0 %918
  %vm920 = vcmask 458112
  %s921 = scalar_lea.vmem %s1, 56
  %922 = vst.msk [vmem:[%s921] sm:$0xff] %vm920, %v919
  %s923 = scalar_lea.vmem %s0, 710
  %v924 = vld [vmem:[%s923] ss:$8 sm:$0xf]
  %s925 = scalar_lea.vmem %s0, 710
  %v926 = vld [vmem:[%s925] ss:$8 sm:$0xf0]
  %vm927 = vcmask 1047556
  %v928 = vsel %vm927, %v926, %v924
  %929 = vrot.lane.b32.xlu0 %v928, 48
  %v930 = vpop.permute.xlu0 %929
  %vm931 = vcmask 458112
  %s932 = scalar_lea.vmem %s1, 88
  %933 = vst.msk [vmem:[%s932] sm:$0xff] %vm931, %v930
  %s934 = scalar_lea.vmem %s0, 966
  %v935 = vld [vmem:[%s934] ss:$8 sm:$0xf]
  %s936 = scalar_lea.vmem %s0, 966
  %v937 = vld [vmem:[%s936] ss:$8 sm:$0xf0]
  %vm938 = vcmask 1047556
  %v939 = vsel %vm938, %v937, %v935
  %940 = vrot.lane.b32.xlu0 %v939, 48
  %v941 = vpop.permute.xlu0 %940
  %vm942 = vcmask 458112
  %s943 = scalar_lea.vmem %s1, 120
  %944 = vst.msk [vmem:[%s943] sm:$0xff] %vm942, %v941
  %s945 = scalar_lea.vmem %s0, 1222
  %v946 = vld [vmem:[%s945] ss:$8 sm:$0xf]
  %s947 = scalar_lea.vmem %s0, 1222
  %v948 = vld [vmem:[%s947] ss:$8 sm:$0xf0]
  %vm949 = vcmask 1047556
  %v950 = vsel %vm949, %v948, %v946
  %951 = vrot.lane.b32.xlu0 %v950, 48
  %v952 = vpop.permute.xlu0 %951
  %vm953 = vcmask 458112
  %s954 = scalar_lea.vmem %s1, 152
  %955 = vst.msk [vmem:[%s954] sm:$0xff] %vm953, %v952
  %s956 = scalar_lea.vmem %s0, 1478
  %v957 = vld [vmem:[%s956] ss:$8 sm:$0xf]
  %s958 = scalar_lea.vmem %s0, 1478
  %v959 = vld [vmem:[%s958] ss:$8 sm:$0xf0]
  %vm960 = vcmask 1047556
  %v961 = vsel %vm960, %v959, %v957
  %962 = vrot.lane.b32.xlu0 %v961, 48
  %v963 = vpop.permute.xlu0 %962
  %vm964 = vcmask 458112
  %s965 = scalar_lea.vmem %s1, 184
  %966 = vst.msk [vmem:[%s965] sm:$0xff] %vm964, %v963
  %s967 = scalar_lea.vmem %s0, 1734
  %v968 = vld [vmem:[%s967] ss:$8 sm:$0xf]
  %s969 = scalar_lea.vmem %s0, 1734
  %v970 = vld [vmem:[%s969] ss:$8 sm:$0xf0]
  %vm971 = vcmask 1047556
  %v972 = vsel %vm971, %v970, %v968
  %973 = vrot.lane.b32.xlu0 %v972, 48
  %v974 = vpop.permute.xlu0 %973
  %vm975 = vcmask 458112
  %s976 = scalar_lea.vmem %s1, 216
  %977 = vst.msk [vmem:[%s976] sm:$0xff] %vm975, %v974
  %s978 = scalar_lea.vmem %s0, 1990
  %v979 = vld [vmem:[%s978] ss:$8 sm:$0xf]
  %s980 = scalar_lea.vmem %s0, 1990
  %v981 = vld [vmem:[%s980] ss:$8 sm:$0xf0]
  %vm982 = vcmask 1047556
  %v983 = vsel %vm982, %v981, %v979
  %984 = vrot.lane.b32.xlu0 %v983, 48
  %v985 = vpop.permute.xlu0 %984
  %vm986 = vcmask 458112
  %s987 = scalar_lea.vmem %s1, 248
  %988 = vst.msk [vmem:[%s987] sm:$0xff] %vm986, %v985
  %s989 = scalar_lea.vmem %s0, 5
  %v990 = vld [vmem:[%s989] ss:$8 sm:$0xf]
  %s991 = scalar_lea.vmem %s0, 5
  %v992 = vld [vmem:[%s991] ss:$8 sm:$0xf0]
  %vm993 = vcmask 1047556
  %v994 = vsel %vm993, %v992, %v990
  %995 = vrot.lane.b32.xlu0 %v994, 40
  %v996 = vpop.permute.xlu0 %995
  %vm997 = vcmask 392512
  %998 = vst.msk [vmem:[%s1] sm:$0xff] %vm997, %v996
  %s999 = scalar_lea.vmem %s0, 261
  %v1000 = vld [vmem:[%s999] ss:$8 sm:$0xf]
  %s1001 = scalar_lea.vmem %s0, 261
  %v1002 = vld [vmem:[%s1001] ss:$8 sm:$0xf0]
  %vm1003 = vcmask 1047556
  %v1004 = vsel %vm1003, %v1002, %v1000
  %1005 = vrot.lane.b32.xlu0 %v1004, 40
  %v1006 = vpop.permute.xlu0 %1005
  %vm1007 = vcmask 392512
  %s1008 = scalar_lea.vmem %s1, 32
  %1009 = vst.msk [vmem:[%s1008] sm:$0xff] %vm1007, %v1006
  %s1010 = scalar_lea.vmem %s0, 517
  %v1011 = vld [vmem:[%s1010] ss:$8 sm:$0xf]
  %s1012 = scalar_lea.vmem %s0, 517
  %v1013 = vld [vmem:[%s1012] ss:$8 sm:$0xf0]
  %vm1014 = vcmask 1047556
  %v1015 = vsel %vm1014, %v1013, %v1011
  %1016 = vrot.lane.b32.xlu0 %v1015, 40
  %v1017 = vpop.permute.xlu0 %1016
  %vm1018 = vcmask 392512
  %s1019 = scalar_lea.vmem %s1, 64
  %1020 = vst.msk [vmem:[%s1019] sm:$0xff] %vm1018, %v1017
  %s1021 = scalar_lea.vmem %s0, 773
  %v1022 = vld [vmem:[%s1021] ss:$8 sm:$0xf]
  %s1023 = scalar_lea.vmem %s0, 773
  %v1024 = vld [vmem:[%s1023] ss:$8 sm:$0xf0]
  %vm1025 = vcmask 1047556
  %v1026 = vsel %vm1025, %v1024, %v1022
  %1027 = vrot.lane.b32.xlu0 %v1026, 40
  %v1028 = vpop.permute.xlu0 %1027
  %vm1029 = vcmask 392512
  %s1030 = scalar_lea.vmem %s1, 96
  %1031 = vst.msk [vmem:[%s1030] sm:$0xff] %vm1029, %v1028
  %s1032 = scalar_lea.vmem %s0, 1029
  %v1033 = vld [vmem:[%s1032] ss:$8 sm:$0xf]
  %s1034 = scalar_lea.vmem %s0, 1029
  %v1035 = vld [vmem:[%s1034] ss:$8 sm:$0xf0]
  %vm1036 = vcmask 1047556
  %v1037 = vsel %vm1036, %v1035, %v1033
  %1038 = vrot.lane.b32.xlu0 %v1037, 40
  %v1039 = vpop.permute.xlu0 %1038
  %vm1040 = vcmask 392512
  %s1041 = scalar_lea.vmem %s1, 128
  %1042 = vst.msk [vmem:[%s1041] sm:$0xff] %vm1040, %v1039
  %s1043 = scalar_lea.vmem %s0, 1285
  %v1044 = vld [vmem:[%s1043] ss:$8 sm:$0xf]
  %s1045 = scalar_lea.vmem %s0, 1285
  %v1046 = vld [vmem:[%s1045] ss:$8 sm:$0xf0]
  %vm1047 = vcmask 1047556
  %v1048 = vsel %vm1047, %v1046, %v1044
  %1049 = vrot.lane.b32.xlu0 %v1048, 40
  %v1050 = vpop.permute.xlu0 %1049
  %vm1051 = vcmask 392512
  %s1052 = scalar_lea.vmem %s1, 160
  %1053 = vst.msk [vmem:[%s1052] sm:$0xff] %vm1051, %v1050
  %s1054 = scalar_lea.vmem %s0, 1541
  %v1055 = vld [vmem:[%s1054] ss:$8 sm:$0xf]
  %s1056 = scalar_lea.vmem %s0, 1541
  %v1057 = vld [vmem:[%s1056] ss:$8 sm:$0xf0]
  %vm1058 = vcmask 1047556
  %v1059 = vsel %vm1058, %v1057, %v1055
  %1060 = vrot.lane.b32.xlu0 %v1059, 40
  %v1061 = vpop.permute.xlu0 %1060
  %vm1062 = vcmask 392512
  %s1063 = scalar_lea.vmem %s1, 192
  %1064 = vst.msk [vmem:[%s1063] sm:$0xff] %vm1062, %v1061
  %s1065 = scalar_lea.vmem %s0, 1797
  %v1066 = vld [vmem:[%s1065] ss:$8 sm:$0xf]
  %s1067 = scalar_lea.vmem %s0, 1797
  %v1068 = vld [vmem:[%s1067] ss:$8 sm:$0xf0]
  %vm1069 = vcmask 1047556
  %v1070 = vsel %vm1069, %v1068, %v1066
  %1071 = vrot.lane.b32.xlu0 %v1070, 40
  %v1072 = vpop.permute.xlu0 %1071
  %vm1073 = vcmask 392512
  %s1074 = scalar_lea.vmem %s1, 224
  %1075 = vst.msk [vmem:[%s1074] sm:$0xff] %vm1073, %v1072
  %s1076 = scalar_lea.vmem %s0, 69
  %v1077 = vld [vmem:[%s1076] ss:$8 sm:$0xf]
  %s1078 = scalar_lea.vmem %s0, 69
  %v1079 = vld [vmem:[%s1078] ss:$8 sm:$0xf0]
  %vm1080 = vcmask 1047556
  %v1081 = vsel %vm1080, %v1079, %v1077
  %1082 = vrot.lane.b32.xlu0 %v1081, 40
  %v1083 = vpop.permute.xlu0 %1082
  %vm1084 = vcmask 392512
  %s1085 = scalar_lea.vmem %s1, 8
  %1086 = vst.msk [vmem:[%s1085] sm:$0xff] %vm1084, %v1083
  %s1087 = scalar_lea.vmem %s0, 325
  %v1088 = vld [vmem:[%s1087] ss:$8 sm:$0xf]
  %s1089 = scalar_lea.vmem %s0, 325
  %v1090 = vld [vmem:[%s1089] ss:$8 sm:$0xf0]
  %vm1091 = vcmask 1047556
  %v1092 = vsel %vm1091, %v1090, %v1088
  %1093 = vrot.lane.b32.xlu0 %v1092, 40
  %v1094 = vpop.permute.xlu0 %1093
  %vm1095 = vcmask 392512
  %s1096 = scalar_lea.vmem %s1, 40
  %1097 = vst.msk [vmem:[%s1096] sm:$0xff] %vm1095, %v1094
  %s1098 = scalar_lea.vmem %s0, 581
  %v1099 = vld [vmem:[%s1098] ss:$8 sm:$0xf]
  %s1100 = scalar_lea.vmem %s0, 581
  %v1101 = vld [vmem:[%s1100] ss:$8 sm:$0xf0]
  %vm1102 = vcmask 1047556
  %v1103 = vsel %vm1102, %v1101, %v1099
  %1104 = vrot.lane.b32.xlu0 %v1103, 40
  %v1105 = vpop.permute.xlu0 %1104
  %vm1106 = vcmask 392512
  %s1107 = scalar_lea.vmem %s1, 72
  %1108 = vst.msk [vmem:[%s1107] sm:$0xff] %vm1106, %v1105
  %s1109 = scalar_lea.vmem %s0, 837
  %v1110 = vld [vmem:[%s1109] ss:$8 sm:$0xf]
  %s1111 = scalar_lea.vmem %s0, 837
  %v1112 = vld [vmem:[%s1111] ss:$8 sm:$0xf0]
  %vm1113 = vcmask 1047556
  %v1114 = vsel %vm1113, %v1112, %v1110
  %1115 = vrot.lane.b32.xlu0 %v1114, 40
  %v1116 = vpop.permute.xlu0 %1115
  %vm1117 = vcmask 392512
  %s1118 = scalar_lea.vmem %s1, 104
  %1119 = vst.msk [vmem:[%s1118] sm:$0xff] %vm1117, %v1116
  %s1120 = scalar_lea.vmem %s0, 1093
  %v1121 = vld [vmem:[%s1120] ss:$8 sm:$0xf]
  %s1122 = scalar_lea.vmem %s0, 1093
  %v1123 = vld [vmem:[%s1122] ss:$8 sm:$0xf0]
  %vm1124 = vcmask 1047556
  %v1125 = vsel %vm1124, %v1123, %v1121
  %1126 = vrot.lane.b32.xlu0 %v1125, 40
  %v1127 = vpop.permute.xlu0 %1126
  %vm1128 = vcmask 392512
  %s1129 = scalar_lea.vmem %s1, 136
  %1130 = vst.msk [vmem:[%s1129] sm:$0xff] %vm1128, %v1127
  %s1131 = scalar_lea.vmem %s0, 1349
  %v1132 = vld [vmem:[%s1131] ss:$8 sm:$0xf]
  %s1133 = scalar_lea.vmem %s0, 1349
  %v1134 = vld [vmem:[%s1133] ss:$8 sm:$0xf0]
  %vm1135 = vcmask 1047556
  %v1136 = vsel %vm1135, %v1134, %v1132
  %1137 = vrot.lane.b32.xlu0 %v1136, 40
  %v1138 = vpop.permute.xlu0 %1137
  %vm1139 = vcmask 392512
  %s1140 = scalar_lea.vmem %s1, 168
  %1141 = vst.msk [vmem:[%s1140] sm:$0xff] %vm1139, %v1138
  %s1142 = scalar_lea.vmem %s0, 1605
  %v1143 = vld [vmem:[%s1142] ss:$8 sm:$0xf]
  %s1144 = scalar_lea.vmem %s0, 1605
  %v1145 = vld [vmem:[%s1144] ss:$8 sm:$0xf0]
  %vm1146 = vcmask 1047556
  %v1147 = vsel %vm1146, %v1145, %v1143
  %1148 = vrot.lane.b32.xlu0 %v1147, 40
  %v1149 = vpop.permute.xlu0 %1148
  %vm1150 = vcmask 392512
  %s1151 = scalar_lea.vmem %s1, 200
  %1152 = vst.msk [vmem:[%s1151] sm:$0xff] %vm1150, %v1149
  %s1153 = scalar_lea.vmem %s0, 1861
  %v1154 = vld [vmem:[%s1153] ss:$8 sm:$0xf]
  %s1155 = scalar_lea.vmem %s0, 1861
  %v1156 = vld [vmem:[%s1155] ss:$8 sm:$0xf0]
  %vm1157 = vcmask 1047556
  %v1158 = vsel %vm1157, %v1156, %v1154
  %1159 = vrot.lane.b32.xlu0 %v1158, 40
  %v1160 = vpop.permute.xlu0 %1159
  %vm1161 = vcmask 392512
  %s1162 = scalar_lea.vmem %s1, 232
  %1163 = vst.msk [vmem:[%s1162] sm:$0xff] %vm1161, %v1160
  %s1164 = scalar_lea.vmem %s0, 133
  %v1165 = vld [vmem:[%s1164] ss:$8 sm:$0xf]
  %s1166 = scalar_lea.vmem %s0, 133
  %v1167 = vld [vmem:[%s1166] ss:$8 sm:$0xf0]
  %vm1168 = vcmask 1047556
  %v1169 = vsel %vm1168, %v1167, %v1165
  %1170 = vrot.lane.b32.xlu0 %v1169, 40
  %v1171 = vpop.permute.xlu0 %1170
  %vm1172 = vcmask 392512
  %s1173 = scalar_lea.vmem %s1, 16
  %1174 = vst.msk [vmem:[%s1173] sm:$0xff] %vm1172, %v1171
  %s1175 = scalar_lea.vmem %s0, 389
  %v1176 = vld [vmem:[%s1175] ss:$8 sm:$0xf]
  %s1177 = scalar_lea.vmem %s0, 389
  %v1178 = vld [vmem:[%s1177] ss:$8 sm:$0xf0]
  %vm1179 = vcmask 1047556
  %v1180 = vsel %vm1179, %v1178, %v1176
  %1181 = vrot.lane.b32.xlu0 %v1180, 40
  %v1182 = vpop.permute.xlu0 %1181
  %vm1183 = vcmask 392512
  %s1184 = scalar_lea.vmem %s1, 48
  %1185 = vst.msk [vmem:[%s1184] sm:$0xff] %vm1183, %v1182
  %s1186 = scalar_lea.vmem %s0, 645
  %v1187 = vld [vmem:[%s1186] ss:$8 sm:$0xf]
  %s1188 = scalar_lea.vmem %s0, 645
  %v1189 = vld [vmem:[%s1188] ss:$8 sm:$0xf0]
  %vm1190 = vcmask 1047556
  %v1191 = vsel %vm1190, %v1189, %v1187
  %1192 = vrot.lane.b32.xlu0 %v1191, 40
  %v1193 = vpop.permute.xlu0 %1192
  %vm1194 = vcmask 392512
  %s1195 = scalar_lea.vmem %s1, 80
  %1196 = vst.msk [vmem:[%s1195] sm:$0xff] %vm1194, %v1193
  %s1197 = scalar_lea.vmem %s0, 901
  %v1198 = vld [vmem:[%s1197] ss:$8 sm:$0xf]
  %s1199 = scalar_lea.vmem %s0, 901
  %v1200 = vld [vmem:[%s1199] ss:$8 sm:$0xf0]
  %vm1201 = vcmask 1047556
  %v1202 = vsel %vm1201, %v1200, %v1198
  %1203 = vrot.lane.b32.xlu0 %v1202, 40
  %v1204 = vpop.permute.xlu0 %1203
  %vm1205 = vcmask 392512
  %s1206 = scalar_lea.vmem %s1, 112
  %1207 = vst.msk [vmem:[%s1206] sm:$0xff] %vm1205, %v1204
  %s1208 = scalar_lea.vmem %s0, 1157
  %v1209 = vld [vmem:[%s1208] ss:$8 sm:$0xf]
  %s1210 = scalar_lea.vmem %s0, 1157
  %v1211 = vld [vmem:[%s1210] ss:$8 sm:$0xf0]
  %vm1212 = vcmask 1047556
  %v1213 = vsel %vm1212, %v1211, %v1209
  %1214 = vrot.lane.b32.xlu0 %v1213, 40
  %v1215 = vpop.permute.xlu0 %1214
  %vm1216 = vcmask 392512
  %s1217 = scalar_lea.vmem %s1, 144
  %1218 = vst.msk [vmem:[%s1217] sm:$0xff] %vm1216, %v1215
  %s1219 = scalar_lea.vmem %s0, 1413
  %v1220 = vld [vmem:[%s1219] ss:$8 sm:$0xf]
  %s1221 = scalar_lea.vmem %s0, 1413
  %v1222 = vld [vmem:[%s1221] ss:$8 sm:$0xf0]
  %vm1223 = vcmask 1047556
  %v1224 = vsel %vm1223, %v1222, %v1220
  %1225 = vrot.lane.b32.xlu0 %v1224, 40
  %v1226 = vpop.permute.xlu0 %1225
  %vm1227 = vcmask 392512
  %s1228 = scalar_lea.vmem %s1, 176
  %1229 = vst.msk [vmem:[%s1228] sm:$0xff] %vm1227, %v1226
  %s1230 = scalar_lea.vmem %s0, 1669
  %v1231 = vld [vmem:[%s1230] ss:$8 sm:$0xf]
  %s1232 = scalar_lea.vmem %s0, 1669
  %v1233 = vld [vmem:[%s1232] ss:$8 sm:$0xf0]
  %vm1234 = vcmask 1047556
  %v1235 = vsel %vm1234, %v1233, %v1231
  %1236 = vrot.lane.b32.xlu0 %v1235, 40
  %v1237 = vpop.permute.xlu0 %1236
  %vm1238 = vcmask 392512
  %s1239 = scalar_lea.vmem %s1, 208
  %1240 = vst.msk [vmem:[%s1239] sm:$0xff] %vm1238, %v1237
  %s1241 = scalar_lea.vmem %s0, 1925
  %v1242 = vld [vmem:[%s1241] ss:$8 sm:$0xf]
  %s1243 = scalar_lea.vmem %s0, 1925
  %v1244 = vld [vmem:[%s1243] ss:$8 sm:$0xf0]
  %vm1245 = vcmask 1047556
  %v1246 = vsel %vm1245, %v1244, %v1242
  %1247 = vrot.lane.b32.xlu0 %v1246, 40
  %v1248 = vpop.permute.xlu0 %1247
  %vm1249 = vcmask 392512
  %s1250 = scalar_lea.vmem %s1, 240
  %1251 = vst.msk [vmem:[%s1250] sm:$0xff] %vm1249, %v1248
  %s1252 = scalar_lea.vmem %s0, 197
  %v1253 = vld [vmem:[%s1252] ss:$8 sm:$0xf]
  %s1254 = scalar_lea.vmem %s0, 197
  %v1255 = vld [vmem:[%s1254] ss:$8 sm:$0xf0]
  %vm1256 = vcmask 1047556
  %v1257 = vsel %vm1256, %v1255, %v1253
  %1258 = vrot.lane.b32.xlu0 %v1257, 40
  %v1259 = vpop.permute.xlu0 %1258
  %vm1260 = vcmask 392512
  %s1261 = scalar_lea.vmem %s1, 24
  %1262 = vst.msk [vmem:[%s1261] sm:$0xff] %vm1260, %v1259
  %s1263 = scalar_lea.vmem %s0, 453
  %v1264 = vld [vmem:[%s1263] ss:$8 sm:$0xf]
  %s1265 = scalar_lea.vmem %s0, 453
  %v1266 = vld [vmem:[%s1265] ss:$8 sm:$0xf0]
  %vm1267 = vcmask 1047556
  %v1268 = vsel %vm1267, %v1266, %v1264
  %1269 = vrot.lane.b32.xlu0 %v1268, 40
  %v1270 = vpop.permute.xlu0 %1269
  %vm1271 = vcmask 392512
  %s1272 = scalar_lea.vmem %s1, 56
  %1273 = vst.msk [vmem:[%s1272] sm:$0xff] %vm1271, %v1270
  %s1274 = scalar_lea.vmem %s0, 709
  %v1275 = vld [vmem:[%s1274] ss:$8 sm:$0xf]
  %s1276 = scalar_lea.vmem %s0, 709
  %v1277 = vld [vmem:[%s1276] ss:$8 sm:$0xf0]
  %vm1278 = vcmask 1047556
  %v1279 = vsel %vm1278, %v1277, %v1275
  %1280 = vrot.lane.b32.xlu0 %v1279, 40
  %v1281 = vpop.permute.xlu0 %1280
  %vm1282 = vcmask 392512
  %s1283 = scalar_lea.vmem %s1, 88
  %1284 = vst.msk [vmem:[%s1283] sm:$0xff] %vm1282, %v1281
  %s1285 = scalar_lea.vmem %s0, 965
  %v1286 = vld [vmem:[%s1285] ss:$8 sm:$0xf]
  %s1287 = scalar_lea.vmem %s0, 965
  %v1288 = vld [vmem:[%s1287] ss:$8 sm:$0xf0]
  %vm1289 = vcmask 1047556
  %v1290 = vsel %vm1289, %v1288, %v1286
  %1291 = vrot.lane.b32.xlu0 %v1290, 40
  %v1292 = vpop.permute.xlu0 %1291
  %vm1293 = vcmask 392512
  %s1294 = scalar_lea.vmem %s1, 120
  %1295 = vst.msk [vmem:[%s1294] sm:$0xff] %vm1293, %v1292
  %s1296 = scalar_lea.vmem %s0, 1221
  %v1297 = vld [vmem:[%s1296] ss:$8 sm:$0xf]
  %s1298 = scalar_lea.vmem %s0, 1221
  %v1299 = vld [vmem:[%s1298] ss:$8 sm:$0xf0]
  %vm1300 = vcmask 1047556
  %v1301 = vsel %vm1300, %v1299, %v1297
  %1302 = vrot.lane.b32.xlu0 %v1301, 40
  %v1303 = vpop.permute.xlu0 %1302
  %vm1304 = vcmask 392512
  %s1305 = scalar_lea.vmem %s1, 152
  %1306 = vst.msk [vmem:[%s1305] sm:$0xff] %vm1304, %v1303
  %s1307 = scalar_lea.vmem %s0, 1477
  %v1308 = vld [vmem:[%s1307] ss:$8 sm:$0xf]
  %s1309 = scalar_lea.vmem %s0, 1477
  %v1310 = vld [vmem:[%s1309] ss:$8 sm:$0xf0]
  %vm1311 = vcmask 1047556
  %v1312 = vsel %vm1311, %v1310, %v1308
  %1313 = vrot.lane.b32.xlu0 %v1312, 40
  %v1314 = vpop.permute.xlu0 %1313
  %vm1315 = vcmask 392512
  %s1316 = scalar_lea.vmem %s1, 184
  %1317 = vst.msk [vmem:[%s1316] sm:$0xff] %vm1315, %v1314
  %s1318 = scalar_lea.vmem %s0, 1733
  %v1319 = vld [vmem:[%s1318] ss:$8 sm:$0xf]
  %s1320 = scalar_lea.vmem %s0, 1733
  %v1321 = vld [vmem:[%s1320] ss:$8 sm:$0xf0]
  %vm1322 = vcmask 1047556
  %v1323 = vsel %vm1322, %v1321, %v1319
  %1324 = vrot.lane.b32.xlu0 %v1323, 40
  %v1325 = vpop.permute.xlu0 %1324
  %vm1326 = vcmask 392512
  %s1327 = scalar_lea.vmem %s1, 216
  %1328 = vst.msk [vmem:[%s1327] sm:$0xff] %vm1326, %v1325
  %s1329 = scalar_lea.vmem %s0, 1989
  %v1330 = vld [vmem:[%s1329] ss:$8 sm:$0xf]
  %s1331 = scalar_lea.vmem %s0, 1989
  %v1332 = vld [vmem:[%s1331] ss:$8 sm:$0xf0]
  %vm1333 = vcmask 1047556
  %v1334 = vsel %vm1333, %v1332, %v1330
  %1335 = vrot.lane.b32.xlu0 %v1334, 40
  %v1336 = vpop.permute.xlu0 %1335
  %vm1337 = vcmask 392512
  %s1338 = scalar_lea.vmem %s1, 248
  %1339 = vst.msk [vmem:[%s1338] sm:$0xff] %vm1337, %v1336
  %s1340 = scalar_lea.vmem %s0, 4
  %v1341 = vld [vmem:[%s1340] ss:$8 sm:$0xf]
  %s1342 = scalar_lea.vmem %s0, 4
  %v1343 = vld [vmem:[%s1342] ss:$8 sm:$0xf0]
  %vm1344 = vcmask 1047556
  %v1345 = vsel %vm1344, %v1343, %v1341
  %1346 = vrot.lane.b32.xlu0 %v1345, 32
  %v1347 = vpop.permute.xlu0 %1346
  %vm1348 = vcmask 326912
  %1349 = vst.msk [vmem:[%s1] sm:$0xff] %vm1348, %v1347
  %s1350 = scalar_lea.vmem %s0, 260
  %v1351 = vld [vmem:[%s1350] ss:$8 sm:$0xf]
  %s1352 = scalar_lea.vmem %s0, 260
  %v1353 = vld [vmem:[%s1352] ss:$8 sm:$0xf0]
  %vm1354 = vcmask 1047556
  %v1355 = vsel %vm1354, %v1353, %v1351
  %1356 = vrot.lane.b32.xlu0 %v1355, 32
  %v1357 = vpop.permute.xlu0 %1356
  %vm1358 = vcmask 326912
  %s1359 = scalar_lea.vmem %s1, 32
  %1360 = vst.msk [vmem:[%s1359] sm:$0xff] %vm1358, %v1357
  %s1361 = scalar_lea.vmem %s0, 516
  %v1362 = vld [vmem:[%s1361] ss:$8 sm:$0xf]
  %s1363 = scalar_lea.vmem %s0, 516
  %v1364 = vld [vmem:[%s1363] ss:$8 sm:$0xf0]
  %vm1365 = vcmask 1047556
  %v1366 = vsel %vm1365, %v1364, %v1362
  %1367 = vrot.lane.b32.xlu0 %v1366, 32
  %v1368 = vpop.permute.xlu0 %1367
  %vm1369 = vcmask 326912
  %s1370 = scalar_lea.vmem %s1, 64
  %1371 = vst.msk [vmem:[%s1370] sm:$0xff] %vm1369, %v1368
  %s1372 = scalar_lea.vmem %s0, 772
  %v1373 = vld [vmem:[%s1372] ss:$8 sm:$0xf]
  %s1374 = scalar_lea.vmem %s0, 772
  %v1375 = vld [vmem:[%s1374] ss:$8 sm:$0xf0]
  %vm1376 = vcmask 1047556
  %v1377 = vsel %vm1376, %v1375, %v1373
  %1378 = vrot.lane.b32.xlu0 %v1377, 32
  %v1379 = vpop.permute.xlu0 %1378
  %vm1380 = vcmask 326912
  %s1381 = scalar_lea.vmem %s1, 96
  %1382 = vst.msk [vmem:[%s1381] sm:$0xff] %vm1380, %v1379
  %s1383 = scalar_lea.vmem %s0, 1028
  %v1384 = vld [vmem:[%s1383] ss:$8 sm:$0xf]
  %s1385 = scalar_lea.vmem %s0, 1028
  %v1386 = vld [vmem:[%s1385] ss:$8 sm:$0xf0]
  %vm1387 = vcmask 1047556
  %v1388 = vsel %vm1387, %v1386, %v1384
  %1389 = vrot.lane.b32.xlu0 %v1388, 32
  %v1390 = vpop.permute.xlu0 %1389
  %vm1391 = vcmask 326912
  %s1392 = scalar_lea.vmem %s1, 128
  %1393 = vst.msk [vmem:[%s1392] sm:$0xff] %vm1391, %v1390
  %s1394 = scalar_lea.vmem %s0, 1284
  %v1395 = vld [vmem:[%s1394] ss:$8 sm:$0xf]
  %s1396 = scalar_lea.vmem %s0, 1284
  %v1397 = vld [vmem:[%s1396] ss:$8 sm:$0xf0]
  %vm1398 = vcmask 1047556
  %v1399 = vsel %vm1398, %v1397, %v1395
  %1400 = vrot.lane.b32.xlu0 %v1399, 32
  %v1401 = vpop.permute.xlu0 %1400
  %vm1402 = vcmask 326912
  %s1403 = scalar_lea.vmem %s1, 160
  %1404 = vst.msk [vmem:[%s1403] sm:$0xff] %vm1402, %v1401
  %s1405 = scalar_lea.vmem %s0, 1540
  %v1406 = vld [vmem:[%s1405] ss:$8 sm:$0xf]
  %s1407 = scalar_lea.vmem %s0, 1540
  %v1408 = vld [vmem:[%s1407] ss:$8 sm:$0xf0]
  %vm1409 = vcmask 1047556
  %v1410 = vsel %vm1409, %v1408, %v1406
  %1411 = vrot.lane.b32.xlu0 %v1410, 32
  %v1412 = vpop.permute.xlu0 %1411
  %vm1413 = vcmask 326912
  %s1414 = scalar_lea.vmem %s1, 192
  %1415 = vst.msk [vmem:[%s1414] sm:$0xff] %vm1413, %v1412
  %s1416 = scalar_lea.vmem %s0, 1796
  %v1417 = vld [vmem:[%s1416] ss:$8 sm:$0xf]
  %s1418 = scalar_lea.vmem %s0, 1796
  %v1419 = vld [vmem:[%s1418] ss:$8 sm:$0xf0]
  %vm1420 = vcmask 1047556
  %v1421 = vsel %vm1420, %v1419, %v1417
  %1422 = vrot.lane.b32.xlu0 %v1421, 32
  %v1423 = vpop.permute.xlu0 %1422
  %vm1424 = vcmask 326912
  %s1425 = scalar_lea.vmem %s1, 224
  %1426 = vst.msk [vmem:[%s1425] sm:$0xff] %vm1424, %v1423
  %s1427 = scalar_lea.vmem %s0, 68
  %v1428 = vld [vmem:[%s1427] ss:$8 sm:$0xf]
  %s1429 = scalar_lea.vmem %s0, 68
  %v1430 = vld [vmem:[%s1429] ss:$8 sm:$0xf0]
  %vm1431 = vcmask 1047556
  %v1432 = vsel %vm1431, %v1430, %v1428
  %1433 = vrot.lane.b32.xlu0 %v1432, 32
  %v1434 = vpop.permute.xlu0 %1433
  %vm1435 = vcmask 326912
  %s1436 = scalar_lea.vmem %s1, 8
  %1437 = vst.msk [vmem:[%s1436] sm:$0xff] %vm1435, %v1434
  %s1438 = scalar_lea.vmem %s0, 324
  %v1439 = vld [vmem:[%s1438] ss:$8 sm:$0xf]
  %s1440 = scalar_lea.vmem %s0, 324
  %v1441 = vld [vmem:[%s1440] ss:$8 sm:$0xf0]
  %vm1442 = vcmask 1047556
  %v1443 = vsel %vm1442, %v1441, %v1439
  %1444 = vrot.lane.b32.xlu0 %v1443, 32
  %v1445 = vpop.permute.xlu0 %1444
  %vm1446 = vcmask 326912
  %s1447 = scalar_lea.vmem %s1, 40
  %1448 = vst.msk [vmem:[%s1447] sm:$0xff] %vm1446, %v1445
  %s1449 = scalar_lea.vmem %s0, 580
  %v1450 = vld [vmem:[%s1449] ss:$8 sm:$0xf]
  %s1451 = scalar_lea.vmem %s0, 580
  %v1452 = vld [vmem:[%s1451] ss:$8 sm:$0xf0]
  %vm1453 = vcmask 1047556
  %v1454 = vsel %vm1453, %v1452, %v1450
  %1455 = vrot.lane.b32.xlu0 %v1454, 32
  %v1456 = vpop.permute.xlu0 %1455
  %vm1457 = vcmask 326912
  %s1458 = scalar_lea.vmem %s1, 72
  %1459 = vst.msk [vmem:[%s1458] sm:$0xff] %vm1457, %v1456
  %s1460 = scalar_lea.vmem %s0, 836
  %v1461 = vld [vmem:[%s1460] ss:$8 sm:$0xf]
  %s1462 = scalar_lea.vmem %s0, 836
  %v1463 = vld [vmem:[%s1462] ss:$8 sm:$0xf0]
  %vm1464 = vcmask 1047556
  %v1465 = vsel %vm1464, %v1463, %v1461
  %1466 = vrot.lane.b32.xlu0 %v1465, 32
  %v1467 = vpop.permute.xlu0 %1466
  %vm1468 = vcmask 326912
  %s1469 = scalar_lea.vmem %s1, 104
  %1470 = vst.msk [vmem:[%s1469] sm:$0xff] %vm1468, %v1467
  %s1471 = scalar_lea.vmem %s0, 1092
  %v1472 = vld [vmem:[%s1471] ss:$8 sm:$0xf]
  %s1473 = scalar_lea.vmem %s0, 1092
  %v1474 = vld [vmem:[%s1473] ss:$8 sm:$0xf0]
  %vm1475 = vcmask 1047556
  %v1476 = vsel %vm1475, %v1474, %v1472
  %1477 = vrot.lane.b32.xlu0 %v1476, 32
  %v1478 = vpop.permute.xlu0 %1477
  %vm1479 = vcmask 326912
  %s1480 = scalar_lea.vmem %s1, 136
  %1481 = vst.msk [vmem:[%s1480] sm:$0xff] %vm1479, %v1478
  %s1482 = scalar_lea.vmem %s0, 1348
  %v1483 = vld [vmem:[%s1482] ss:$8 sm:$0xf]
  %s1484 = scalar_lea.vmem %s0, 1348
  %v1485 = vld [vmem:[%s1484] ss:$8 sm:$0xf0]
  %vm1486 = vcmask 1047556
  %v1487 = vsel %vm1486, %v1485, %v1483
  %1488 = vrot.lane.b32.xlu0 %v1487, 32
  %v1489 = vpop.permute.xlu0 %1488
  %vm1490 = vcmask 326912
  %s1491 = scalar_lea.vmem %s1, 168
  %1492 = vst.msk [vmem:[%s1491] sm:$0xff] %vm1490, %v1489
  %s1493 = scalar_lea.vmem %s0, 1604
  %v1494 = vld [vmem:[%s1493] ss:$8 sm:$0xf]
  %s1495 = scalar_lea.vmem %s0, 1604
  %v1496 = vld [vmem:[%s1495] ss:$8 sm:$0xf0]
  %vm1497 = vcmask 1047556
  %v1498 = vsel %vm1497, %v1496, %v1494
  %1499 = vrot.lane.b32.xlu0 %v1498, 32
  %v1500 = vpop.permute.xlu0 %1499
  %vm1501 = vcmask 326912
  %s1502 = scalar_lea.vmem %s1, 200
  %1503 = vst.msk [vmem:[%s1502] sm:$0xff] %vm1501, %v1500
  %s1504 = scalar_lea.vmem %s0, 1860
  %v1505 = vld [vmem:[%s1504] ss:$8 sm:$0xf]
  %s1506 = scalar_lea.vmem %s0, 1860
  %v1507 = vld [vmem:[%s1506] ss:$8 sm:$0xf0]
  %vm1508 = vcmask 1047556
  %v1509 = vsel %vm1508, %v1507, %v1505
  %1510 = vrot.lane.b32.xlu0 %v1509, 32
  %v1511 = vpop.permute.xlu0 %1510
  %vm1512 = vcmask 326912
  %s1513 = scalar_lea.vmem %s1, 232
  %1514 = vst.msk [vmem:[%s1513] sm:$0xff] %vm1512, %v1511
  %s1515 = scalar_lea.vmem %s0, 132
  %v1516 = vld [vmem:[%s1515] ss:$8 sm:$0xf]
  %s1517 = scalar_lea.vmem %s0, 132
  %v1518 = vld [vmem:[%s1517] ss:$8 sm:$0xf0]
  %vm1519 = vcmask 1047556
  %v1520 = vsel %vm1519, %v1518, %v1516
  %1521 = vrot.lane.b32.xlu0 %v1520, 32
  %v1522 = vpop.permute.xlu0 %1521
  %vm1523 = vcmask 326912
  %s1524 = scalar_lea.vmem %s1, 16
  %1525 = vst.msk [vmem:[%s1524] sm:$0xff] %vm1523, %v1522
  %s1526 = scalar_lea.vmem %s0, 388
  %v1527 = vld [vmem:[%s1526] ss:$8 sm:$0xf]
  %s1528 = scalar_lea.vmem %s0, 388
  %v1529 = vld [vmem:[%s1528] ss:$8 sm:$0xf0]
  %vm1530 = vcmask 1047556
  %v1531 = vsel %vm1530, %v1529, %v1527
  %1532 = vrot.lane.b32.xlu0 %v1531, 32
  %v1533 = vpop.permute.xlu0 %1532
  %vm1534 = vcmask 326912
  %s1535 = scalar_lea.vmem %s1, 48
  %1536 = vst.msk [vmem:[%s1535] sm:$0xff] %vm1534, %v1533
  %s1537 = scalar_lea.vmem %s0, 644
  %v1538 = vld [vmem:[%s1537] ss:$8 sm:$0xf]
  %s1539 = scalar_lea.vmem %s0, 644
  %v1540 = vld [vmem:[%s1539] ss:$8 sm:$0xf0]
  %vm1541 = vcmask 1047556
  %v1542 = vsel %vm1541, %v1540, %v1538
  %1543 = vrot.lane.b32.xlu0 %v1542, 32
  %v1544 = vpop.permute.xlu0 %1543
  %vm1545 = vcmask 326912
  %s1546 = scalar_lea.vmem %s1, 80
  %1547 = vst.msk [vmem:[%s1546] sm:$0xff] %vm1545, %v1544
  %s1548 = scalar_lea.vmem %s0, 900
  %v1549 = vld [vmem:[%s1548] ss:$8 sm:$0xf]
  %s1550 = scalar_lea.vmem %s0, 900
  %v1551 = vld [vmem:[%s1550] ss:$8 sm:$0xf0]
  %vm1552 = vcmask 1047556
  %v1553 = vsel %vm1552, %v1551, %v1549
  %1554 = vrot.lane.b32.xlu0 %v1553, 32
  %v1555 = vpop.permute.xlu0 %1554
  %vm1556 = vcmask 326912
  %s1557 = scalar_lea.vmem %s1, 112
  %1558 = vst.msk [vmem:[%s1557] sm:$0xff] %vm1556, %v1555
  %s1559 = scalar_lea.vmem %s0, 1156
  %v1560 = vld [vmem:[%s1559] ss:$8 sm:$0xf]
  %s1561 = scalar_lea.vmem %s0, 1156
  %v1562 = vld [vmem:[%s1561] ss:$8 sm:$0xf0]
  %vm1563 = vcmask 1047556
  %v1564 = vsel %vm1563, %v1562, %v1560
  %1565 = vrot.lane.b32.xlu0 %v1564, 32
  %v1566 = vpop.permute.xlu0 %1565
  %vm1567 = vcmask 326912
  %s1568 = scalar_lea.vmem %s1, 144
  %1569 = vst.msk [vmem:[%s1568] sm:$0xff] %vm1567, %v1566
  %s1570 = scalar_lea.vmem %s0, 1412
  %v1571 = vld [vmem:[%s1570] ss:$8 sm:$0xf]
  %s1572 = scalar_lea.vmem %s0, 1412
  %v1573 = vld [vmem:[%s1572] ss:$8 sm:$0xf0]
  %vm1574 = vcmask 1047556
  %v1575 = vsel %vm1574, %v1573, %v1571
  %1576 = vrot.lane.b32.xlu0 %v1575, 32
  %v1577 = vpop.permute.xlu0 %1576
  %vm1578 = vcmask 326912
  %s1579 = scalar_lea.vmem %s1, 176
  %1580 = vst.msk [vmem:[%s1579] sm:$0xff] %vm1578, %v1577
  %s1581 = scalar_lea.vmem %s0, 1668
  %v1582 = vld [vmem:[%s1581] ss:$8 sm:$0xf]
  %s1583 = scalar_lea.vmem %s0, 1668
  %v1584 = vld [vmem:[%s1583] ss:$8 sm:$0xf0]
  %vm1585 = vcmask 1047556
  %v1586 = vsel %vm1585, %v1584, %v1582
  %1587 = vrot.lane.b32.xlu0 %v1586, 32
  %v1588 = vpop.permute.xlu0 %1587
  %vm1589 = vcmask 326912
  %s1590 = scalar_lea.vmem %s1, 208
  %1591 = vst.msk [vmem:[%s1590] sm:$0xff] %vm1589, %v1588
  %s1592 = scalar_lea.vmem %s0, 1924
  %v1593 = vld [vmem:[%s1592] ss:$8 sm:$0xf]
  %s1594 = scalar_lea.vmem %s0, 1924
  %v1595 = vld [vmem:[%s1594] ss:$8 sm:$0xf0]
  %vm1596 = vcmask 1047556
  %v1597 = vsel %vm1596, %v1595, %v1593
  %1598 = vrot.lane.b32.xlu0 %v1597, 32
  %v1599 = vpop.permute.xlu0 %1598
  %vm1600 = vcmask 326912
  %s1601 = scalar_lea.vmem %s1, 240
  %1602 = vst.msk [vmem:[%s1601] sm:$0xff] %vm1600, %v1599
  %s1603 = scalar_lea.vmem %s0, 196
  %v1604 = vld [vmem:[%s1603] ss:$8 sm:$0xf]
  %s1605 = scalar_lea.vmem %s0, 196
  %v1606 = vld [vmem:[%s1605] ss:$8 sm:$0xf0]
  %vm1607 = vcmask 1047556
  %v1608 = vsel %vm1607, %v1606, %v1604
  %1609 = vrot.lane.b32.xlu0 %v1608, 32
  %v1610 = vpop.permute.xlu0 %1609
  %vm1611 = vcmask 326912
  %s1612 = scalar_lea.vmem %s1, 24
  %1613 = vst.msk [vmem:[%s1612] sm:$0xff] %vm1611, %v1610
  %s1614 = scalar_lea.vmem %s0, 452
  %v1615 = vld [vmem:[%s1614] ss:$8 sm:$0xf]
  %s1616 = scalar_lea.vmem %s0, 452
  %v1617 = vld [vmem:[%s1616] ss:$8 sm:$0xf0]
  %vm1618 = vcmask 1047556
  %v1619 = vsel %vm1618, %v1617, %v1615
  %1620 = vrot.lane.b32.xlu0 %v1619, 32
  %v1621 = vpop.permute.xlu0 %1620
  %vm1622 = vcmask 326912
  %s1623 = scalar_lea.vmem %s1, 56
  %1624 = vst.msk [vmem:[%s1623] sm:$0xff] %vm1622, %v1621
  %s1625 = scalar_lea.vmem %s0, 708
  %v1626 = vld [vmem:[%s1625] ss:$8 sm:$0xf]
  %s1627 = scalar_lea.vmem %s0, 708
  %v1628 = vld [vmem:[%s1627] ss:$8 sm:$0xf0]
  %vm1629 = vcmask 1047556
  %v1630 = vsel %vm1629, %v1628, %v1626
  %1631 = vrot.lane.b32.xlu0 %v1630, 32
  %v1632 = vpop.permute.xlu0 %1631
  %vm1633 = vcmask 326912
  %s1634 = scalar_lea.vmem %s1, 88
  %1635 = vst.msk [vmem:[%s1634] sm:$0xff] %vm1633, %v1632
  %s1636 = scalar_lea.vmem %s0, 964
  %v1637 = vld [vmem:[%s1636] ss:$8 sm:$0xf]
  %s1638 = scalar_lea.vmem %s0, 964
  %v1639 = vld [vmem:[%s1638] ss:$8 sm:$0xf0]
  %vm1640 = vcmask 1047556
  %v1641 = vsel %vm1640, %v1639, %v1637
  %1642 = vrot.lane.b32.xlu0 %v1641, 32
  %v1643 = vpop.permute.xlu0 %1642
  %vm1644 = vcmask 326912
  %s1645 = scalar_lea.vmem %s1, 120
  %1646 = vst.msk [vmem:[%s1645] sm:$0xff] %vm1644, %v1643
  %s1647 = scalar_lea.vmem %s0, 1220
  %v1648 = vld [vmem:[%s1647] ss:$8 sm:$0xf]
  %s1649 = scalar_lea.vmem %s0, 1220
  %v1650 = vld [vmem:[%s1649] ss:$8 sm:$0xf0]
  %vm1651 = vcmask 1047556
  %v1652 = vsel %vm1651, %v1650, %v1648
  %1653 = vrot.lane.b32.xlu0 %v1652, 32
  %v1654 = vpop.permute.xlu0 %1653
  %vm1655 = vcmask 326912
  %s1656 = scalar_lea.vmem %s1, 152
  %1657 = vst.msk [vmem:[%s1656] sm:$0xff] %vm1655, %v1654
  %s1658 = scalar_lea.vmem %s0, 1476
  %v1659 = vld [vmem:[%s1658] ss:$8 sm:$0xf]
  %s1660 = scalar_lea.vmem %s0, 1476
  %v1661 = vld [vmem:[%s1660] ss:$8 sm:$0xf0]
  %vm1662 = vcmask 1047556
  %v1663 = vsel %vm1662, %v1661, %v1659
  %1664 = vrot.lane.b32.xlu0 %v1663, 32
  %v1665 = vpop.permute.xlu0 %1664
  %vm1666 = vcmask 326912
  %s1667 = scalar_lea.vmem %s1, 184
  %1668 = vst.msk [vmem:[%s1667] sm:$0xff] %vm1666, %v1665
  %s1669 = scalar_lea.vmem %s0, 1732
  %v1670 = vld [vmem:[%s1669] ss:$8 sm:$0xf]
  %s1671 = scalar_lea.vmem %s0, 1732
  %v1672 = vld [vmem:[%s1671] ss:$8 sm:$0xf0]
  %vm1673 = vcmask 1047556
  %v1674 = vsel %vm1673, %v1672, %v1670
  %1675 = vrot.lane.b32.xlu0 %v1674, 32
  %v1676 = vpop.permute.xlu0 %1675
  %vm1677 = vcmask 326912
  %s1678 = scalar_lea.vmem %s1, 216
  %1679 = vst.msk [vmem:[%s1678] sm:$0xff] %vm1677, %v1676
  %s1680 = scalar_lea.vmem %s0, 1988
  %v1681 = vld [vmem:[%s1680] ss:$8 sm:$0xf]
  %s1682 = scalar_lea.vmem %s0, 1988
  %v1683 = vld [vmem:[%s1682] ss:$8 sm:$0xf0]
  %vm1684 = vcmask 1047556
  %v1685 = vsel %vm1684, %v1683, %v1681
  %1686 = vrot.lane.b32.xlu0 %v1685, 32
  %v1687 = vpop.permute.xlu0 %1686
  %vm1688 = vcmask 326912
  %s1689 = scalar_lea.vmem %s1, 248
  %1690 = vst.msk [vmem:[%s1689] sm:$0xff] %vm1688, %v1687
  %s1691 = scalar_lea.vmem %s0, 3
  %v1692 = vld [vmem:[%s1691] ss:$8 sm:$0xf]
  %s1693 = scalar_lea.vmem %s0, 3
  %v1694 = vld [vmem:[%s1693] ss:$8 sm:$0xf0]
  %vm1695 = vcmask 1047556
  %v1696 = vsel %vm1695, %v1694, %v1692
  %1697 = vrot.lane.b32.xlu0 %v1696, 24
  %v1698 = vpop.permute.xlu0 %1697
  %vm1699 = vcmask 261312
  %1700 = vst.msk [vmem:[%s1] sm:$0xff] %vm1699, %v1698
  %s1701 = scalar_lea.vmem %s0, 259
  %v1702 = vld [vmem:[%s1701] ss:$8 sm:$0xf]
  %s1703 = scalar_lea.vmem %s0, 259
  %v1704 = vld [vmem:[%s1703] ss:$8 sm:$0xf0]
  %vm1705 = vcmask 1047556
  %v1706 = vsel %vm1705, %v1704, %v1702
  %1707 = vrot.lane.b32.xlu0 %v1706, 24
  %v1708 = vpop.permute.xlu0 %1707
  %vm1709 = vcmask 261312
  %s1710 = scalar_lea.vmem %s1, 32
  %1711 = vst.msk [vmem:[%s1710] sm:$0xff] %vm1709, %v1708
  %s1712 = scalar_lea.vmem %s0, 515
  %v1713 = vld [vmem:[%s1712] ss:$8 sm:$0xf]
  %s1714 = scalar_lea.vmem %s0, 515
  %v1715 = vld [vmem:[%s1714] ss:$8 sm:$0xf0]
  %vm1716 = vcmask 1047556
  %v1717 = vsel %vm1716, %v1715, %v1713
  %1718 = vrot.lane.b32.xlu0 %v1717, 24
  %v1719 = vpop.permute.xlu0 %1718
  %vm1720 = vcmask 261312
  %s1721 = scalar_lea.vmem %s1, 64
  %1722 = vst.msk [vmem:[%s1721] sm:$0xff] %vm1720, %v1719
  %s1723 = scalar_lea.vmem %s0, 771
  %v1724 = vld [vmem:[%s1723] ss:$8 sm:$0xf]
  %s1725 = scalar_lea.vmem %s0, 771
  %v1726 = vld [vmem:[%s1725] ss:$8 sm:$0xf0]
  %vm1727 = vcmask 1047556
  %v1728 = vsel %vm1727, %v1726, %v1724
  %1729 = vrot.lane.b32.xlu0 %v1728, 24
  %v1730 = vpop.permute.xlu0 %1729
  %vm1731 = vcmask 261312
  %s1732 = scalar_lea.vmem %s1, 96
  %1733 = vst.msk [vmem:[%s1732] sm:$0xff] %vm1731, %v1730
  %s1734 = scalar_lea.vmem %s0, 1027
  %v1735 = vld [vmem:[%s1734] ss:$8 sm:$0xf]
  %s1736 = scalar_lea.vmem %s0, 1027
  %v1737 = vld [vmem:[%s1736] ss:$8 sm:$0xf0]
  %vm1738 = vcmask 1047556
  %v1739 = vsel %vm1738, %v1737, %v1735
  %1740 = vrot.lane.b32.xlu0 %v1739, 24
  %v1741 = vpop.permute.xlu0 %1740
  %vm1742 = vcmask 261312
  %s1743 = scalar_lea.vmem %s1, 128
  %1744 = vst.msk [vmem:[%s1743] sm:$0xff] %vm1742, %v1741
  %s1745 = scalar_lea.vmem %s0, 1283
  %v1746 = vld [vmem:[%s1745] ss:$8 sm:$0xf]
  %s1747 = scalar_lea.vmem %s0, 1283
  %v1748 = vld [vmem:[%s1747] ss:$8 sm:$0xf0]
  %vm1749 = vcmask 1047556
  %v1750 = vsel %vm1749, %v1748, %v1746
  %1751 = vrot.lane.b32.xlu0 %v1750, 24
  %v1752 = vpop.permute.xlu0 %1751
  %vm1753 = vcmask 261312
  %s1754 = scalar_lea.vmem %s1, 160
  %1755 = vst.msk [vmem:[%s1754] sm:$0xff] %vm1753, %v1752
  %s1756 = scalar_lea.vmem %s0, 1539
  %v1757 = vld [vmem:[%s1756] ss:$8 sm:$0xf]
  %s1758 = scalar_lea.vmem %s0, 1539
  %v1759 = vld [vmem:[%s1758] ss:$8 sm:$0xf0]
  %vm1760 = vcmask 1047556
  %v1761 = vsel %vm1760, %v1759, %v1757
  %1762 = vrot.lane.b32.xlu0 %v1761, 24
  %v1763 = vpop.permute.xlu0 %1762
  %vm1764 = vcmask 261312
  %s1765 = scalar_lea.vmem %s1, 192
  %1766 = vst.msk [vmem:[%s1765] sm:$0xff] %vm1764, %v1763
  %s1767 = scalar_lea.vmem %s0, 1795
  %v1768 = vld [vmem:[%s1767] ss:$8 sm:$0xf]
  %s1769 = scalar_lea.vmem %s0, 1795
  %v1770 = vld [vmem:[%s1769] ss:$8 sm:$0xf0]
  %vm1771 = vcmask 1047556
  %v1772 = vsel %vm1771, %v1770, %v1768
  %1773 = vrot.lane.b32.xlu0 %v1772, 24
  %v1774 = vpop.permute.xlu0 %1773
  %vm1775 = vcmask 261312
  %s1776 = scalar_lea.vmem %s1, 224
  %1777 = vst.msk [vmem:[%s1776] sm:$0xff] %vm1775, %v1774
  %s1778 = scalar_lea.vmem %s0, 67
  %v1779 = vld [vmem:[%s1778] ss:$8 sm:$0xf]
  %s1780 = scalar_lea.vmem %s0, 67
  %v1781 = vld [vmem:[%s1780] ss:$8 sm:$0xf0]
  %vm1782 = vcmask 1047556
  %v1783 = vsel %vm1782, %v1781, %v1779
  %1784 = vrot.lane.b32.xlu0 %v1783, 24
  %v1785 = vpop.permute.xlu0 %1784
  %vm1786 = vcmask 261312
  %s1787 = scalar_lea.vmem %s1, 8
  %1788 = vst.msk [vmem:[%s1787] sm:$0xff] %vm1786, %v1785
  %s1789 = scalar_lea.vmem %s0, 323
  %v1790 = vld [vmem:[%s1789] ss:$8 sm:$0xf]
  %s1791 = scalar_lea.vmem %s0, 323
  %v1792 = vld [vmem:[%s1791] ss:$8 sm:$0xf0]
  %vm1793 = vcmask 1047556
  %v1794 = vsel %vm1793, %v1792, %v1790
  %1795 = vrot.lane.b32.xlu0 %v1794, 24
  %v1796 = vpop.permute.xlu0 %1795
  %vm1797 = vcmask 261312
  %s1798 = scalar_lea.vmem %s1, 40
  %1799 = vst.msk [vmem:[%s1798] sm:$0xff] %vm1797, %v1796
  %s1800 = scalar_lea.vmem %s0, 579
  %v1801 = vld [vmem:[%s1800] ss:$8 sm:$0xf]
  %s1802 = scalar_lea.vmem %s0, 579
  %v1803 = vld [vmem:[%s1802] ss:$8 sm:$0xf0]
  %vm1804 = vcmask 1047556
  %v1805 = vsel %vm1804, %v1803, %v1801
  %1806 = vrot.lane.b32.xlu0 %v1805, 24
  %v1807 = vpop.permute.xlu0 %1806
  %vm1808 = vcmask 261312
  %s1809 = scalar_lea.vmem %s1, 72
  %1810 = vst.msk [vmem:[%s1809] sm:$0xff] %vm1808, %v1807
  %s1811 = scalar_lea.vmem %s0, 835
  %v1812 = vld [vmem:[%s1811] ss:$8 sm:$0xf]
  %s1813 = scalar_lea.vmem %s0, 835
  %v1814 = vld [vmem:[%s1813] ss:$8 sm:$0xf0]
  %vm1815 = vcmask 1047556
  %v1816 = vsel %vm1815, %v1814, %v1812
  %1817 = vrot.lane.b32.xlu0 %v1816, 24
  %v1818 = vpop.permute.xlu0 %1817
  %vm1819 = vcmask 261312
  %s1820 = scalar_lea.vmem %s1, 104
  %1821 = vst.msk [vmem:[%s1820] sm:$0xff] %vm1819, %v1818
  %s1822 = scalar_lea.vmem %s0, 1091
  %v1823 = vld [vmem:[%s1822] ss:$8 sm:$0xf]
  %s1824 = scalar_lea.vmem %s0, 1091
  %v1825 = vld [vmem:[%s1824] ss:$8 sm:$0xf0]
  %vm1826 = vcmask 1047556
  %v1827 = vsel %vm1826, %v1825, %v1823
  %1828 = vrot.lane.b32.xlu0 %v1827, 24
  %v1829 = vpop.permute.xlu0 %1828
  %vm1830 = vcmask 261312
  %s1831 = scalar_lea.vmem %s1, 136
  %1832 = vst.msk [vmem:[%s1831] sm:$0xff] %vm1830, %v1829
  %s1833 = scalar_lea.vmem %s0, 1347
  %v1834 = vld [vmem:[%s1833] ss:$8 sm:$0xf]
  %s1835 = scalar_lea.vmem %s0, 1347
  %v1836 = vld [vmem:[%s1835] ss:$8 sm:$0xf0]
  %vm1837 = vcmask 1047556
  %v1838 = vsel %vm1837, %v1836, %v1834
  %1839 = vrot.lane.b32.xlu0 %v1838, 24
  %v1840 = vpop.permute.xlu0 %1839
  %vm1841 = vcmask 261312
  %s1842 = scalar_lea.vmem %s1, 168
  %1843 = vst.msk [vmem:[%s1842] sm:$0xff] %vm1841, %v1840
  %s1844 = scalar_lea.vmem %s0, 1603
  %v1845 = vld [vmem:[%s1844] ss:$8 sm:$0xf]
  %s1846 = scalar_lea.vmem %s0, 1603
  %v1847 = vld [vmem:[%s1846] ss:$8 sm:$0xf0]
  %vm1848 = vcmask 1047556
  %v1849 = vsel %vm1848, %v1847, %v1845
  %1850 = vrot.lane.b32.xlu0 %v1849, 24
  %v1851 = vpop.permute.xlu0 %1850
  %vm1852 = vcmask 261312
  %s1853 = scalar_lea.vmem %s1, 200
  %1854 = vst.msk [vmem:[%s1853] sm:$0xff] %vm1852, %v1851
  %s1855 = scalar_lea.vmem %s0, 1859
  %v1856 = vld [vmem:[%s1855] ss:$8 sm:$0xf]
  %s1857 = scalar_lea.vmem %s0, 1859
  %v1858 = vld [vmem:[%s1857] ss:$8 sm:$0xf0]
  %vm1859 = vcmask 1047556
  %v1860 = vsel %vm1859, %v1858, %v1856
  %1861 = vrot.lane.b32.xlu0 %v1860, 24
  %v1862 = vpop.permute.xlu0 %1861
  %vm1863 = vcmask 261312
  %s1864 = scalar_lea.vmem %s1, 232
  %1865 = vst.msk [vmem:[%s1864] sm:$0xff] %vm1863, %v1862
  %s1866 = scalar_lea.vmem %s0, 131
  %v1867 = vld [vmem:[%s1866] ss:$8 sm:$0xf]
  %s1868 = scalar_lea.vmem %s0, 131
  %v1869 = vld [vmem:[%s1868] ss:$8 sm:$0xf0]
  %vm1870 = vcmask 1047556
  %v1871 = vsel %vm1870, %v1869, %v1867
  %1872 = vrot.lane.b32.xlu0 %v1871, 24
  %v1873 = vpop.permute.xlu0 %1872
  %vm1874 = vcmask 261312
  %s1875 = scalar_lea.vmem %s1, 16
  %1876 = vst.msk [vmem:[%s1875] sm:$0xff] %vm1874, %v1873
  %s1877 = scalar_lea.vmem %s0, 387
  %v1878 = vld [vmem:[%s1877] ss:$8 sm:$0xf]
  %s1879 = scalar_lea.vmem %s0, 387
  %v1880 = vld [vmem:[%s1879] ss:$8 sm:$0xf0]
  %vm1881 = vcmask 1047556
  %v1882 = vsel %vm1881, %v1880, %v1878
  %1883 = vrot.lane.b32.xlu0 %v1882, 24
  %v1884 = vpop.permute.xlu0 %1883
  %vm1885 = vcmask 261312
  %s1886 = scalar_lea.vmem %s1, 48
  %1887 = vst.msk [vmem:[%s1886] sm:$0xff] %vm1885, %v1884
  %s1888 = scalar_lea.vmem %s0, 643
  %v1889 = vld [vmem:[%s1888] ss:$8 sm:$0xf]
  %s1890 = scalar_lea.vmem %s0, 643
  %v1891 = vld [vmem:[%s1890] ss:$8 sm:$0xf0]
  %vm1892 = vcmask 1047556
  %v1893 = vsel %vm1892, %v1891, %v1889
  %1894 = vrot.lane.b32.xlu0 %v1893, 24
  %v1895 = vpop.permute.xlu0 %1894
  %vm1896 = vcmask 261312
  %s1897 = scalar_lea.vmem %s1, 80
  %1898 = vst.msk [vmem:[%s1897] sm:$0xff] %vm1896, %v1895
  %s1899 = scalar_lea.vmem %s0, 899
  %v1900 = vld [vmem:[%s1899] ss:$8 sm:$0xf]
  %s1901 = scalar_lea.vmem %s0, 899
  %v1902 = vld [vmem:[%s1901] ss:$8 sm:$0xf0]
  %vm1903 = vcmask 1047556
  %v1904 = vsel %vm1903, %v1902, %v1900
  %1905 = vrot.lane.b32.xlu0 %v1904, 24
  %v1906 = vpop.permute.xlu0 %1905
  %vm1907 = vcmask 261312
  %s1908 = scalar_lea.vmem %s1, 112
  %1909 = vst.msk [vmem:[%s1908] sm:$0xff] %vm1907, %v1906
  %s1910 = scalar_lea.vmem %s0, 1155
  %v1911 = vld [vmem:[%s1910] ss:$8 sm:$0xf]
  %s1912 = scalar_lea.vmem %s0, 1155
  %v1913 = vld [vmem:[%s1912] ss:$8 sm:$0xf0]
  %vm1914 = vcmask 1047556
  %v1915 = vsel %vm1914, %v1913, %v1911
  %1916 = vrot.lane.b32.xlu0 %v1915, 24
  %v1917 = vpop.permute.xlu0 %1916
  %vm1918 = vcmask 261312
  %s1919 = scalar_lea.vmem %s1, 144
  %1920 = vst.msk [vmem:[%s1919] sm:$0xff] %vm1918, %v1917
  %s1921 = scalar_lea.vmem %s0, 1411
  %v1922 = vld [vmem:[%s1921] ss:$8 sm:$0xf]
  %s1923 = scalar_lea.vmem %s0, 1411
  %v1924 = vld [vmem:[%s1923] ss:$8 sm:$0xf0]
  %vm1925 = vcmask 1047556
  %v1926 = vsel %vm1925, %v1924, %v1922
  %1927 = vrot.lane.b32.xlu0 %v1926, 24
  %v1928 = vpop.permute.xlu0 %1927
  %vm1929 = vcmask 261312
  %s1930 = scalar_lea.vmem %s1, 176
  %1931 = vst.msk [vmem:[%s1930] sm:$0xff] %vm1929, %v1928
  %s1932 = scalar_lea.vmem %s0, 1667
  %v1933 = vld [vmem:[%s1932] ss:$8 sm:$0xf]
  %s1934 = scalar_lea.vmem %s0, 1667
  %v1935 = vld [vmem:[%s1934] ss:$8 sm:$0xf0]
  %vm1936 = vcmask 1047556
  %v1937 = vsel %vm1936, %v1935, %v1933
  %1938 = vrot.lane.b32.xlu0 %v1937, 24
  %v1939 = vpop.permute.xlu0 %1938
  %vm1940 = vcmask 261312
  %s1941 = scalar_lea.vmem %s1, 208
  %1942 = vst.msk [vmem:[%s1941] sm:$0xff] %vm1940, %v1939
  %s1943 = scalar_lea.vmem %s0, 1923
  %v1944 = vld [vmem:[%s1943] ss:$8 sm:$0xf]
  %s1945 = scalar_lea.vmem %s0, 1923
  %v1946 = vld [vmem:[%s1945] ss:$8 sm:$0xf0]
  %vm1947 = vcmask 1047556
  %v1948 = vsel %vm1947, %v1946, %v1944
  %1949 = vrot.lane.b32.xlu0 %v1948, 24
  %v1950 = vpop.permute.xlu0 %1949
  %vm1951 = vcmask 261312
  %s1952 = scalar_lea.vmem %s1, 240
  %1953 = vst.msk [vmem:[%s1952] sm:$0xff] %vm1951, %v1950
  %s1954 = scalar_lea.vmem %s0, 195
  %v1955 = vld [vmem:[%s1954] ss:$8 sm:$0xf]
  %s1956 = scalar_lea.vmem %s0, 195
  %v1957 = vld [vmem:[%s1956] ss:$8 sm:$0xf0]
  %vm1958 = vcmask 1047556
  %v1959 = vsel %vm1958, %v1957, %v1955
  %1960 = vrot.lane.b32.xlu0 %v1959, 24
  %v1961 = vpop.permute.xlu0 %1960
  %vm1962 = vcmask 261312
  %s1963 = scalar_lea.vmem %s1, 24
  %1964 = vst.msk [vmem:[%s1963] sm:$0xff] %vm1962, %v1961
  %s1965 = scalar_lea.vmem %s0, 451
  %v1966 = vld [vmem:[%s1965] ss:$8 sm:$0xf]
  %s1967 = scalar_lea.vmem %s0, 451
  %v1968 = vld [vmem:[%s1967] ss:$8 sm:$0xf0]
  %vm1969 = vcmask 1047556
  %v1970 = vsel %vm1969, %v1968, %v1966
  %1971 = vrot.lane.b32.xlu0 %v1970, 24
  %v1972 = vpop.permute.xlu0 %1971
  %vm1973 = vcmask 261312
  %s1974 = scalar_lea.vmem %s1, 56
  %1975 = vst.msk [vmem:[%s1974] sm:$0xff] %vm1973, %v1972
  %s1976 = scalar_lea.vmem %s0, 707
  %v1977 = vld [vmem:[%s1976] ss:$8 sm:$0xf]
  %s1978 = scalar_lea.vmem %s0, 707
  %v1979 = vld [vmem:[%s1978] ss:$8 sm:$0xf0]
  %vm1980 = vcmask 1047556
  %v1981 = vsel %vm1980, %v1979, %v1977
  %1982 = vrot.lane.b32.xlu0 %v1981, 24
  %v1983 = vpop.permute.xlu0 %1982
  %vm1984 = vcmask 261312
  %s1985 = scalar_lea.vmem %s1, 88
  %1986 = vst.msk [vmem:[%s1985] sm:$0xff] %vm1984, %v1983
  %s1987 = scalar_lea.vmem %s0, 963
  %v1988 = vld [vmem:[%s1987] ss:$8 sm:$0xf]
  %s1989 = scalar_lea.vmem %s0, 963
  %v1990 = vld [vmem:[%s1989] ss:$8 sm:$0xf0]
  %vm1991 = vcmask 1047556
  %v1992 = vsel %vm1991, %v1990, %v1988
  %1993 = vrot.lane.b32.xlu0 %v1992, 24
  %v1994 = vpop.permute.xlu0 %1993
  %vm1995 = vcmask 261312
  %s1996 = scalar_lea.vmem %s1, 120
  %1997 = vst.msk [vmem:[%s1996] sm:$0xff] %vm1995, %v1994
  %s1998 = scalar_lea.vmem %s0, 1219
  %v1999 = vld [vmem:[%s1998] ss:$8 sm:$0xf]
  %s2000 = scalar_lea.vmem %s0, 1219
  %v2001 = vld [vmem:[%s2000] ss:$8 sm:$0xf0]
  %vm2002 = vcmask 1047556
  %v2003 = vsel %vm2002, %v2001, %v1999
  %2004 = vrot.lane.b32.xlu0 %v2003, 24
  %v2005 = vpop.permute.xlu0 %2004
  %vm2006 = vcmask 261312
  %s2007 = scalar_lea.vmem %s1, 152
  %2008 = vst.msk [vmem:[%s2007] sm:$0xff] %vm2006, %v2005
  %s2009 = scalar_lea.vmem %s0, 1475
  %v2010 = vld [vmem:[%s2009] ss:$8 sm:$0xf]
  %s2011 = scalar_lea.vmem %s0, 1475
  %v2012 = vld [vmem:[%s2011] ss:$8 sm:$0xf0]
  %vm2013 = vcmask 1047556
  %v2014 = vsel %vm2013, %v2012, %v2010
  %2015 = vrot.lane.b32.xlu0 %v2014, 24
  %v2016 = vpop.permute.xlu0 %2015
  %vm2017 = vcmask 261312
  %s2018 = scalar_lea.vmem %s1, 184
  %2019 = vst.msk [vmem:[%s2018] sm:$0xff] %vm2017, %v2016
  %s2020 = scalar_lea.vmem %s0, 1731
  %v2021 = vld [vmem:[%s2020] ss:$8 sm:$0xf]
  %s2022 = scalar_lea.vmem %s0, 1731
  %v2023 = vld [vmem:[%s2022] ss:$8 sm:$0xf0]
  %vm2024 = vcmask 1047556
  %v2025 = vsel %vm2024, %v2023, %v2021
  %2026 = vrot.lane.b32.xlu0 %v2025, 24
  %v2027 = vpop.permute.xlu0 %2026
  %vm2028 = vcmask 261312
  %s2029 = scalar_lea.vmem %s1, 216
  %2030 = vst.msk [vmem:[%s2029] sm:$0xff] %vm2028, %v2027
  %s2031 = scalar_lea.vmem %s0, 1987
  %v2032 = vld [vmem:[%s2031] ss:$8 sm:$0xf]
  %s2033 = scalar_lea.vmem %s0, 1987
  %v2034 = vld [vmem:[%s2033] ss:$8 sm:$0xf0]
  %vm2035 = vcmask 1047556
  %v2036 = vsel %vm2035, %v2034, %v2032
  %2037 = vrot.lane.b32.xlu0 %v2036, 24
  %v2038 = vpop.permute.xlu0 %2037
  %vm2039 = vcmask 261312
  %s2040 = scalar_lea.vmem %s1, 248
  %2041 = vst.msk [vmem:[%s2040] sm:$0xff] %vm2039, %v2038
  %s2042 = scalar_lea.vmem %s0, 2
  %v2043 = vld [vmem:[%s2042] ss:$8 sm:$0xf]
  %s2044 = scalar_lea.vmem %s0, 2
  %v2045 = vld [vmem:[%s2044] ss:$8 sm:$0xf0]
  %vm2046 = vcmask 1047556
  %v2047 = vsel %vm2046, %v2045, %v2043
  %2048 = vrot.lane.b32.xlu0 %v2047, 16
  %v2049 = vpop.permute.xlu0 %2048
  %vm2050 = vcmask 195712
  %2051 = vst.msk [vmem:[%s1] sm:$0xff] %vm2050, %v2049
  %s2052 = scalar_lea.vmem %s0, 258
  %v2053 = vld [vmem:[%s2052] ss:$8 sm:$0xf]
  %s2054 = scalar_lea.vmem %s0, 258
  %v2055 = vld [vmem:[%s2054] ss:$8 sm:$0xf0]
  %vm2056 = vcmask 1047556
  %v2057 = vsel %vm2056, %v2055, %v2053
  %2058 = vrot.lane.b32.xlu0 %v2057, 16
  %v2059 = vpop.permute.xlu0 %2058
  %vm2060 = vcmask 195712
  %s2061 = scalar_lea.vmem %s1, 32
  %2062 = vst.msk [vmem:[%s2061] sm:$0xff] %vm2060, %v2059
  %s2063 = scalar_lea.vmem %s0, 514
  %v2064 = vld [vmem:[%s2063] ss:$8 sm:$0xf]
  %s2065 = scalar_lea.vmem %s0, 514
  %v2066 = vld [vmem:[%s2065] ss:$8 sm:$0xf0]
  %vm2067 = vcmask 1047556
  %v2068 = vsel %vm2067, %v2066, %v2064
  %2069 = vrot.lane.b32.xlu0 %v2068, 16
  %v2070 = vpop.permute.xlu0 %2069
  %vm2071 = vcmask 195712
  %s2072 = scalar_lea.vmem %s1, 64
  %2073 = vst.msk [vmem:[%s2072] sm:$0xff] %vm2071, %v2070
  %s2074 = scalar_lea.vmem %s0, 770
  %v2075 = vld [vmem:[%s2074] ss:$8 sm:$0xf]
  %s2076 = scalar_lea.vmem %s0, 770
  %v2077 = vld [vmem:[%s2076] ss:$8 sm:$0xf0]
  %vm2078 = vcmask 1047556
  %v2079 = vsel %vm2078, %v2077, %v2075
  %2080 = vrot.lane.b32.xlu0 %v2079, 16
  %v2081 = vpop.permute.xlu0 %2080
  %vm2082 = vcmask 195712
  %s2083 = scalar_lea.vmem %s1, 96
  %2084 = vst.msk [vmem:[%s2083] sm:$0xff] %vm2082, %v2081
  %s2085 = scalar_lea.vmem %s0, 1026
  %v2086 = vld [vmem:[%s2085] ss:$8 sm:$0xf]
  %s2087 = scalar_lea.vmem %s0, 1026
  %v2088 = vld [vmem:[%s2087] ss:$8 sm:$0xf0]
  %vm2089 = vcmask 1047556
  %v2090 = vsel %vm2089, %v2088, %v2086
  %2091 = vrot.lane.b32.xlu0 %v2090, 16
  %v2092 = vpop.permute.xlu0 %2091
  %vm2093 = vcmask 195712
  %s2094 = scalar_lea.vmem %s1, 128
  %2095 = vst.msk [vmem:[%s2094] sm:$0xff] %vm2093, %v2092
  %s2096 = scalar_lea.vmem %s0, 1282
  %v2097 = vld [vmem:[%s2096] ss:$8 sm:$0xf]
  %s2098 = scalar_lea.vmem %s0, 1282
  %v2099 = vld [vmem:[%s2098] ss:$8 sm:$0xf0]
  %vm2100 = vcmask 1047556
  %v2101 = vsel %vm2100, %v2099, %v2097
  %2102 = vrot.lane.b32.xlu0 %v2101, 16
  %v2103 = vpop.permute.xlu0 %2102
  %vm2104 = vcmask 195712
  %s2105 = scalar_lea.vmem %s1, 160
  %2106 = vst.msk [vmem:[%s2105] sm:$0xff] %vm2104, %v2103
  %s2107 = scalar_lea.vmem %s0, 1538
  %v2108 = vld [vmem:[%s2107] ss:$8 sm:$0xf]
  %s2109 = scalar_lea.vmem %s0, 1538
  %v2110 = vld [vmem:[%s2109] ss:$8 sm:$0xf0]
  %vm2111 = vcmask 1047556
  %v2112 = vsel %vm2111, %v2110, %v2108
  %2113 = vrot.lane.b32.xlu0 %v2112, 16
  %v2114 = vpop.permute.xlu0 %2113
  %vm2115 = vcmask 195712
  %s2116 = scalar_lea.vmem %s1, 192
  %2117 = vst.msk [vmem:[%s2116] sm:$0xff] %vm2115, %v2114
  %s2118 = scalar_lea.vmem %s0, 1794
  %v2119 = vld [vmem:[%s2118] ss:$8 sm:$0xf]
  %s2120 = scalar_lea.vmem %s0, 1794
  %v2121 = vld [vmem:[%s2120] ss:$8 sm:$0xf0]
  %vm2122 = vcmask 1047556
  %v2123 = vsel %vm2122, %v2121, %v2119
  %2124 = vrot.lane.b32.xlu0 %v2123, 16
  %v2125 = vpop.permute.xlu0 %2124
  %vm2126 = vcmask 195712
  %s2127 = scalar_lea.vmem %s1, 224
  %2128 = vst.msk [vmem:[%s2127] sm:$0xff] %vm2126, %v2125
  %s2129 = scalar_lea.vmem %s0, 66
  %v2130 = vld [vmem:[%s2129] ss:$8 sm:$0xf]
  %s2131 = scalar_lea.vmem %s0, 66
  %v2132 = vld [vmem:[%s2131] ss:$8 sm:$0xf0]
  %vm2133 = vcmask 1047556
  %v2134 = vsel %vm2133, %v2132, %v2130
  %2135 = vrot.lane.b32.xlu0 %v2134, 16
  %v2136 = vpop.permute.xlu0 %2135
  %vm2137 = vcmask 195712
  %s2138 = scalar_lea.vmem %s1, 8
  %2139 = vst.msk [vmem:[%s2138] sm:$0xff] %vm2137, %v2136
  %s2140 = scalar_lea.vmem %s0, 322
  %v2141 = vld [vmem:[%s2140] ss:$8 sm:$0xf]
  %s2142 = scalar_lea.vmem %s0, 322
  %v2143 = vld [vmem:[%s2142] ss:$8 sm:$0xf0]
  %vm2144 = vcmask 1047556
  %v2145 = vsel %vm2144, %v2143, %v2141
  %2146 = vrot.lane.b32.xlu0 %v2145, 16
  %v2147 = vpop.permute.xlu0 %2146
  %vm2148 = vcmask 195712
  %s2149 = scalar_lea.vmem %s1, 40
  %2150 = vst.msk [vmem:[%s2149] sm:$0xff] %vm2148, %v2147
  %s2151 = scalar_lea.vmem %s0, 578
  %v2152 = vld [vmem:[%s2151] ss:$8 sm:$0xf]
  %s2153 = scalar_lea.vmem %s0, 578
  %v2154 = vld [vmem:[%s2153] ss:$8 sm:$0xf0]
  %vm2155 = vcmask 1047556
  %v2156 = vsel %vm2155, %v2154, %v2152
  %2157 = vrot.lane.b32.xlu0 %v2156, 16
  %v2158 = vpop.permute.xlu0 %2157
  %vm2159 = vcmask 195712
  %s2160 = scalar_lea.vmem %s1, 72
  %2161 = vst.msk [vmem:[%s2160] sm:$0xff] %vm2159, %v2158
  %s2162 = scalar_lea.vmem %s0, 834
  %v2163 = vld [vmem:[%s2162] ss:$8 sm:$0xf]
  %s2164 = scalar_lea.vmem %s0, 834
  %v2165 = vld [vmem:[%s2164] ss:$8 sm:$0xf0]
  %vm2166 = vcmask 1047556
  %v2167 = vsel %vm2166, %v2165, %v2163
  %2168 = vrot.lane.b32.xlu0 %v2167, 16
  %v2169 = vpop.permute.xlu0 %2168
  %vm2170 = vcmask 195712
  %s2171 = scalar_lea.vmem %s1, 104
  %2172 = vst.msk [vmem:[%s2171] sm:$0xff] %vm2170, %v2169
  %s2173 = scalar_lea.vmem %s0, 1090
  %v2174 = vld [vmem:[%s2173] ss:$8 sm:$0xf]
  %s2175 = scalar_lea.vmem %s0, 1090
  %v2176 = vld [vmem:[%s2175] ss:$8 sm:$0xf0]
  %vm2177 = vcmask 1047556
  %v2178 = vsel %vm2177, %v2176, %v2174
  %2179 = vrot.lane.b32.xlu0 %v2178, 16
  %v2180 = vpop.permute.xlu0 %2179
  %vm2181 = vcmask 195712
  %s2182 = scalar_lea.vmem %s1, 136
  %2183 = vst.msk [vmem:[%s2182] sm:$0xff] %vm2181, %v2180
  %s2184 = scalar_lea.vmem %s0, 1346
  %v2185 = vld [vmem:[%s2184] ss:$8 sm:$0xf]
  %s2186 = scalar_lea.vmem %s0, 1346
  %v2187 = vld [vmem:[%s2186] ss:$8 sm:$0xf0]
  %vm2188 = vcmask 1047556
  %v2189 = vsel %vm2188, %v2187, %v2185
  %2190 = vrot.lane.b32.xlu0 %v2189, 16
  %v2191 = vpop.permute.xlu0 %2190
  %vm2192 = vcmask 195712
  %s2193 = scalar_lea.vmem %s1, 168
  %2194 = vst.msk [vmem:[%s2193] sm:$0xff] %vm2192, %v2191
  %s2195 = scalar_lea.vmem %s0, 1602
  %v2196 = vld [vmem:[%s2195] ss:$8 sm:$0xf]
  %s2197 = scalar_lea.vmem %s0, 1602
  %v2198 = vld [vmem:[%s2197] ss:$8 sm:$0xf0]
  %vm2199 = vcmask 1047556
  %v2200 = vsel %vm2199, %v2198, %v2196
  %2201 = vrot.lane.b32.xlu0 %v2200, 16
  %v2202 = vpop.permute.xlu0 %2201
  %vm2203 = vcmask 195712
  %s2204 = scalar_lea.vmem %s1, 200
  %2205 = vst.msk [vmem:[%s2204] sm:$0xff] %vm2203, %v2202
  %s2206 = scalar_lea.vmem %s0, 1858
  %v2207 = vld [vmem:[%s2206] ss:$8 sm:$0xf]
  %s2208 = scalar_lea.vmem %s0, 1858
  %v2209 = vld [vmem:[%s2208] ss:$8 sm:$0xf0]
  %vm2210 = vcmask 1047556
  %v2211 = vsel %vm2210, %v2209, %v2207
  %2212 = vrot.lane.b32.xlu0 %v2211, 16
  %v2213 = vpop.permute.xlu0 %2212
  %vm2214 = vcmask 195712
  %s2215 = scalar_lea.vmem %s1, 232
  %2216 = vst.msk [vmem:[%s2215] sm:$0xff] %vm2214, %v2213
  %s2217 = scalar_lea.vmem %s0, 130
  %v2218 = vld [vmem:[%s2217] ss:$8 sm:$0xf]
  %s2219 = scalar_lea.vmem %s0, 130
  %v2220 = vld [vmem:[%s2219] ss:$8 sm:$0xf0]
  %vm2221 = vcmask 1047556
  %v2222 = vsel %vm2221, %v2220, %v2218
  %2223 = vrot.lane.b32.xlu0 %v2222, 16
  %v2224 = vpop.permute.xlu0 %2223
  %vm2225 = vcmask 195712
  %s2226 = scalar_lea.vmem %s1, 16
  %2227 = vst.msk [vmem:[%s2226] sm:$0xff] %vm2225, %v2224
  %s2228 = scalar_lea.vmem %s0, 386
  %v2229 = vld [vmem:[%s2228] ss:$8 sm:$0xf]
  %s2230 = scalar_lea.vmem %s0, 386
  %v2231 = vld [vmem:[%s2230] ss:$8 sm:$0xf0]
  %vm2232 = vcmask 1047556
  %v2233 = vsel %vm2232, %v2231, %v2229
  %2234 = vrot.lane.b32.xlu0 %v2233, 16
  %v2235 = vpop.permute.xlu0 %2234
  %vm2236 = vcmask 195712
  %s2237 = scalar_lea.vmem %s1, 48
  %2238 = vst.msk [vmem:[%s2237] sm:$0xff] %vm2236, %v2235
  %s2239 = scalar_lea.vmem %s0, 642
  %v2240 = vld [vmem:[%s2239] ss:$8 sm:$0xf]
  %s2241 = scalar_lea.vmem %s0, 642
  %v2242 = vld [vmem:[%s2241] ss:$8 sm:$0xf0]
  %vm2243 = vcmask 1047556
  %v2244 = vsel %vm2243, %v2242, %v2240
  %2245 = vrot.lane.b32.xlu0 %v2244, 16
  %v2246 = vpop.permute.xlu0 %2245
  %vm2247 = vcmask 195712
  %s2248 = scalar_lea.vmem %s1, 80
  %2249 = vst.msk [vmem:[%s2248] sm:$0xff] %vm2247, %v2246
  %s2250 = scalar_lea.vmem %s0, 898
  %v2251 = vld [vmem:[%s2250] ss:$8 sm:$0xf]
  %s2252 = scalar_lea.vmem %s0, 898
  %v2253 = vld [vmem:[%s2252] ss:$8 sm:$0xf0]
  %vm2254 = vcmask 1047556
  %v2255 = vsel %vm2254, %v2253, %v2251
  %2256 = vrot.lane.b32.xlu0 %v2255, 16
  %v2257 = vpop.permute.xlu0 %2256
  %vm2258 = vcmask 195712
  %s2259 = scalar_lea.vmem %s1, 112
  %2260 = vst.msk [vmem:[%s2259] sm:$0xff] %vm2258, %v2257
  %s2261 = scalar_lea.vmem %s0, 1154
  %v2262 = vld [vmem:[%s2261] ss:$8 sm:$0xf]
  %s2263 = scalar_lea.vmem %s0, 1154
  %v2264 = vld [vmem:[%s2263] ss:$8 sm:$0xf0]
  %vm2265 = vcmask 1047556
  %v2266 = vsel %vm2265, %v2264, %v2262
  %2267 = vrot.lane.b32.xlu0 %v2266, 16
  %v2268 = vpop.permute.xlu0 %2267
  %vm2269 = vcmask 195712
  %s2270 = scalar_lea.vmem %s1, 144
  %2271 = vst.msk [vmem:[%s2270] sm:$0xff] %vm2269, %v2268
  %s2272 = scalar_lea.vmem %s0, 1410
  %v2273 = vld [vmem:[%s2272] ss:$8 sm:$0xf]
  %s2274 = scalar_lea.vmem %s0, 1410
  %v2275 = vld [vmem:[%s2274] ss:$8 sm:$0xf0]
  %vm2276 = vcmask 1047556
  %v2277 = vsel %vm2276, %v2275, %v2273
  %2278 = vrot.lane.b32.xlu0 %v2277, 16
  %v2279 = vpop.permute.xlu0 %2278
  %vm2280 = vcmask 195712
  %s2281 = scalar_lea.vmem %s1, 176
  %2282 = vst.msk [vmem:[%s2281] sm:$0xff] %vm2280, %v2279
  %s2283 = scalar_lea.vmem %s0, 1666
  %v2284 = vld [vmem:[%s2283] ss:$8 sm:$0xf]
  %s2285 = scalar_lea.vmem %s0, 1666
  %v2286 = vld [vmem:[%s2285] ss:$8 sm:$0xf0]
  %vm2287 = vcmask 1047556
  %v2288 = vsel %vm2287, %v2286, %v2284
  %2289 = vrot.lane.b32.xlu0 %v2288, 16
  %v2290 = vpop.permute.xlu0 %2289
  %vm2291 = vcmask 195712
  %s2292 = scalar_lea.vmem %s1, 208
  %2293 = vst.msk [vmem:[%s2292] sm:$0xff] %vm2291, %v2290
  %s2294 = scalar_lea.vmem %s0, 1922
  %v2295 = vld [vmem:[%s2294] ss:$8 sm:$0xf]
  %s2296 = scalar_lea.vmem %s0, 1922
  %v2297 = vld [vmem:[%s2296] ss:$8 sm:$0xf0]
  %vm2298 = vcmask 1047556
  %v2299 = vsel %vm2298, %v2297, %v2295
  %2300 = vrot.lane.b32.xlu0 %v2299, 16
  %v2301 = vpop.permute.xlu0 %2300
  %vm2302 = vcmask 195712
  %s2303 = scalar_lea.vmem %s1, 240
  %2304 = vst.msk [vmem:[%s2303] sm:$0xff] %vm2302, %v2301
  %s2305 = scalar_lea.vmem %s0, 194
  %v2306 = vld [vmem:[%s2305] ss:$8 sm:$0xf]
  %s2307 = scalar_lea.vmem %s0, 194
  %v2308 = vld [vmem:[%s2307] ss:$8 sm:$0xf0]
  %vm2309 = vcmask 1047556
  %v2310 = vsel %vm2309, %v2308, %v2306
  %2311 = vrot.lane.b32.xlu0 %v2310, 16
  %v2312 = vpop.permute.xlu0 %2311
  %vm2313 = vcmask 195712
  %s2314 = scalar_lea.vmem %s1, 24
  %2315 = vst.msk [vmem:[%s2314] sm:$0xff] %vm2313, %v2312
  %s2316 = scalar_lea.vmem %s0, 450
  %v2317 = vld [vmem:[%s2316] ss:$8 sm:$0xf]
  %s2318 = scalar_lea.vmem %s0, 450
  %v2319 = vld [vmem:[%s2318] ss:$8 sm:$0xf0]
  %vm2320 = vcmask 1047556
  %v2321 = vsel %vm2320, %v2319, %v2317
  %2322 = vrot.lane.b32.xlu0 %v2321, 16
  %v2323 = vpop.permute.xlu0 %2322
  %vm2324 = vcmask 195712
  %s2325 = scalar_lea.vmem %s1, 56
  %2326 = vst.msk [vmem:[%s2325] sm:$0xff] %vm2324, %v2323
  %s2327 = scalar_lea.vmem %s0, 706
  %v2328 = vld [vmem:[%s2327] ss:$8 sm:$0xf]
  %s2329 = scalar_lea.vmem %s0, 706
  %v2330 = vld [vmem:[%s2329] ss:$8 sm:$0xf0]
  %vm2331 = vcmask 1047556
  %v2332 = vsel %vm2331, %v2330, %v2328
  %2333 = vrot.lane.b32.xlu0 %v2332, 16
  %v2334 = vpop.permute.xlu0 %2333
  %vm2335 = vcmask 195712
  %s2336 = scalar_lea.vmem %s1, 88
  %2337 = vst.msk [vmem:[%s2336] sm:$0xff] %vm2335, %v2334
  %s2338 = scalar_lea.vmem %s0, 962
  %v2339 = vld [vmem:[%s2338] ss:$8 sm:$0xf]
  %s2340 = scalar_lea.vmem %s0, 962
  %v2341 = vld [vmem:[%s2340] ss:$8 sm:$0xf0]
  %vm2342 = vcmask 1047556
  %v2343 = vsel %vm2342, %v2341, %v2339
  %2344 = vrot.lane.b32.xlu0 %v2343, 16
  %v2345 = vpop.permute.xlu0 %2344
  %vm2346 = vcmask 195712
  %s2347 = scalar_lea.vmem %s1, 120
  %2348 = vst.msk [vmem:[%s2347] sm:$0xff] %vm2346, %v2345
  %s2349 = scalar_lea.vmem %s0, 1218
  %v2350 = vld [vmem:[%s2349] ss:$8 sm:$0xf]
  %s2351 = scalar_lea.vmem %s0, 1218
  %v2352 = vld [vmem:[%s2351] ss:$8 sm:$0xf0]
  %vm2353 = vcmask 1047556
  %v2354 = vsel %vm2353, %v2352, %v2350
  %2355 = vrot.lane.b32.xlu0 %v2354, 16
  %v2356 = vpop.permute.xlu0 %2355
  %vm2357 = vcmask 195712
  %s2358 = scalar_lea.vmem %s1, 152
  %2359 = vst.msk [vmem:[%s2358] sm:$0xff] %vm2357, %v2356
  %s2360 = scalar_lea.vmem %s0, 1474
  %v2361 = vld [vmem:[%s2360] ss:$8 sm:$0xf]
  %s2362 = scalar_lea.vmem %s0, 1474
  %v2363 = vld [vmem:[%s2362] ss:$8 sm:$0xf0]
  %vm2364 = vcmask 1047556
  %v2365 = vsel %vm2364, %v2363, %v2361
  %2366 = vrot.lane.b32.xlu0 %v2365, 16
  %v2367 = vpop.permute.xlu0 %2366
  %vm2368 = vcmask 195712
  %s2369 = scalar_lea.vmem %s1, 184
  %2370 = vst.msk [vmem:[%s2369] sm:$0xff] %vm2368, %v2367
  %s2371 = scalar_lea.vmem %s0, 1730
  %v2372 = vld [vmem:[%s2371] ss:$8 sm:$0xf]
  %s2373 = scalar_lea.vmem %s0, 1730
  %v2374 = vld [vmem:[%s2373] ss:$8 sm:$0xf0]
  %vm2375 = vcmask 1047556
  %v2376 = vsel %vm2375, %v2374, %v2372
  %2377 = vrot.lane.b32.xlu0 %v2376, 16
  %v2378 = vpop.permute.xlu0 %2377
  %vm2379 = vcmask 195712
  %s2380 = scalar_lea.vmem %s1, 216
  %2381 = vst.msk [vmem:[%s2380] sm:$0xff] %vm2379, %v2378
  %s2382 = scalar_lea.vmem %s0, 1986
  %v2383 = vld [vmem:[%s2382] ss:$8 sm:$0xf]
  %s2384 = scalar_lea.vmem %s0, 1986
  %v2385 = vld [vmem:[%s2384] ss:$8 sm:$0xf0]
  %vm2386 = vcmask 1047556
  %v2387 = vsel %vm2386, %v2385, %v2383
  %2388 = vrot.lane.b32.xlu0 %v2387, 16
  %v2389 = vpop.permute.xlu0 %2388
  %vm2390 = vcmask 195712
  %s2391 = scalar_lea.vmem %s1, 248
  %2392 = vst.msk [vmem:[%s2391] sm:$0xff] %vm2390, %v2389
  %s2393 = scalar_lea.vmem %s0, 1
  %v2394 = vld [vmem:[%s2393] ss:$8 sm:$0xf]
  %s2395 = scalar_lea.vmem %s0, 1
  %v2396 = vld [vmem:[%s2395] ss:$8 sm:$0xf0]
  %vm2397 = vcmask 1047556
  %v2398 = vsel %vm2397, %v2396, %v2394
  %2399 = vrot.lane.b32.xlu0 %v2398, 8
  %v2400 = vpop.permute.xlu0 %2399
  %vm2401 = vcmask 130112
  %2402 = vst.msk [vmem:[%s1] sm:$0xff] %vm2401, %v2400
  %s2403 = scalar_lea.vmem %s0, 257
  %v2404 = vld [vmem:[%s2403] ss:$8 sm:$0xf]
  %s2405 = scalar_lea.vmem %s0, 257
  %v2406 = vld [vmem:[%s2405] ss:$8 sm:$0xf0]
  %vm2407 = vcmask 1047556
  %v2408 = vsel %vm2407, %v2406, %v2404
  %2409 = vrot.lane.b32.xlu0 %v2408, 8
  %v2410 = vpop.permute.xlu0 %2409
  %vm2411 = vcmask 130112
  %s2412 = scalar_lea.vmem %s1, 32
  %2413 = vst.msk [vmem:[%s2412] sm:$0xff] %vm2411, %v2410
  %s2414 = scalar_lea.vmem %s0, 513
  %v2415 = vld [vmem:[%s2414] ss:$8 sm:$0xf]
  %s2416 = scalar_lea.vmem %s0, 513
  %v2417 = vld [vmem:[%s2416] ss:$8 sm:$0xf0]
  %vm2418 = vcmask 1047556
  %v2419 = vsel %vm2418, %v2417, %v2415
  %2420 = vrot.lane.b32.xlu0 %v2419, 8
  %v2421 = vpop.permute.xlu0 %2420
  %vm2422 = vcmask 130112
  %s2423 = scalar_lea.vmem %s1, 64
  %2424 = vst.msk [vmem:[%s2423] sm:$0xff] %vm2422, %v2421
  %s2425 = scalar_lea.vmem %s0, 769
  %v2426 = vld [vmem:[%s2425] ss:$8 sm:$0xf]
  %s2427 = scalar_lea.vmem %s0, 769
  %v2428 = vld [vmem:[%s2427] ss:$8 sm:$0xf0]
  %vm2429 = vcmask 1047556
  %v2430 = vsel %vm2429, %v2428, %v2426
  %2431 = vrot.lane.b32.xlu0 %v2430, 8
  %v2432 = vpop.permute.xlu0 %2431
  %vm2433 = vcmask 130112
  %s2434 = scalar_lea.vmem %s1, 96
  %2435 = vst.msk [vmem:[%s2434] sm:$0xff] %vm2433, %v2432
  %s2436 = scalar_lea.vmem %s0, 1025
  %v2437 = vld [vmem:[%s2436] ss:$8 sm:$0xf]
  %s2438 = scalar_lea.vmem %s0, 1025
  %v2439 = vld [vmem:[%s2438] ss:$8 sm:$0xf0]
  %vm2440 = vcmask 1047556
  %v2441 = vsel %vm2440, %v2439, %v2437
  %2442 = vrot.lane.b32.xlu0 %v2441, 8
  %v2443 = vpop.permute.xlu0 %2442
  %vm2444 = vcmask 130112
  %s2445 = scalar_lea.vmem %s1, 128
  %2446 = vst.msk [vmem:[%s2445] sm:$0xff] %vm2444, %v2443
  %s2447 = scalar_lea.vmem %s0, 1281
  %v2448 = vld [vmem:[%s2447] ss:$8 sm:$0xf]
  %s2449 = scalar_lea.vmem %s0, 1281
  %v2450 = vld [vmem:[%s2449] ss:$8 sm:$0xf0]
  %vm2451 = vcmask 1047556
  %v2452 = vsel %vm2451, %v2450, %v2448
  %2453 = vrot.lane.b32.xlu0 %v2452, 8
  %v2454 = vpop.permute.xlu0 %2453
  %vm2455 = vcmask 130112
  %s2456 = scalar_lea.vmem %s1, 160
  %2457 = vst.msk [vmem:[%s2456] sm:$0xff] %vm2455, %v2454
  %s2458 = scalar_lea.vmem %s0, 1537
  %v2459 = vld [vmem:[%s2458] ss:$8 sm:$0xf]
  %s2460 = scalar_lea.vmem %s0, 1537
  %v2461 = vld [vmem:[%s2460] ss:$8 sm:$0xf0]
  %vm2462 = vcmask 1047556
  %v2463 = vsel %vm2462, %v2461, %v2459
  %2464 = vrot.lane.b32.xlu0 %v2463, 8
  %v2465 = vpop.permute.xlu0 %2464
  %vm2466 = vcmask 130112
  %s2467 = scalar_lea.vmem %s1, 192
  %2468 = vst.msk [vmem:[%s2467] sm:$0xff] %vm2466, %v2465
  %s2469 = scalar_lea.vmem %s0, 1793
  %v2470 = vld [vmem:[%s2469] ss:$8 sm:$0xf]
  %s2471 = scalar_lea.vmem %s0, 1793
  %v2472 = vld [vmem:[%s2471] ss:$8 sm:$0xf0]
  %vm2473 = vcmask 1047556
  %v2474 = vsel %vm2473, %v2472, %v2470
  %2475 = vrot.lane.b32.xlu0 %v2474, 8
  %v2476 = vpop.permute.xlu0 %2475
  %vm2477 = vcmask 130112
  %s2478 = scalar_lea.vmem %s1, 224
  %2479 = vst.msk [vmem:[%s2478] sm:$0xff] %vm2477, %v2476
  %s2480 = scalar_lea.vmem %s0, 65
  %v2481 = vld [vmem:[%s2480] ss:$8 sm:$0xf]
  %s2482 = scalar_lea.vmem %s0, 65
  %v2483 = vld [vmem:[%s2482] ss:$8 sm:$0xf0]
  %vm2484 = vcmask 1047556
  %v2485 = vsel %vm2484, %v2483, %v2481
  %2486 = vrot.lane.b32.xlu0 %v2485, 8
  %v2487 = vpop.permute.xlu0 %2486
  %vm2488 = vcmask 130112
  %s2489 = scalar_lea.vmem %s1, 8
  %2490 = vst.msk [vmem:[%s2489] sm:$0xff] %vm2488, %v2487
  %s2491 = scalar_lea.vmem %s0, 321
  %v2492 = vld [vmem:[%s2491] ss:$8 sm:$0xf]
  %s2493 = scalar_lea.vmem %s0, 321
  %v2494 = vld [vmem:[%s2493] ss:$8 sm:$0xf0]
  %vm2495 = vcmask 1047556
  %v2496 = vsel %vm2495, %v2494, %v2492
  %2497 = vrot.lane.b32.xlu0 %v2496, 8
  %v2498 = vpop.permute.xlu0 %2497
  %vm2499 = vcmask 130112
  %s2500 = scalar_lea.vmem %s1, 40
  %2501 = vst.msk [vmem:[%s2500] sm:$0xff] %vm2499, %v2498
  %s2502 = scalar_lea.vmem %s0, 577
  %v2503 = vld [vmem:[%s2502] ss:$8 sm:$0xf]
  %s2504 = scalar_lea.vmem %s0, 577
  %v2505 = vld [vmem:[%s2504] ss:$8 sm:$0xf0]
  %vm2506 = vcmask 1047556
  %v2507 = vsel %vm2506, %v2505, %v2503
  %2508 = vrot.lane.b32.xlu0 %v2507, 8
  %v2509 = vpop.permute.xlu0 %2508
  %vm2510 = vcmask 130112
  %s2511 = scalar_lea.vmem %s1, 72
  %2512 = vst.msk [vmem:[%s2511] sm:$0xff] %vm2510, %v2509
  %s2513 = scalar_lea.vmem %s0, 833
  %v2514 = vld [vmem:[%s2513] ss:$8 sm:$0xf]
  %s2515 = scalar_lea.vmem %s0, 833
  %v2516 = vld [vmem:[%s2515] ss:$8 sm:$0xf0]
  %vm2517 = vcmask 1047556
  %v2518 = vsel %vm2517, %v2516, %v2514
  %2519 = vrot.lane.b32.xlu0 %v2518, 8
  %v2520 = vpop.permute.xlu0 %2519
  %vm2521 = vcmask 130112
  %s2522 = scalar_lea.vmem %s1, 104
  %2523 = vst.msk [vmem:[%s2522] sm:$0xff] %vm2521, %v2520
  %s2524 = scalar_lea.vmem %s0, 1089
  %v2525 = vld [vmem:[%s2524] ss:$8 sm:$0xf]
  %s2526 = scalar_lea.vmem %s0, 1089
  %v2527 = vld [vmem:[%s2526] ss:$8 sm:$0xf0]
  %vm2528 = vcmask 1047556
  %v2529 = vsel %vm2528, %v2527, %v2525
  %2530 = vrot.lane.b32.xlu0 %v2529, 8
  %v2531 = vpop.permute.xlu0 %2530
  %vm2532 = vcmask 130112
  %s2533 = scalar_lea.vmem %s1, 136
  %2534 = vst.msk [vmem:[%s2533] sm:$0xff] %vm2532, %v2531
  %s2535 = scalar_lea.vmem %s0, 1345
  %v2536 = vld [vmem:[%s2535] ss:$8 sm:$0xf]
  %s2537 = scalar_lea.vmem %s0, 1345
  %v2538 = vld [vmem:[%s2537] ss:$8 sm:$0xf0]
  %vm2539 = vcmask 1047556
  %v2540 = vsel %vm2539, %v2538, %v2536
  %2541 = vrot.lane.b32.xlu0 %v2540, 8
  %v2542 = vpop.permute.xlu0 %2541
  %vm2543 = vcmask 130112
  %s2544 = scalar_lea.vmem %s1, 168
  %2545 = vst.msk [vmem:[%s2544] sm:$0xff] %vm2543, %v2542
  %s2546 = scalar_lea.vmem %s0, 1601
  %v2547 = vld [vmem:[%s2546] ss:$8 sm:$0xf]
  %s2548 = scalar_lea.vmem %s0, 1601
  %v2549 = vld [vmem:[%s2548] ss:$8 sm:$0xf0]
  %vm2550 = vcmask 1047556
  %v2551 = vsel %vm2550, %v2549, %v2547
  %2552 = vrot.lane.b32.xlu0 %v2551, 8
  %v2553 = vpop.permute.xlu0 %2552
  %vm2554 = vcmask 130112
  %s2555 = scalar_lea.vmem %s1, 200
  %2556 = vst.msk [vmem:[%s2555] sm:$0xff] %vm2554, %v2553
  %s2557 = scalar_lea.vmem %s0, 1857
  %v2558 = vld [vmem:[%s2557] ss:$8 sm:$0xf]
  %s2559 = scalar_lea.vmem %s0, 1857
  %v2560 = vld [vmem:[%s2559] ss:$8 sm:$0xf0]
  %vm2561 = vcmask 1047556
  %v2562 = vsel %vm2561, %v2560, %v2558
  %2563 = vrot.lane.b32.xlu0 %v2562, 8
  %v2564 = vpop.permute.xlu0 %2563
  %vm2565 = vcmask 130112
  %s2566 = scalar_lea.vmem %s1, 232
  %2567 = vst.msk [vmem:[%s2566] sm:$0xff] %vm2565, %v2564
  %s2568 = scalar_lea.vmem %s0, 129
  %v2569 = vld [vmem:[%s2568] ss:$8 sm:$0xf]
  %s2570 = scalar_lea.vmem %s0, 129
  %v2571 = vld [vmem:[%s2570] ss:$8 sm:$0xf0]
  %vm2572 = vcmask 1047556
  %v2573 = vsel %vm2572, %v2571, %v2569
  %2574 = vrot.lane.b32.xlu0 %v2573, 8
  %v2575 = vpop.permute.xlu0 %2574
  %vm2576 = vcmask 130112
  %s2577 = scalar_lea.vmem %s1, 16
  %2578 = vst.msk [vmem:[%s2577] sm:$0xff] %vm2576, %v2575
  %s2579 = scalar_lea.vmem %s0, 385
  %v2580 = vld [vmem:[%s2579] ss:$8 sm:$0xf]
  %s2581 = scalar_lea.vmem %s0, 385
  %v2582 = vld [vmem:[%s2581] ss:$8 sm:$0xf0]
  %vm2583 = vcmask 1047556
  %v2584 = vsel %vm2583, %v2582, %v2580
  %2585 = vrot.lane.b32.xlu0 %v2584, 8
  %v2586 = vpop.permute.xlu0 %2585
  %vm2587 = vcmask 130112
  %s2588 = scalar_lea.vmem %s1, 48
  %2589 = vst.msk [vmem:[%s2588] sm:$0xff] %vm2587, %v2586
  %s2590 = scalar_lea.vmem %s0, 641
  %v2591 = vld [vmem:[%s2590] ss:$8 sm:$0xf]
  %s2592 = scalar_lea.vmem %s0, 641
  %v2593 = vld [vmem:[%s2592] ss:$8 sm:$0xf0]
  %vm2594 = vcmask 1047556
  %v2595 = vsel %vm2594, %v2593, %v2591
  %2596 = vrot.lane.b32.xlu0 %v2595, 8
  %v2597 = vpop.permute.xlu0 %2596
  %vm2598 = vcmask 130112
  %s2599 = scalar_lea.vmem %s1, 80
  %2600 = vst.msk [vmem:[%s2599] sm:$0xff] %vm2598, %v2597
  %s2601 = scalar_lea.vmem %s0, 897
  %v2602 = vld [vmem:[%s2601] ss:$8 sm:$0xf]
  %s2603 = scalar_lea.vmem %s0, 897
  %v2604 = vld [vmem:[%s2603] ss:$8 sm:$0xf0]
  %vm2605 = vcmask 1047556
  %v2606 = vsel %vm2605, %v2604, %v2602
  %2607 = vrot.lane.b32.xlu0 %v2606, 8
  %v2608 = vpop.permute.xlu0 %2607
  %vm2609 = vcmask 130112
  %s2610 = scalar_lea.vmem %s1, 112
  %2611 = vst.msk [vmem:[%s2610] sm:$0xff] %vm2609, %v2608
  %s2612 = scalar_lea.vmem %s0, 1153
  %v2613 = vld [vmem:[%s2612] ss:$8 sm:$0xf]
  %s2614 = scalar_lea.vmem %s0, 1153
  %v2615 = vld [vmem:[%s2614] ss:$8 sm:$0xf0]
  %vm2616 = vcmask 1047556
  %v2617 = vsel %vm2616, %v2615, %v2613
  %2618 = vrot.lane.b32.xlu0 %v2617, 8
  %v2619 = vpop.permute.xlu0 %2618
  %vm2620 = vcmask 130112
  %s2621 = scalar_lea.vmem %s1, 144
  %2622 = vst.msk [vmem:[%s2621] sm:$0xff] %vm2620, %v2619
  %s2623 = scalar_lea.vmem %s0, 1409
  %v2624 = vld [vmem:[%s2623] ss:$8 sm:$0xf]
  %s2625 = scalar_lea.vmem %s0, 1409
  %v2626 = vld [vmem:[%s2625] ss:$8 sm:$0xf0]
  %vm2627 = vcmask 1047556
  %v2628 = vsel %vm2627, %v2626, %v2624
  %2629 = vrot.lane.b32.xlu0 %v2628, 8
  %v2630 = vpop.permute.xlu0 %2629
  %vm2631 = vcmask 130112
  %s2632 = scalar_lea.vmem %s1, 176
  %2633 = vst.msk [vmem:[%s2632] sm:$0xff] %vm2631, %v2630
  %s2634 = scalar_lea.vmem %s0, 1665
  %v2635 = vld [vmem:[%s2634] ss:$8 sm:$0xf]
  %s2636 = scalar_lea.vmem %s0, 1665
  %v2637 = vld [vmem:[%s2636] ss:$8 sm:$0xf0]
  %vm2638 = vcmask 1047556
  %v2639 = vsel %vm2638, %v2637, %v2635
  %2640 = vrot.lane.b32.xlu0 %v2639, 8
  %v2641 = vpop.permute.xlu0 %2640
  %vm2642 = vcmask 130112
  %s2643 = scalar_lea.vmem %s1, 208
  %2644 = vst.msk [vmem:[%s2643] sm:$0xff] %vm2642, %v2641
  %s2645 = scalar_lea.vmem %s0, 1921
  %v2646 = vld [vmem:[%s2645] ss:$8 sm:$0xf]
  %s2647 = scalar_lea.vmem %s0, 1921
  %v2648 = vld [vmem:[%s2647] ss:$8 sm:$0xf0]
  %vm2649 = vcmask 1047556
  %v2650 = vsel %vm2649, %v2648, %v2646
  %2651 = vrot.lane.b32.xlu0 %v2650, 8
  %v2652 = vpop.permute.xlu0 %2651
  %vm2653 = vcmask 130112
  %s2654 = scalar_lea.vmem %s1, 240
  %2655 = vst.msk [vmem:[%s2654] sm:$0xff] %vm2653, %v2652
  %s2656 = scalar_lea.vmem %s0, 193
  %v2657 = vld [vmem:[%s2656] ss:$8 sm:$0xf]
  %s2658 = scalar_lea.vmem %s0, 193
  %v2659 = vld [vmem:[%s2658] ss:$8 sm:$0xf0]
  %vm2660 = vcmask 1047556
  %v2661 = vsel %vm2660, %v2659, %v2657
  %2662 = vrot.lane.b32.xlu0 %v2661, 8
  %v2663 = vpop.permute.xlu0 %2662
  %vm2664 = vcmask 130112
  %s2665 = scalar_lea.vmem %s1, 24
  %2666 = vst.msk [vmem:[%s2665] sm:$0xff] %vm2664, %v2663
  %s2667 = scalar_lea.vmem %s0, 449
  %v2668 = vld [vmem:[%s2667] ss:$8 sm:$0xf]
  %s2669 = scalar_lea.vmem %s0, 449
  %v2670 = vld [vmem:[%s2669] ss:$8 sm:$0xf0]
  %vm2671 = vcmask 1047556
  %v2672 = vsel %vm2671, %v2670, %v2668
  %2673 = vrot.lane.b32.xlu0 %v2672, 8
  %v2674 = vpop.permute.xlu0 %2673
  %vm2675 = vcmask 130112
  %s2676 = scalar_lea.vmem %s1, 56
  %2677 = vst.msk [vmem:[%s2676] sm:$0xff] %vm2675, %v2674
  %s2678 = scalar_lea.vmem %s0, 705
  %v2679 = vld [vmem:[%s2678] ss:$8 sm:$0xf]
  %s2680 = scalar_lea.vmem %s0, 705
  %v2681 = vld [vmem:[%s2680] ss:$8 sm:$0xf0]
  %vm2682 = vcmask 1047556
  %v2683 = vsel %vm2682, %v2681, %v2679
  %2684 = vrot.lane.b32.xlu0 %v2683, 8
  %v2685 = vpop.permute.xlu0 %2684
  %vm2686 = vcmask 130112
  %s2687 = scalar_lea.vmem %s1, 88
  %2688 = vst.msk [vmem:[%s2687] sm:$0xff] %vm2686, %v2685
  %s2689 = scalar_lea.vmem %s0, 961
  %v2690 = vld [vmem:[%s2689] ss:$8 sm:$0xf]
  %s2691 = scalar_lea.vmem %s0, 961
  %v2692 = vld [vmem:[%s2691] ss:$8 sm:$0xf0]
  %vm2693 = vcmask 1047556
  %v2694 = vsel %vm2693, %v2692, %v2690
  %2695 = vrot.lane.b32.xlu0 %v2694, 8
  %v2696 = vpop.permute.xlu0 %2695
  %vm2697 = vcmask 130112
  %s2698 = scalar_lea.vmem %s1, 120
  %2699 = vst.msk [vmem:[%s2698] sm:$0xff] %vm2697, %v2696
  %s2700 = scalar_lea.vmem %s0, 1217
  %v2701 = vld [vmem:[%s2700] ss:$8 sm:$0xf]
  %s2702 = scalar_lea.vmem %s0, 1217
  %v2703 = vld [vmem:[%s2702] ss:$8 sm:$0xf0]
  %vm2704 = vcmask 1047556
  %v2705 = vsel %vm2704, %v2703, %v2701
  %2706 = vrot.lane.b32.xlu0 %v2705, 8
  %v2707 = vpop.permute.xlu0 %2706
  %vm2708 = vcmask 130112
  %s2709 = scalar_lea.vmem %s1, 152
  %2710 = vst.msk [vmem:[%s2709] sm:$0xff] %vm2708, %v2707
  %s2711 = scalar_lea.vmem %s0, 1473
  %v2712 = vld [vmem:[%s2711] ss:$8 sm:$0xf]
  %s2713 = scalar_lea.vmem %s0, 1473
  %v2714 = vld [vmem:[%s2713] ss:$8 sm:$0xf0]
  %vm2715 = vcmask 1047556
  %v2716 = vsel %vm2715, %v2714, %v2712
  %2717 = vrot.lane.b32.xlu0 %v2716, 8
  %v2718 = vpop.permute.xlu0 %2717
  %vm2719 = vcmask 130112
  %s2720 = scalar_lea.vmem %s1, 184
  %2721 = vst.msk [vmem:[%s2720] sm:$0xff] %vm2719, %v2718
  %s2722 = scalar_lea.vmem %s0, 1729
  %v2723 = vld [vmem:[%s2722] ss:$8 sm:$0xf]
  %s2724 = scalar_lea.vmem %s0, 1729
  %v2725 = vld [vmem:[%s2724] ss:$8 sm:$0xf0]
  %vm2726 = vcmask 1047556
  %v2727 = vsel %vm2726, %v2725, %v2723
  %2728 = vrot.lane.b32.xlu0 %v2727, 8
  %v2729 = vpop.permute.xlu0 %2728
  %vm2730 = vcmask 130112
  %s2731 = scalar_lea.vmem %s1, 216
  %2732 = vst.msk [vmem:[%s2731] sm:$0xff] %vm2730, %v2729
  %s2733 = scalar_lea.vmem %s0, 1985
  %v2734 = vld [vmem:[%s2733] ss:$8 sm:$0xf]
  %s2735 = scalar_lea.vmem %s0, 1985
  %v2736 = vld [vmem:[%s2735] ss:$8 sm:$0xf0]
  %vm2737 = vcmask 1047556
  %v2738 = vsel %vm2737, %v2736, %v2734
  %2739 = vrot.lane.b32.xlu0 %v2738, 8
  %v2740 = vpop.permute.xlu0 %2739
  %vm2741 = vcmask 130112
  %s2742 = scalar_lea.vmem %s1, 248
  %2743 = vst.msk [vmem:[%s2742] sm:$0xff] %vm2741, %v2740

// kernel: har_forward.1
$region0: #{har_forward.1}
  #allocation0 [shape = 'u32[]', space=smem, size = 0x4, offset = 0x4, fixed_abs, tag = 'smem constant byte address 0x4 - core index']
  #allocation1 [shape = 'u32[144,128]{1,0:T(1,128)}', space=vmem, size = 0x12000, scoped, tag = 'internal scratch']
  %s0 = inlined_call_operand.vmem [shape: f32[64,256], index: 0, kind: input, shape index: {}]
  %s1 = inlined_call_operand.vmem [shape: f32[1,256], index: 1, kind: input, shape index: {}]
  %s2 = inlined_call_operand.vmem [shape: f32[1,256], index: 2, kind: input, shape index: {}]
  %s3 = inlined_call_operand.vmem [shape: bf16[256,128], index: 3, kind: input, shape index: {}]
  %s4 = inlined_call_operand.vmem [shape: bf16[32,128], index: 4, kind: input, shape index: {}]
  %s5 = inlined_call_operand.vmem [shape: f32[1,128], index: 5, kind: input, shape index: {}]
  %s6 = inlined_call_operand.vmem [shape: bf16[32,128], index: 6, kind: input, shape index: {}]
  %s7 = inlined_call_operand.vmem [shape: bf16[32,128], index: 7, kind: input, shape index: {}]
  %s8 = inlined_call_operand.vmem [shape: f32[1,128], index: 8, kind: input, shape index: {}]
  %s9 = inlined_call_operand.vmem [shape: bf16[32,6], index: 9, kind: input, shape index: {}]
  %s10 = inlined_call_operand.vmem [shape: f32[1,6], index: 10, kind: input, shape index: {}]
  %s11 = inlined_call_operand.vmem [shape: f32[8,6], index: 11, kind: output, shape index: {0}]
  %s12 = inlined_call_operand.vmem [shape: f32[8,32], index: 12, kind: output, shape index: {1}]
  %13 = xla_tuple %s11, %s12
  %s14 = sld [smem:[#allocation0]]
  $region62: #{har_forward.1} parent=0
    _
  %s16 = ssub.s32 1, %s14
  %s17 = scalar_select 0, %s16, %s14
  // Predicated region
  $region2: #{har_forward.1} parent=0 // pred_check
    _
  $region3: #{har_forward.1} parent=0 // pred_check_branch
    %19 = sbr.rel (0) target = $region5
  $region4: #{har_forward.1} parent=0 // pred_region
    _
  $region5: #{har_forward.1} parent=0 // pred_fallthru
    _
  // Predicated region
  $region6: #{har_forward.1} parent=0 // pred_check
    _
  $region7: #{har_forward.1} parent=0 // pred_check_branch
    %21 = sbr.rel (0) target = $region9
  $region8: #{har_forward.1} parent=0 // pred_region
    _
  $region9: #{har_forward.1} parent=0 // pred_fallthru
    _
  // Predicated region
  $region10: #{har_forward.1} parent=0 // pred_check
    _
  $region11: #{har_forward.1} parent=0 // pred_check_branch
    %23 = sbr.rel (0) target = $region13
  $region12: #{har_forward.1} parent=0 // pred_region
    _
  $region13: #{har_forward.1} parent=0 // pred_fallthru
    _
  // Predicated region
  $region14: #{har_forward.1} parent=0 // pred_check
    _
  $region15: #{har_forward.1} parent=0 // pred_check_branch
    %25 = sbr.rel (0) target = $region17
  $region16: #{har_forward.1} parent=0 // pred_region
    _
  $region17: #{har_forward.1} parent=0 // pred_fallthru
    _
  // Predicated region
  $region18: #{har_forward.1} parent=0 // pred_check
    _
  $region19: #{har_forward.1} parent=0 // pred_check_branch
    %27 = sbr.rel (0) target = $region21
  $region20: #{har_forward.1} parent=0 // pred_region
    _
  $region21: #{har_forward.1} parent=0 // pred_fallthru
    _
  // Predicated region
  $region22: #{har_forward.1} parent=0 // pred_check
    _
  $region23: #{har_forward.1} parent=0 // pred_check_branch
    %29 = sbr.rel (0) target = $region25
  $region24: #{har_forward.1} parent=0 // pred_region
    _
  $region25: #{har_forward.1} parent=0 // pred_fallthru
    _
  // Predicated region
  $region26: #{har_forward.1} parent=0 // pred_check
    _
  $region27: #{har_forward.1} parent=0 // pred_check_branch
    %31 = sbr.rel (0) target = $region29
  $region28: #{har_forward.1} parent=0 // pred_region
    _
  $region29: #{har_forward.1} parent=0 // pred_fallthru
    _
  // Predicated region
  $region30: #{har_forward.1} parent=0 // pred_check
    _
  $region31: #{har_forward.1} parent=0 // pred_check_branch
    %33 = sbr.rel (0) target = $region33
  $region32: #{har_forward.1} parent=0 // pred_region
    _
  $region33: #{har_forward.1} parent=0 // pred_fallthru
    _
  // Predicated region
  $region34: #{har_forward.1} parent=0 // pred_check
    _
  $region35: #{har_forward.1} parent=0 // pred_check_branch
    %35 = sbr.rel (0) target = $region37
  $region36: #{har_forward.1} parent=0 // pred_region
    _
  $region37: #{har_forward.1} parent=0 // pred_fallthru
    _
  // Predicated region
  $region38: #{har_forward.1} parent=0 // pred_check
    _
  $region39: #{har_forward.1} parent=0 // pred_check_branch
    %37 = sbr.rel (0) target = $region41
  $region40: #{har_forward.1} parent=0 // pred_region
    _
  $region41: #{har_forward.1} parent=0 // pred_fallthru
    _
  // Predicated region
  $region42: #{har_forward.1} parent=0 // pred_check
    _
  $region43: #{har_forward.1} parent=0 // pred_check_branch
    %39 = sbr.rel (0) target = $region45
  $region44: #{har_forward.1} parent=0 // pred_region
    _
  $region45: #{har_forward.1} parent=0 // pred_fallthru
    _
  %v41 = vld [vmem:[%s0] sm:$0xff]
  %v42 = vld [vmem:[%s0 + $0x8] sm:$0xff]
  %v43 = vld [vmem:[%s0 + $0x10] sm:$0xff]
  %v44 = vld [vmem:[%s0 + $0x18] sm:$0xff]
  %v45 = vld [vmem:[%s0 + $0x20] sm:$0xff]
  %v46 = vld [vmem:[%s0 + $0x28] sm:$0xff]
  %v47 = vld [vmem:[%s0 + $0x30] sm:$0xff]
  %v48 = vld [vmem:[%s0 + $0x38] sm:$0xff]
  %v49 = vld [vmem:[%s0 + $0x40] sm:$0xff]
  %v50 = vld [vmem:[%s0 + $0x48] sm:$0xff]
  %v51 = vld [vmem:[%s0 + $0x50] sm:$0xff]
  %v52 = vld [vmem:[%s0 + $0x58] sm:$0xff]
  %v53 = vld [vmem:[%s0 + $0x60] sm:$0xff]
  %v54 = vld [vmem:[%s0 + $0x68] sm:$0xff]
  %v55 = vld [vmem:[%s0 + $0x70] sm:$0xff]
  %v56 = vld [vmem:[%s0 + $0x78] sm:$0xff]
  %v57 = vld [vmem:[%s1] sm:$0x3]
  %v59 = vlaneseq
  %v60 = vshrl.u32 %v59, 7
  %v61 = vsub.s32 0, %v60
  %v62 = vrot.slane %v57, %v61
  %v63 = vlaneseq
  %v64 = vshrl.u32 %v63, 7
  %v65 = vsub.s32 1, %v64
  %v66 = vrot.slane %v57, %v65
  %v69 = vmul.f32 %v41, %v62
  %v70 = vmul.f32 %v42, %v66
  %v71 = vmul.f32 %v43, %v62
  %v72 = vmul.f32 %v44, %v66
  %v73 = vmul.f32 %v45, %v62
  %v74 = vmul.f32 %v46, %v66
  %v75 = vmul.f32 %v47, %v62
  %v76 = vmul.f32 %v48, %v66
  %v77 = vmul.f32 %v49, %v62
  %v78 = vmul.f32 %v50, %v66
  %v79 = vmul.f32 %v51, %v62
  %v80 = vmul.f32 %v52, %v66
  %v81 = vmul.f32 %v53, %v62
  %v82 = vmul.f32 %v54, %v66
  %v83 = vmul.f32 %v55, %v62
  %v84 = vmul.f32 %v56, %v66
  %v85 = vld [vmem:[%s2] sm:$0x3]
  %v87 = vlaneseq
  %v88 = vshrl.u32 %v87, 7
  %v89 = vsub.s32 0, %v88
  %v90 = vrot.slane %v85, %v89
  %v91 = vlaneseq
  %v92 = vshrl.u32 %v91, 7
  %v93 = vsub.s32 1, %v92
  %v94 = vrot.slane %v85, %v93
  %v97 = vadd.f32 %v69, %v90
  %v98 = vadd.f32 %v70, %v94
  %v99 = vadd.f32 %v71, %v90
  %v100 = vadd.f32 %v72, %v94
  %v101 = vadd.f32 %v73, %v90
  %v102 = vadd.f32 %v74, %v94
  %v103 = vadd.f32 %v75, %v90
  %v104 = vadd.f32 %v76, %v94
  %v105 = vadd.f32 %v77, %v90
  %v106 = vadd.f32 %v78, %v94
  %v107 = vadd.f32 %v79, %v90
  %v108 = vadd.f32 %v80, %v94
  %v109 = vadd.f32 %v81, %v90
  %v110 = vadd.f32 %v82, %v94
  %v111 = vadd.f32 %v83, %v90
  %v112 = vadd.f32 %v84, %v94
  %v113 = vmax.f32 %v97, 0.0
  %v114 = vmax.f32 %v98, 0.0
  %v115 = vmax.f32 %v99, 0.0
  %v116 = vmax.f32 %v100, 0.0
  %v117 = vmax.f32 %v101, 0.0
  %v118 = vmax.f32 %v102, 0.0
  %v119 = vmax.f32 %v103, 0.0
  %v120 = vmax.f32 %v104, 0.0
  %v121 = vmax.f32 %v105, 0.0
  %v122 = vmax.f32 %v106, 0.0
  %v123 = vmax.f32 %v107, 0.0
  %v124 = vmax.f32 %v108, 0.0
  %v125 = vmax.f32 %v109, 0.0
  %v126 = vmax.f32 %v110, 0.0
  %v127 = vmax.f32 %v111, 0.0
  %v128 = vmax.f32 %v112, 0.0
  %v129 = vpack.c.bf16 %v115, %v113
  %v130 = vpack.c.bf16 %v116, %v114
  %v131 = vpack.c.bf16 %v119, %v117
  %v132 = vpack.c.bf16 %v120, %v118
  %v133 = vpack.c.bf16 %v123, %v121
  %v134 = vpack.c.bf16 %v124, %v122
  %v135 = vpack.c.bf16 %v127, %v125
  %v136 = vpack.c.bf16 %v128, %v126
  %v137 = vld [vmem:[%s3] sm:$0xf]
  %v138 = vld [vmem:[%s3 + $0x4] sm:$0xf]
  %v139 = vld [vmem:[%s3 + $0x8] sm:$0xf]
  %v140 = vld [vmem:[%s3 + $0xc] sm:$0xf]
  %v141 = vld [vmem:[%s3 + $0x10] sm:$0xf]
  %v142 = vld [vmem:[%s3 + $0x14] sm:$0xf]
  %v143 = vld [vmem:[%s3 + $0x18] sm:$0xf]
  %v144 = vld [vmem:[%s3 + $0x1c] sm:$0xf]
  %v145 = vld [vmem:[%s3 + $0x20] sm:$0xf]
  %v146 = vld [vmem:[%s3 + $0x24] sm:$0xf]
  %v147 = vld [vmem:[%s3 + $0x28] sm:$0xf]
  %v148 = vld [vmem:[%s3 + $0x2c] sm:$0xf]
  %v149 = vld [vmem:[%s3 + $0x30] sm:$0xf]
  %v150 = vld [vmem:[%s3 + $0x34] sm:$0xf]
  %v151 = vld [vmem:[%s3 + $0x38] sm:$0xf]
  %v152 = vld [vmem:[%s3 + $0x3c] sm:$0xf]
  %v153 = vld [vmem:[%s3 + $0x40] sm:$0xf]
  %v154 = vld [vmem:[%s3 + $0x44] sm:$0xf]
  %v155 = vld [vmem:[%s3 + $0x48] sm:$0xf]
  %v156 = vld [vmem:[%s3 + $0x4c] sm:$0xf]
  %v157 = vld [vmem:[%s3 + $0x50] sm:$0xf]
  %v158 = vld [vmem:[%s3 + $0x54] sm:$0xf]
  %v159 = vld [vmem:[%s3 + $0x58] sm:$0xf]
  %v160 = vld [vmem:[%s3 + $0x5c] sm:$0xf]
  %v161 = vld [vmem:[%s3 + $0x60] sm:$0xf]
  %v162 = vld [vmem:[%s3 + $0x64] sm:$0xf]
  %v163 = vld [vmem:[%s3 + $0x68] sm:$0xf]
  %v164 = vld [vmem:[%s3 + $0x6c] sm:$0xf]
  %v165 = vld [vmem:[%s3 + $0x70] sm:$0xf]
  %v166 = vld [vmem:[%s3 + $0x74] sm:$0xf]
  %v167 = vld [vmem:[%s3 + $0x78] sm:$0xf]
  %v168 = vld [vmem:[%s3 + $0x7c] sm:$0xf]
  %v169 = vld [vmem:[%s5] sm:$0x1]
  %v171 = vlaneseq
  %v172 = vshrl.u32 %v171, 7
  %v173 = vsub.s32 0, %v172
  %v174 = vrot.slane %v169, %v173
  %v208 = vunpack.c.l.b16 %v137
  %v209 = vunpack.c.l.b16 %v138
  %v210 = vunpack.c.l.b16 %v139
  %v211 = vunpack.c.l.b16 %v140
  %v212 = vunpack.c.l.b16 %v141
  %v213 = vunpack.c.l.b16 %v142
  %v214 = vunpack.c.l.b16 %v143
  %v215 = vunpack.c.l.b16 %v144
  %v216 = vunpack.c.l.b16 %v145
  %v217 = vunpack.c.l.b16 %v146
  %v218 = vunpack.c.l.b16 %v147
  %v219 = vunpack.c.l.b16 %v148
  %v220 = vunpack.c.l.b16 %v149
  %v221 = vunpack.c.l.b16 %v150
  %v222 = vunpack.c.l.b16 %v151
  %v223 = vunpack.c.l.b16 %v152
  %v224 = vunpack.c.l.b16 %v153
  %v225 = vunpack.c.l.b16 %v154
  %v226 = vunpack.c.l.b16 %v155
  %v227 = vunpack.c.l.b16 %v156
  %v228 = vunpack.c.l.b16 %v157
  %v229 = vunpack.c.l.b16 %v158
  %v230 = vunpack.c.l.b16 %v159
  %v231 = vunpack.c.l.b16 %v160
  %v232 = vunpack.c.l.b16 %v161
  %v233 = vunpack.c.l.b16 %v162
  %v234 = vunpack.c.l.b16 %v163
  %v235 = vunpack.c.l.b16 %v164
  %v236 = vunpack.c.l.b16 %v165
  %v237 = vunpack.c.l.b16 %v166
  %v238 = vunpack.c.l.b16 %v167
  %v239 = vunpack.c.l.b16 %v168
  %v240 = vpack.c.b16 %v209, %v208
  %v241 = vpack.c.b16 %v211, %v210
  %v242 = vpack.c.b16 %v213, %v212
  %v243 = vpack.c.b16 %v215, %v214
  %v244 = vpack.c.b16 %v217, %v216
  %v245 = vpack.c.b16 %v219, %v218
  %v246 = vpack.c.b16 %v221, %v220
  %v247 = vpack.c.b16 %v223, %v222
  %v248 = vpack.c.b16 %v225, %v224
  %v249 = vpack.c.b16 %v227, %v226
  %v250 = vpack.c.b16 %v229, %v228
  %v251 = vpack.c.b16 %v231, %v230
  %v252 = vpack.c.b16 %v233, %v232
  %v253 = vpack.c.b16 %v235, %v234
  %v254 = vpack.c.b16 %v237, %v236
  %v255 = vpack.c.b16 %v239, %v238
  %272 = vmatprep.subr.bf16.mxu0 0
  %273 = vmatpush1.bf16.msra.mxu0 %v240
  %274 = vmatprep.subr.bf16.mxu0 0
  %275 = vmatpush1.bf16.msra.mxu0 %v241
  %276 = vmatprep.subr.bf16.mxu0 0
  %277 = vmatpush1.bf16.msra.mxu0 %v242
  %278 = vmatprep.subr.bf16.mxu0 0
  %279 = vmatpush1.bf16.msra.mxu0 %v243
  %280 = vmatprep.subr.bf16.mxu0 0
  %281 = vmatpush1.bf16.msra.mxu0 %v244
  %282 = vmatprep.subr.bf16.mxu0 0
  %283 = vmatpush1.bf16.msra.mxu0 %v245
  %284 = vmatprep.subr.bf16.mxu0 0
  %285 = vmatpush1.bf16.msra.mxu0 %v246
  %286 = vmatprep.subr.bf16.mxu0 0
  %287 = vmatpush1.bf16.msra.mxu0 %v247
  %288 = vmatprep.subr.bf16.mxu0 0
  %289 = vmatpush1.bf16.msra.mxu0 %v248
  %290 = vmatprep.subr.bf16.mxu0 0
  %291 = vmatpush1.bf16.msra.mxu0 %v249
  %292 = vmatprep.subr.bf16.mxu0 0
  %293 = vmatpush1.bf16.msra.mxu0 %v250
  %294 = vmatprep.subr.bf16.mxu0 0
  %295 = vmatpush1.bf16.msra.mxu0 %v251
  %296 = vmatprep.subr.bf16.mxu0 0
  %297 = vmatpush1.bf16.msra.mxu0 %v252
  %298 = vmatprep.subr.bf16.mxu0 0
  %299 = vmatpush1.bf16.msra.mxu0 %v253
  %300 = vmatprep.subr.bf16.mxu0 0
  %301 = vmatpush1.bf16.msra.mxu0 %v254
  %302 = vmatprep.subr.bf16.mxu0 0
  %303 = vmatpush1.bf16.msra.mxu0 %v255
  %304 = vmatprep.mubr.bf16.mxu0 %v130
  %305 = vmatmul.mubr.bf16.gmra.mrb[0].mxu0 %v129
  %v306 = vpop.f32.mrb[0].mxu0
  %v307 = vadd.f32 %v174, %v306
  %v308 = vpop.f32.mrb[0].mxu0
  %v309 = vpop.f32.mrb[0].mxu0
  %v310 = vadd.f32 %v174, %v309
  %v311 = vpop.f32.mrb[0].mxu0
  %312 = vmatprep.mubr.bf16.mxu0 %v132
  %313 = vmatmul.mubr.bf16.gmra.mrb[0].mxu0 %v131
  %v314 = vpop.f32.mrb[0].mxu0
  %v315 = vadd.f32 %v174, %v314
  %v316 = vpop.f32.mrb[0].mxu0
  %v317 = vpop.f32.mrb[0].mxu0
  %v318 = vadd.f32 %v174, %v317
  %v319 = vpop.f32.mrb[0].mxu0
  %320 = vmatprep.mubr.bf16.mxu0 %v134
  %321 = vmatmul.mubr.bf16.gmra.mrb[0].mxu0 %v133
  %v322 = vpop.f32.mrb[0].mxu0
  %v323 = vadd.f32 %v174, %v322
  %v324 = vpop.f32.mrb[0].mxu0
  %v325 = vpop.f32.mrb[0].mxu0
  %v326 = vadd.f32 %v174, %v325
  %v327 = vpop.f32.mrb[0].mxu0
  %328 = vmatprep.mubr.bf16.mxu0 %v136
  %329 = vmatmul.mubr.bf16.gmra.mrb[0].mxu0 %v135
  %v330 = vpop.f32.mrb[0].mxu0
  %v331 = vadd.f32 %v174, %v330
  %v332 = vpop.f32.mrb[0].mxu0
  %v333 = vpop.f32.mrb[0].mxu0
  %v334 = vadd.f32 %v174, %v333
  %v335 = vpop.f32.mrb[0].mxu0
  %336 = vdwg.mxu0
  %v337 = vld [vmem:[%s4] sm:$0xf]
  %v338 = vld [vmem:[%s4 + $0x4] sm:$0xf]
  %v339 = vld [vmem:[%s4 + $0x8] sm:$0xf]
  %v340 = vld [vmem:[%s4 + $0xc] sm:$0xf]
  %v341 = vld [vmem:[%s6] sm:$0xf]
  %v342 = vld [vmem:[%s6 + $0x4] sm:$0xf]
  %v343 = vld [vmem:[%s6 + $0x8] sm:$0xf]
  %v344 = vld [vmem:[%s6 + $0xc] sm:$0xf]
  %v345 = vld [vmem:[%s7] sm:$0xf]
  %v346 = vld [vmem:[%s7 + $0x4] sm:$0xf]
  %v347 = vld [vmem:[%s7 + $0x8] sm:$0xf]
  %v348 = vld [vmem:[%s7 + $0xc] sm:$0xf]
  %v349 = vld [vmem:[%s8] sm:$0x1]
  %v354 = vunpack.c.l.b16 %v337
  %v355 = vunpack.c.l.b16 %v338
  %v356 = vunpack.c.l.b16 %v339
  %v357 = vunpack.c.l.b16 %v340
  %v358 = vpack.c.b16 %v355, %v354
  %v359 = vpack.c.b16 %v357, %v356
  %vm362 = vcmask 261120
  %v364 = vsel %vm362, 0, 0
  %366 = vmatprep.subr.bf16.mxu0 0
  %367 = vmatpush1.bf16.msra.mxu0 %v358
  %368 = vmatprep.subr.bf16.mxu0 0
  %369 = vmatpush1.bf16.msra.mxu0 %v359
  %370 = vmatprep.subr.bf16.mxu0 0
  %371 = vmatpush1.bf16.msra.mxu0 0
  %372 = vmatprep.subr.bf16.mxu0 0
  %373 = vmatpush1.bf16.msra.mxu0 0
  %374 = vmatprep.subr.bf16.mxu0 0
  %375 = vmatpush1.bf16.msra.mxu0 0
  %376 = vmatprep.subr.bf16.mxu0 0
  %377 = vmatpush1.bf16.msra.mxu0 0
  %378 = vmatprep.subr.bf16.mxu0 0
  %379 = vmatpush1.bf16.msra.mxu0 0
  %380 = vmatprep.subr.bf16.mxu0 0
  %381 = vmatpush1.bf16.msra.mxu0 0
  %382 = vmatprep.subr.bf16.mxu0 0
  %383 = vmatpush1.bf16.msra.mxu0 0
  %384 = vmatprep.subr.bf16.mxu0 0
  %385 = vmatpush1.bf16.msra.mxu0 0
  %386 = vmatprep.subr.bf16.mxu0 0
  %387 = vmatpush1.bf16.msra.mxu0 0
  %388 = vmatprep.subr.bf16.mxu0 0
  %389 = vmatpush1.bf16.msra.mxu0 0
  %390 = vmatprep.subr.bf16.mxu0 0
  %391 = vmatpush1.bf16.msra.mxu0 0
  %392 = vmatprep.subr.bf16.mxu0 0
  %393 = vmatpush1.bf16.msra.mxu0 0
  %394 = vmatprep.subr.bf16.mxu0 0
  %395 = vmatpush1.bf16.msra.mxu0 0
  %396 = vmatprep.subr.bf16.mxu0 0
  %397 = vmatpush1.bf16.msra.mxu0 0
  %398 = vmatprep.mubr.bf16.mxu0 0
  %399 = vmatmul.mubr.bf16.gmra.mrb[0].mxu0 %v364
  %v400 = vpop.f32.mrb[0].mxu0
  %v401 = vadd.f32 %v307, %v400
  %v402 = vpop.f32.mrb[0].mxu0
  %v403 = vpop.f32.mrb[0].mxu0
  %v404 = vpop.f32.mrb[0].mxu0
  %405 = vdwg.mxu0
  %v406 = vxor.u32 %v401, 2147483648
  %v407 = vmul.f32 %v406, 1.442695
  %v408 = vpow.pop %v407
  %v409 = vadd.f32 %v408, 1.0
  %v410 = vrcp.pop %v409
  %v411 = vmul.f32 1.0, %v410
  %v412 = vmul.f32 %v411, 2.0
  %v413 = vsub.f32 %v412, 1.0
  %v414 = vmul.f32 %v411, 0.0
  %416 = vrot.lane.b32.xlu0 %v413, 64
  %v417 = vpop.permute.xlu0 %416
  %v419 = vmul.f32 %v411, %v417
  %421 = vrot.lane.b32.xlu0 %v419, 32
  %v422 = vpop.permute.xlu0 %421
  %v424 = vadd.f32 %v414, %v422
  %v425 = vtanh.pop %v424
  %427 = vrot.lane.b32.xlu0 %v425, 64
  %v428 = vpop.permute.xlu0 %427
  %v430 = vmul.f32 %v411, %v428
  %v431 = vpack.c.bf16 %v430, %v430
  %v433 = vlaneseq
  %v434 = vshrl.u32 %v433, 7
  %v435 = vsub.s32 0, %v434
  %v436 = vrot.slane %v349, %v435
  %439 = vrot.lane.b32.xlu0 %v431, 32
  %v440 = vpop.permute.xlu0 %439
  %v445 = vunpack.c.l.b16 %v341
  %v446 = vunpack.c.l.b16 %v342
  %v447 = vunpack.c.l.b16 %v343
  %v448 = vunpack.c.l.b16 %v344
  %v449 = vpack.c.b16 %v446, %v445
  %v450 = vpack.c.b16 %v448, %v447
  %v454 = vsel %vm362, %v440, 0
  %456 = vmatprep.subr.bf16.mxu0 0
  %457 = vmatpush1.bf16.msra.mxu0 %v449
  %458 = vmatprep.subr.bf16.mxu0 0
  %459 = vmatpush1.bf16.msra.mxu0 %v450
  %460 = vmatprep.subr.bf16.mxu0 0
  %461 = vmatpush1.bf16.msra.mxu0 0
  %462 = vmatprep.subr.bf16.mxu0 0
  %463 = vmatpush1.bf16.msra.mxu0 0
  %464 = vmatprep.subr.bf16.mxu0 0
  %465 = vmatpush1.bf16.msra.mxu0 0
  %466 = vmatprep.subr.bf16.mxu0 0
  %467 = vmatpush1.bf16.msra.mxu0 0
  %468 = vmatprep.subr.bf16.mxu0 0
  %469 = vmatpush1.bf16.msra.mxu0 0
  %470 = vmatprep.subr.bf16.mxu0 0
  %471 = vmatpush1.bf16.msra.mxu0 0
  %472 = vmatprep.subr.bf16.mxu0 0
  %473 = vmatpush1.bf16.msra.mxu0 0
  %474 = vmatprep.subr.bf16.mxu0 0
  %475 = vmatpush1.bf16.msra.mxu0 0
  %476 = vmatprep.subr.bf16.mxu0 0
  %477 = vmatpush1.bf16.msra.mxu0 0
  %478 = vmatprep.subr.bf16.mxu0 0
  %479 = vmatpush1.bf16.msra.mxu0 0
  %480 = vmatprep.subr.bf16.mxu0 0
  %481 = vmatpush1.bf16.msra.mxu0 0
  %482 = vmatprep.subr.bf16.mxu0 0
  %483 = vmatpush1.bf16.msra.mxu0 0
  %484 = vmatprep.subr.bf16.mxu0 0
  %485 = vmatpush1.bf16.msra.mxu0 0
  %486 = vmatprep.subr.bf16.mxu0 0
  %487 = vmatpush1.bf16.msra.mxu0 0
  %488 = vmatprep.mubr.bf16.mxu0 0
  %489 = vmatmul.mubr.bf16.gmra.mrb[0].mxu0 %v454
  %v490 = vpop.f32.mrb[0].mxu0
  %v491 = vadd.f32 %v436, %v490
  %v492 = vpop.f32.mrb[0].mxu0
  %v493 = vpop.f32.mrb[0].mxu0
  %v494 = vpop.f32.mrb[0].mxu0
  %495 = vdwg.mxu0
  %v500 = vunpack.c.l.b16 %v345
  %v501 = vunpack.c.l.b16 %v346
  %v502 = vunpack.c.l.b16 %v347
  %v503 = vunpack.c.l.b16 %v348
  %v504 = vpack.c.b16 %v501, %v500
  %v505 = vpack.c.b16 %v503, %v502
  %508 = vmatprep.subr.bf16.mxu0 0
  %509 = vmatpush1.bf16.msra.mxu0 %v504
  %510 = vmatprep.subr.bf16.mxu0 0
  %511 = vmatpush1.bf16.msra.mxu0 %v505
  %512 = vmatprep.subr.bf16.mxu0 0
  %513 = vmatpush1.bf16.msra.mxu0 0
  %514 = vmatprep.subr.bf16.mxu0 0
  %515 = vmatpush1.bf16.msra.mxu0 0
  %516 = vmatprep.subr.bf16.mxu0 0
  %517 = vmatpush1.bf16.msra.mxu0 0
  %518 = vmatprep.subr.bf16.mxu0 0
  %519 = vmatpush1.bf16.msra.mxu0 0
  %520 = vmatprep.subr.bf16.mxu0 0
  %521 = vmatpush1.bf16.msra.mxu0 0
  %522 = vmatprep.subr.bf16.mxu0 0
  %523 = vmatpush1.bf16.msra.mxu0 0
  %524 = vmatprep.subr.bf16.mxu0 0
  %525 = vmatpush1.bf16.msra.mxu0 0
  %526 = vmatprep.subr.bf16.mxu0 0
  %527 = vmatpush1.bf16.msra.mxu0 0
  %528 = vmatprep.subr.bf16.mxu0 0
  %529 = vmatpush1.bf16.msra.mxu0 0
  %530 = vmatprep.subr.bf16.mxu0 0
  %531 = vmatpush1.bf16.msra.mxu0 0
  %532 = vmatprep.subr.bf16.mxu0 0
  %533 = vmatpush1.bf16.msra.mxu0 0
  %534 = vmatprep.subr.bf16.mxu0 0
  %535 = vmatpush1.bf16.msra.mxu0 0
  %536 = vmatprep.subr.bf16.mxu0 0
  %537 = vmatpush1.bf16.msra.mxu0 0
  %538 = vmatprep.subr.bf16.mxu0 0
  %539 = vmatpush1.bf16.msra.mxu0 0
  %540 = vmatprep.mubr.bf16.mxu0 0
  %541 = vmatmul.mubr.bf16.gmra.mrb[0].mxu0 %v364
  %v542 = vpop.f32.mrb[0].mxu0
  %v543 = vadd.f32 %v491, %v542
  %v544 = vpop.f32.mrb[0].mxu0
  %v545 = vpop.f32.mrb[0].mxu0
  %v546 = vpop.f32.mrb[0].mxu0
  %547 = vdwg.mxu0
  %v548 = vxor.u32 %v543, 2147483648
  %v549 = vmul.f32 %v548, 1.442695
  %v550 = vpow.pop %v549
  %v551 = vadd.f32 %v550, 1.0
  %v552 = vrcp.pop %v551
  %v553 = vmul.f32 1.0, %v552
  %v554 = vmul.f32 %v553, 2.0
  %v555 = vsub.f32 %v554, 1.0
  %v556 = vmul.f32 %v553, 0.0
  %558 = vrot.lane.b32.xlu0 %v555, 64
  %v559 = vpop.permute.xlu0 %558
  %v561 = vmul.f32 %v553, %v559
  %563 = vrot.lane.b32.xlu0 %v561, 32
  %v564 = vpop.permute.xlu0 %563
  %v566 = vadd.f32 %v556, %v564
  %v567 = vtanh.pop %v566
  %569 = vrot.lane.b32.xlu0 %v567, 64
  %v570 = vpop.permute.xlu0 %569
  %v572 = vmul.f32 %v553, %v570
  %v573 = vadd.f32 %v572, 0.0
  %574 = vmatprep.subr.bf16.mxu0 0
  %575 = vmatpush1.bf16.msra.mxu0 %v358
  %576 = vmatprep.subr.bf16.mxu0 0
  %577 = vmatpush1.bf16.msra.mxu0 %v359
  %578 = vmatprep.subr.bf16.mxu0 0
  %579 = vmatpush1.bf16.msra.mxu0 0
  %580 = vmatprep.subr.bf16.mxu0 0
  %581 = vmatpush1.bf16.msra.mxu0 0
  %582 = vmatprep.subr.bf16.mxu0 0
  %583 = vmatpush1.bf16.msra.mxu0 0
  %584 = vmatprep.subr.bf16.mxu0 0
  %585 = vmatpush1.bf16.msra.mxu0 0
  %586 = vmatprep.subr.bf16.mxu0 0
  %587 = vmatpush1.bf16.msra.mxu0 0
  %588 = vmatprep.subr.bf16.mxu0 0
  %589 = vmatpush1.bf16.msra.mxu0 0
  %590 = vmatprep.subr.bf16.mxu0 0
  %591 = vmatpush1.bf16.msra.mxu0 0
  %592 = vmatprep.subr.bf16.mxu0 0
  %593 = vmatpush1.bf16.msra.mxu0 0
  %594 = vmatprep.subr.bf16.mxu0 0
  %595 = vmatpush1.bf16.msra.mxu0 0
  %596 = vmatprep.subr.bf16.mxu0 0
  %597 = vmatpush1.bf16.msra.mxu0 0
  %598 = vmatprep.subr.bf16.mxu0 0
  %599 = vmatpush1.bf16.msra.mxu0 0
  %600 = vmatprep.subr.bf16.mxu0 0
  %601 = vmatpush1.bf16.msra.mxu0 0
  %602 = vmatprep.subr.bf16.mxu0 0
  %603 = vmatpush1.bf16.msra.mxu0 0
  %604 = vmatprep.subr.bf16.mxu0 0
  %605 = vmatpush1.bf16.msra.mxu0 0
  %606 = vmatprep.mubr.bf16.mxu0 0
  %607 = vmatmul.mubr.bf16.gmra.mrb[0].mxu0 %v454
  %v608 = vpop.f32.mrb[0].mxu0
  %v609 = vadd.f32 %v310, %v608
  %v610 = vpop.f32.mrb[0].mxu0
  %v611 = vpop.f32.mrb[0].mxu0
  %v612 = vpop.f32.mrb[0].mxu0
  %613 = vdwg.mxu0
  %v614 = vxor.u32 %v609, 2147483648
  %v615 = vmul.f32 %v614, 1.442695
  %v616 = vpow.pop %v615
  %v617 = vadd.f32 %v616, 1.0
  %v618 = vrcp.pop %v617
  %v619 = vmul.f32 1.0, %v618
  %v620 = vmul.f32 %v619, 2.0
  %v621 = vsub.f32 %v620, 1.0
  %v622 = vmul.f32 %v619, %v424
  %624 = vrot.lane.b32.xlu0 %v621, 64
  %v625 = vpop.permute.xlu0 %624
  %v627 = vmul.f32 %v619, %v625
  %629 = vrot.lane.b32.xlu0 %v627, 32
  %v630 = vpop.permute.xlu0 %629
  %v632 = vadd.f32 %v622, %v630
  %v633 = vtanh.pop %v632
  %635 = vrot.lane.b32.xlu0 %v633, 64
  %v636 = vpop.permute.xlu0 %635
  %v638 = vmul.f32 %v619, %v636
  %v639 = vpack.c.bf16 %v638, %v638
  %641 = vrot.lane.b32.xlu0 %v639, 32
  %v642 = vpop.permute.xlu0 %641
  %v644 = vsel %vm362, %v642, 0
  %646 = vmatprep.subr.bf16.mxu0 0
  %647 = vmatpush1.bf16.msra.mxu0 %v449
  %648 = vmatprep.subr.bf16.mxu0 0
  %649 = vmatpush1.bf16.msra.mxu0 %v450
  %650 = vmatprep.subr.bf16.mxu0 0
  %651 = vmatpush1.bf16.msra.mxu0 0
  %652 = vmatprep.subr.bf16.mxu0 0
  %653 = vmatpush1.bf16.msra.mxu0 0
  %654 = vmatprep.subr.bf16.mxu0 0
  %655 = vmatpush1.bf16.msra.mxu0 0
  %656 = vmatprep.subr.bf16.mxu0 0
  %657 = vmatpush1.bf16.msra.mxu0 0
  %658 = vmatprep.subr.bf16.mxu0 0
  %659 = vmatpush1.bf16.msra.mxu0 0
  %660 = vmatprep.subr.bf16.mxu0 0
  %661 = vmatpush1.bf16.msra.mxu0 0
  %662 = vmatprep.subr.bf16.mxu0 0
  %663 = vmatpush1.bf16.msra.mxu0 0
  %664 = vmatprep.subr.bf16.mxu0 0
  %665 = vmatpush1.bf16.msra.mxu0 0
  %666 = vmatprep.subr.bf16.mxu0 0
  %667 = vmatpush1.bf16.msra.mxu0 0
  %668 = vmatprep.subr.bf16.mxu0 0
  %669 = vmatpush1.bf16.msra.mxu0 0
  %670 = vmatprep.subr.bf16.mxu0 0
  %671 = vmatpush1.bf16.msra.mxu0 0
  %672 = vmatprep.subr.bf16.mxu0 0
  %673 = vmatpush1.bf16.msra.mxu0 0
  %674 = vmatprep.subr.bf16.mxu0 0
  %675 = vmatpush1.bf16.msra.mxu0 0
  %676 = vmatprep.subr.bf16.mxu0 0
  %677 = vmatpush1.bf16.msra.mxu0 0
  %678 = vmatprep.mubr.bf16.mxu0 0
  %679 = vmatmul.mubr.bf16.gmra.mrb[0].mxu0 %v644
  %v680 = vpop.f32.mrb[0].mxu0
  %v681 = vadd.f32 %v436, %v680
  %v682 = vpop.f32.mrb[0].mxu0
  %v683 = vpop.f32.mrb[0].mxu0
  %v684 = vpop.f32.mrb[0].mxu0
  %685 = vdwg.mxu0
  %v686 = vpack.c.bf16 %v572, %v572
  %688 = vrot.lane.b32.xlu0 %v686, 32
  %v689 = vpop.permute.xlu0 %688
  %v691 = vsel %vm362, %v689, 0
  %693 = vmatprep.subr.bf16.mxu0 0
  %694 = vmatpush1.bf16.msra.mxu0 %v504
  %695 = vmatprep.subr.bf16.mxu0 0
  %696 = vmatpush1.bf16.msra.mxu0 %v505
  %697 = vmatprep.subr.bf16.mxu0 0
  %698 = vmatpush1.bf16.msra.mxu0 0
  %699 = vmatprep.subr.bf16.mxu0 0
  %700 = vmatpush1.bf16.msra.mxu0 0
  %701 = vmatprep.subr.bf16.mxu0 0
  %702 = vmatpush1.bf16.msra.mxu0 0
  %703 = vmatprep.subr.bf16.mxu0 0
  %704 = vmatpush1.bf16.msra.mxu0 0
  %705 = vmatprep.subr.bf16.mxu0 0
  %706 = vmatpush1.bf16.msra.mxu0 0
  %707 = vmatprep.subr.bf16.mxu0 0
  %708 = vmatpush1.bf16.msra.mxu0 0
  %709 = vmatprep.subr.bf16.mxu0 0
  %710 = vmatpush1.bf16.msra.mxu0 0
  %711 = vmatprep.subr.bf16.mxu0 0
  %712 = vmatpush1.bf16.msra.mxu0 0
  %713 = vmatprep.subr.bf16.mxu0 0
  %714 = vmatpush1.bf16.msra.mxu0 0
  %715 = vmatprep.subr.bf16.mxu0 0
  %716 = vmatpush1.bf16.msra.mxu0 0
  %717 = vmatprep.subr.bf16.mxu0 0
  %718 = vmatpush1.bf16.msra.mxu0 0
  %719 = vmatprep.subr.bf16.mxu0 0
  %720 = vmatpush1.bf16.msra.mxu0 0
  %721 = vmatprep.subr.bf16.mxu0 0
  %722 = vmatpush1.bf16.msra.mxu0 0
  %723 = vmatprep.subr.bf16.mxu0 0
  %724 = vmatpush1.bf16.msra.mxu0 0
  %725 = vmatprep.mubr.bf16.mxu0 0
  %726 = vmatmul.mubr.bf16.gmra.mrb[0].mxu0 %v691
  %v727 = vpop.f32.mrb[0].mxu0
  %v728 = vadd.f32 %v681, %v727
  %v729 = vpop.f32.mrb[0].mxu0
  %v730 = vpop.f32.mrb[0].mxu0
  %v731 = vpop.f32.mrb[0].mxu0
  %732 = vdwg.mxu0
  %v733 = vxor.u32 %v728, 2147483648
  %v734 = vmul.f32 %v733, 1.442695
  %v735 = vpow.pop %v734
  %v736 = vadd.f32 %v735, 1.0
  %v737 = vrcp.pop %v736
  %v738 = vmul.f32 1.0, %v737
  %v739 = vmul.f32 %v738, 2.0
  %v740 = vsub.f32 %v739, 1.0
  %v741 = vmul.f32 %v738, %v566
  %743 = vrot.lane.b32.xlu0 %v740, 64
  %v744 = vpop.permute.xlu0 %743
  %v746 = vmul.f32 %v738, %v744
  %748 = vrot.lane.b32.xlu0 %v746, 32
  %v749 = vpop.permute.xlu0 %748
  %v751 = vadd.f32 %v741, %v749
  %v752 = vtanh.pop %v751
  %754 = vrot.lane.b32.xlu0 %v752, 64
  %v755 = vpop.permute.xlu0 %754
  %v757 = vmul.f32 %v738, %v755
  %v758 = vadd.f32 %v573, %v757
  %759 = vmatprep.subr.bf16.mxu0 0
  %760 = vmatpush1.bf16.msra.mxu0 %v358
  %761 = vmatprep.subr.bf16.mxu0 0
  %762 = vmatpush1.bf16.msra.mxu0 %v359
  %763 = vmatprep.subr.bf16.mxu0 0
  %764 = vmatpush1.bf16.msra.mxu0 0
  %765 = vmatprep.subr.bf16.mxu0 0
  %766 = vmatpush1.bf16.msra.mxu0 0
  %767 = vmatprep.subr.bf16.mxu0 0
  %768 = vmatpush1.bf16.msra.mxu0 0
  %769 = vmatprep.subr.bf16.mxu0 0
  %770 = vmatpush1.bf16.msra.mxu0 0
  %771 = vmatprep.subr.bf16.mxu0 0
  %772 = vmatpush1.bf16.msra.mxu0 0
  %773 = vmatprep.subr.bf16.mxu0 0
  %774 = vmatpush1.bf16.msra.mxu0 0
  %775 = vmatprep.subr.bf16.mxu0 0
  %776 = vmatpush1.bf16.msra.mxu0 0
  %777 = vmatprep.subr.bf16.mxu0 0
  %778 = vmatpush1.bf16.msra.mxu0 0
  %779 = vmatprep.subr.bf16.mxu0 0
  %780 = vmatpush1.bf16.msra.mxu0 0
  %781 = vmatprep.subr.bf16.mxu0 0
  %782 = vmatpush1.bf16.msra.mxu0 0
  %783 = vmatprep.subr.bf16.mxu0 0
  %784 = vmatpush1.bf16.msra.mxu0 0
  %785 = vmatprep.subr.bf16.mxu0 0
  %786 = vmatpush1.bf16.msra.mxu0 0
  %787 = vmatprep.subr.bf16.mxu0 0
  %788 = vmatpush1.bf16.msra.mxu0 0
  %789 = vmatprep.subr.bf16.mxu0 0
  %790 = vmatpush1.bf16.msra.mxu0 0
  %791 = vmatprep.mubr.bf16.mxu0 0
  %792 = vmatmul.mubr.bf16.gmra.mrb[0].mxu0 %v644
  %v793 = vpop.f32.mrb[0].mxu0
  %v794 = vadd.f32 %v315, %v793
  %v795 = vpop.f32.mrb[0].mxu0
  %v796 = vpop.f32.mrb[0].mxu0
  %v797 = vpop.f32.mrb[0].mxu0
  %798 = vdwg.mxu0
  %v799 = vxor.u32 %v794, 2147483648
  %v800 = vmul.f32 %v799, 1.442695
  %v801 = vpow.pop %v800
  %v802 = vadd.f32 %v801, 1.0
  %v803 = vrcp.pop %v802
  %v804 = vmul.f32 1.0, %v803
  %v805 = vmul.f32 %v804, 2.0
  %v806 = vsub.f32 %v805, 1.0
  %v807 = vmul.f32 %v804, %v632
  %809 = vrot.lane.b32.xlu0 %v806, 64
  %v810 = vpop.permute.xlu0 %809
  %v812 = vmul.f32 %v804, %v810
  %814 = vrot.lane.b32.xlu0 %v812, 32
  %v815 = vpop.permute.xlu0 %814
  %v817 = vadd.f32 %v807, %v815
  %v818 = vtanh.pop %v817
  %820 = vrot.lane.b32.xlu0 %v818, 64
  %v821 = vpop.permute.xlu0 %820
  %v823 = vmul.f32 %v804, %v821
  %v824 = vpack.c.bf16 %v823, %v823
  %826 = vrot.lane.b32.xlu0 %v824, 32
  %v827 = vpop.permute.xlu0 %826
  %v829 = vsel %vm362, %v827, 0
  %831 = vmatprep.subr.bf16.mxu0 0
  %832 = vmatpush1.bf16.msra.mxu0 %v449
  %833 = vmatprep.subr.bf16.mxu0 0
  %834 = vmatpush1.bf16.msra.mxu0 %v450
  %835 = vmatprep.subr.bf16.mxu0 0
  %836 = vmatpush1.bf16.msra.mxu0 0
  %837 = vmatprep.subr.bf16.mxu0 0
  %838 = vmatpush1.bf16.msra.mxu0 0
  %839 = vmatprep.subr.bf16.mxu0 0
  %840 = vmatpush1.bf16.msra.mxu0 0
  %841 = vmatprep.subr.bf16.mxu0 0
  %842 = vmatpush1.bf16.msra.mxu0 0
  %843 = vmatprep.subr.bf16.mxu0 0
  %844 = vmatpush1.bf16.msra.mxu0 0
  %845 = vmatprep.subr.bf16.mxu0 0
  %846 = vmatpush1.bf16.msra.mxu0 0
  %847 = vmatprep.subr.bf16.mxu0 0
  %848 = vmatpush1.bf16.msra.mxu0 0
  %849 = vmatprep.subr.bf16.mxu0 0
  %850 = vmatpush1.bf16.msra.mxu0 0
  %851 = vmatprep.subr.bf16.mxu0 0
  %852 = vmatpush1.bf16.msra.mxu0 0
  %853 = vmatprep.subr.bf16.mxu0 0
  %854 = vmatpush1.bf16.msra.mxu0 0
  %855 = vmatprep.subr.bf16.mxu0 0
  %856 = vmatpush1.bf16.msra.mxu0 0
  %857 = vmatprep.subr.bf16.mxu0 0
  %858 = vmatpush1.bf16.msra.mxu0 0
  %859 = vmatprep.subr.bf16.mxu0 0
  %860 = vmatpush1.bf16.msra.mxu0 0
  %861 = vmatprep.subr.bf16.mxu0 0
  %862 = vmatpush1.bf16.msra.mxu0 0
  %863 = vmatprep.mubr.bf16.mxu0 0
  %864 = vmatmul.mubr.bf16.gmra.mrb[0].mxu0 %v829
  %v865 = vpop.f32.mrb[0].mxu0
  %v866 = vadd.f32 %v436, %v865
  %v867 = vpop.f32.mrb[0].mxu0
  %v868 = vpop.f32.mrb[0].mxu0
  %v869 = vpop.f32.mrb[0].mxu0
  %870 = vdwg.mxu0
  %v871 = vpack.c.bf16 %v757, %v757
  %873 = vrot.lane.b32.xlu0 %v871, 32
  %v874 = vpop.permute.xlu0 %873
  %v876 = vsel %vm362, %v874, 0
  %878 = vmatprep.subr.bf16.mxu0 0
  %879 = vmatpush1.bf16.msra.mxu0 %v504
  %880 = vmatprep.subr.bf16.mxu0 0
  %881 = vmatpush1.bf16.msra.mxu0 %v505
  %882 = vmatprep.subr.bf16.mxu0 0
  %883 = vmatpush1.bf16.msra.mxu0 0
  %884 = vmatprep.subr.bf16.mxu0 0
  %885 = vmatpush1.bf16.msra.mxu0 0
  %886 = vmatprep.subr.bf16.mxu0 0
  %887 = vmatpush1.bf16.msra.mxu0 0
  %888 = vmatprep.subr.bf16.mxu0 0
  %889 = vmatpush1.bf16.msra.mxu0 0
  %890 = vmatprep.subr.bf16.mxu0 0
  %891 = vmatpush1.bf16.msra.mxu0 0
  %892 = vmatprep.subr.bf16.mxu0 0
  %893 = vmatpush1.bf16.msra.mxu0 0
  %894 = vmatprep.subr.bf16.mxu0 0
  %895 = vmatpush1.bf16.msra.mxu0 0
  %896 = vmatprep.subr.bf16.mxu0 0
  %897 = vmatpush1.bf16.msra.mxu0 0
  %898 = vmatprep.subr.bf16.mxu0 0
  %899 = vmatpush1.bf16.msra.mxu0 0
  %900 = vmatprep.subr.bf16.mxu0 0
  %901 = vmatpush1.bf16.msra.mxu0 0
  %902 = vmatprep.subr.bf16.mxu0 0
  %903 = vmatpush1.bf16.msra.mxu0 0
  %904 = vmatprep.subr.bf16.mxu0 0
  %905 = vmatpush1.bf16.msra.mxu0 0
  %906 = vmatprep.subr.bf16.mxu0 0
  %907 = vmatpush1.bf16.msra.mxu0 0
  %908 = vmatprep.subr.bf16.mxu0 0
  %909 = vmatpush1.bf16.msra.mxu0 0
  %910 = vmatprep.mubr.bf16.mxu0 0
  %911 = vmatmul.mubr.bf16.gmra.mrb[0].mxu0 %v876
  %v912 = vpop.f32.mrb[0].mxu0
  %v913 = vadd.f32 %v866, %v912
  %v914 = vpop.f32.mrb[0].mxu0
  %v915 = vpop.f32.mrb[0].mxu0
  %v916 = vpop.f32.mrb[0].mxu0
  %917 = vdwg.mxu0
  %v918 = vxor.u32 %v913, 2147483648
  %v919 = vmul.f32 %v918, 1.442695
  %v920 = vpow.pop %v919
  %v921 = vadd.f32 %v920, 1.0
  %v922 = vrcp.pop %v921
  %v923 = vmul.f32 1.0, %v922
  %v924 = vmul.f32 %v923, 2.0
  %v925 = vsub.f32 %v924, 1.0
  %v926 = vmul.f32 %v923, %v751
  %928 = vrot.lane.b32.xlu0 %v925, 64
  %v929 = vpop.permute.xlu0 %928
  %v931 = vmul.f32 %v923, %v929
  %933 = vrot.lane.b32.xlu0 %v931, 32
  %v934 = vpop.permute.xlu0 %933
  %v936 = vadd.f32 %v926, %v934
  %v937 = vtanh.pop %v936
  %939 = vrot.lane.b32.xlu0 %v937, 64
  %v940 = vpop.permute.xlu0 %939
  %v942 = vmul.f32 %v923, %v940
  %v943 = vadd.f32 %v758, %v942
  %944 = vmatprep.subr.bf16.mxu0 0
  %945 = vmatpush1.bf16.msra.mxu0 %v358
  %946 = vmatprep.subr.bf16.mxu0 0
  %947 = vmatpush1.bf16.msra.mxu0 %v359
  %948 = vmatprep.subr.bf16.mxu0 0
  %949 = vmatpush1.bf16.msra.mxu0 0
  %950 = vmatprep.subr.bf16.mxu0 0
  %951 = vmatpush1.bf16.msra.mxu0 0
  %952 = vmatprep.subr.bf16.mxu0 0
  %953 = vmatpush1.bf16.msra.mxu0 0
  %954 = vmatprep.subr.bf16.mxu0 0
  %955 = vmatpush1.bf16.msra.mxu0 0
  %956 = vmatprep.subr.bf16.mxu0 0
  %957 = vmatpush1.bf16.msra.mxu0 0
  %958 = vmatprep.subr.bf16.mxu0 0
  %959 = vmatpush1.bf16.msra.mxu0 0
  %960 = vmatprep.subr.bf16.mxu0 0
  %961 = vmatpush1.bf16.msra.mxu0 0
  %962 = vmatprep.subr.bf16.mxu0 0
  %963 = vmatpush1.bf16.msra.mxu0 0
  %964 = vmatprep.subr.bf16.mxu0 0
  %965 = vmatpush1.bf16.msra.mxu0 0
  %966 = vmatprep.subr.bf16.mxu0 0
  %967 = vmatpush1.bf16.msra.mxu0 0
  %968 = vmatprep.subr.bf16.mxu0 0
  %969 = vmatpush1.bf16.msra.mxu0 0
  %970 = vmatprep.subr.bf16.mxu0 0
  %971 = vmatpush1.bf16.msra.mxu0 0
  %972 = vmatprep.subr.bf16.mxu0 0
  %973 = vmatpush1.bf16.msra.mxu0 0
  %974 = vmatprep.subr.bf16.mxu0 0
  %975 = vmatpush1.bf16.msra.mxu0 0
  %976 = vmatprep.mubr.bf16.mxu0 0
  %977 = vmatmul.mubr.bf16.gmra.mrb[0].mxu0 %v829
  %v978 = vpop.f32.mrb[0].mxu0
  %v979 = vadd.f32 %v318, %v978
  %v980 = vpop.f32.mrb[0].mxu0
  %v981 = vpop.f32.mrb[0].mxu0
  %v982 = vpop.f32.mrb[0].mxu0
  %983 = vdwg.mxu0
  %v984 = vxor.u32 %v979, 2147483648
  %v985 = vmul.f32 %v984, 1.442695
  %v986 = vpow.pop %v985
  %v987 = vadd.f32 %v986, 1.0
  %v988 = vrcp.pop %v987
  %v989 = vmul.f32 1.0, %v988
  %v990 = vmul.f32 %v989, 2.0
  %v991 = vsub.f32 %v990, 1.0
  %v992 = vmul.f32 %v989, %v817
  %994 = vrot.lane.b32.xlu0 %v991, 64
  %v995 = vpop.permute.xlu0 %994
  %v997 = vmul.f32 %v989, %v995
  %999 = vrot.lane.b32.xlu0 %v997, 32
  %v1000 = vpop.permute.xlu0 %999
  %v1002 = vadd.f32 %v992, %v1000
  %v1003 = vtanh.pop %v1002
  %1005 = vrot.lane.b32.xlu0 %v1003, 64
  %v1006 = vpop.permute.xlu0 %1005
  %v1008 = vmul.f32 %v989, %v1006
  %v1009 = vpack.c.bf16 %v1008, %v1008
  %1011 = vrot.lane.b32.xlu0 %v1009, 32
  %v1012 = vpop.permute.xlu0 %1011
  %v1014 = vsel %vm362, %v1012, 0
  %1016 = vmatprep.subr.bf16.mxu0 0
  %1017 = vmatpush1.bf16.msra.mxu0 %v449
  %1018 = vmatprep.subr.bf16.mxu0 0
  %1019 = vmatpush1.bf16.msra.mxu0 %v450
  %1020 = vmatprep.subr.bf16.mxu0 0
  %1021 = vmatpush1.bf16.msra.mxu0 0
  %1022 = vmatprep.subr.bf16.mxu0 0
  %1023 = vmatpush1.bf16.msra.mxu0 0
  %1024 = vmatprep.subr.bf16.mxu0 0
  %1025 = vmatpush1.bf16.msra.mxu0 0
  %1026 = vmatprep.subr.bf16.mxu0 0
  %1027 = vmatpush1.bf16.msra.mxu0 0
  %1028 = vmatprep.subr.bf16.mxu0 0
  %1029 = vmatpush1.bf16.msra.mxu0 0
  %1030 = vmatprep.subr.bf16.mxu0 0
  %1031 = vmatpush1.bf16.msra.mxu0 0
  %1032 = vmatprep.subr.bf16.mxu0 0
  %1033 = vmatpush1.bf16.msra.mxu0 0
  %1034 = vmatprep.subr.bf16.mxu0 0
  %1035 = vmatpush1.bf16.msra.mxu0 0
  %1036 = vmatprep.subr.bf16.mxu0 0
  %1037 = vmatpush1.bf16.msra.mxu0 0
  %1038 = vmatprep.subr.bf16.mxu0 0
  %1039 = vmatpush1.bf16.msra.mxu0 0
  %1040 = vmatprep.subr.bf16.mxu0 0
  %1041 = vmatpush1.bf16.msra.mxu0 0
  %1042 = vmatprep.subr.bf16.mxu0 0
  %1043 = vmatpush1.bf16.msra.mxu0 0
  %1044 = vmatprep.subr.bf16.mxu0 0
  %1045 = vmatpush1.bf16.msra.mxu0 0
  %1046 = vmatprep.subr.bf16.mxu0 0
  %1047 = vmatpush1.bf16.msra.mxu0 0
  %1048 = vmatprep.mubr.bf16.mxu0 0
  %1049 = vmatmul.mubr.bf16.gmra.mrb[0].mxu0 %v1014
  %v1050 = vpop.f32.mrb[0].mxu0
  %v1051 = vadd.f32 %v436, %v1050
  %v1052 = vpop.f32.mrb[0].mxu0
  %v1053 = vpop.f32.mrb[0].mxu0
  %v1054 = vpop.f32.mrb[0].mxu0
  %1055 = vdwg.mxu0
  %v1056 = vpack.c.bf16 %v942, %v942
  %1058 = vrot.lane.b32.xlu0 %v1056, 32
  %v1059 = vpop.permute.xlu0 %1058
  %v1061 = vsel %vm362, %v1059, 0
  %1063 = vmatprep.subr.bf16.mxu0 0
  %1064 = vmatpush1.bf16.msra.mxu0 %v504
  %1065 = vmatprep.subr.bf16.mxu0 0
  %1066 = vmatpush1.bf16.msra.mxu0 %v505
  %1067 = vmatprep.subr.bf16.mxu0 0
  %1068 = vmatpush1.bf16.msra.mxu0 0
  %1069 = vmatprep.subr.bf16.mxu0 0
  %1070 = vmatpush1.bf16.msra.mxu0 0
  %1071 = vmatprep.subr.bf16.mxu0 0
  %1072 = vmatpush1.bf16.msra.mxu0 0
  %1073 = vmatprep.subr.bf16.mxu0 0
  %1074 = vmatpush1.bf16.msra.mxu0 0
  %1075 = vmatprep.subr.bf16.mxu0 0
  %1076 = vmatpush1.bf16.msra.mxu0 0
  %1077 = vmatprep.subr.bf16.mxu0 0
  %1078 = vmatpush1.bf16.msra.mxu0 0
  %1079 = vmatprep.subr.bf16.mxu0 0
  %1080 = vmatpush1.bf16.msra.mxu0 0
  %1081 = vmatprep.subr.bf16.mxu0 0
  %1082 = vmatpush1.bf16.msra.mxu0 0
  %1083 = vmatprep.subr.bf16.mxu0 0
  %1084 = vmatpush1.bf16.msra.mxu0 0
  %1085 = vmatprep.subr.bf16.mxu0 0
  %1086 = vmatpush1.bf16.msra.mxu0 0
  %1087 = vmatprep.subr.bf16.mxu0 0
  %1088 = vmatpush1.bf16.msra.mxu0 0
  %1089 = vmatprep.subr.bf16.mxu0 0
  %1090 = vmatpush1.bf16.msra.mxu0 0
  %1091 = vmatprep.subr.bf16.mxu0 0
  %1092 = vmatpush1.bf16.msra.mxu0 0
  %1093 = vmatprep.subr.bf16.mxu0 0
  %1094 = vmatpush1.bf16.msra.mxu0 0
  %1095 = vmatprep.mubr.bf16.mxu0 0
  %1096 = vmatmul.mubr.bf16.gmra.mrb[0].mxu0 %v1061
  %v1097 = vpop.f32.mrb[0].mxu0
  %v1098 = vadd.f32 %v1051, %v1097
  %v1099 = vpop.f32.mrb[0].mxu0
  %v1100 = vpop.f32.mrb[0].mxu0
  %v1101 = vpop.f32.mrb[0].mxu0
  %1102 = vdwg.mxu0
  %v1103 = vxor.u32 %v1098, 2147483648
  %v1104 = vmul.f32 %v1103, 1.442695
  %v1105 = vpow.pop %v1104
  %v1106 = vadd.f32 %v1105, 1.0
  %v1107 = vrcp.pop %v1106
  %v1108 = vmul.f32 1.0, %v1107
  %v1109 = vmul.f32 %v1108, 2.0
  %v1110 = vsub.f32 %v1109, 1.0
  %v1111 = vmul.f32 %v1108, %v936
  %1113 = vrot.lane.b32.xlu0 %v1110, 64
  %v1114 = vpop.permute.xlu0 %1113
  %v1116 = vmul.f32 %v1108, %v1114
  %1118 = vrot.lane.b32.xlu0 %v1116, 32
  %v1119 = vpop.permute.xlu0 %1118
  %v1121 = vadd.f32 %v1111, %v1119
  %v1122 = vtanh.pop %v1121
  %1124 = vrot.lane.b32.xlu0 %v1122, 64
  %v1125 = vpop.permute.xlu0 %1124
  %v1127 = vmul.f32 %v1108, %v1125
  %v1128 = vadd.f32 %v943, %v1127
  %1129 = vmatprep.subr.bf16.mxu0 0
  %1130 = vmatpush1.bf16.msra.mxu0 %v358
  %1131 = vmatprep.subr.bf16.mxu0 0
  %1132 = vmatpush1.bf16.msra.mxu0 %v359
  %1133 = vmatprep.subr.bf16.mxu0 0
  %1134 = vmatpush1.bf16.msra.mxu0 0
  %1135 = vmatprep.subr.bf16.mxu0 0
  %1136 = vmatpush1.bf16.msra.mxu0 0
  %1137 = vmatprep.subr.bf16.mxu0 0
  %1138 = vmatpush1.bf16.msra.mxu0 0
  %1139 = vmatprep.subr.bf16.mxu0 0
  %1140 = vmatpush1.bf16.msra.mxu0 0
  %1141 = vmatprep.subr.bf16.mxu0 0
  %1142 = vmatpush1.bf16.msra.mxu0 0
  %1143 = vmatprep.subr.bf16.mxu0 0
  %1144 = vmatpush1.bf16.msra.mxu0 0
  %1145 = vmatprep.subr.bf16.mxu0 0
  %1146 = vmatpush1.bf16.msra.mxu0 0
  %1147 = vmatprep.subr.bf16.mxu0 0
  %1148 = vmatpush1.bf16.msra.mxu0 0
  %1149 = vmatprep.subr.bf16.mxu0 0
  %1150 = vmatpush1.bf16.msra.mxu0 0
  %1151 = vmatprep.subr.bf16.mxu0 0
  %1152 = vmatpush1.bf16.msra.mxu0 0
  %1153 = vmatprep.subr.bf16.mxu0 0
  %1154 = vmatpush1.bf16.msra.mxu0 0
  %1155 = vmatprep.subr.bf16.mxu0 0
  %1156 = vmatpush1.bf16.msra.mxu0 0
  %1157 = vmatprep.subr.bf16.mxu0 0
  %1158 = vmatpush1.bf16.msra.mxu0 0
  %1159 = vmatprep.subr.bf16.mxu0 0
  %1160 = vmatpush1.bf16.msra.mxu0 0
  %1161 = vmatprep.mubr.bf16.mxu0 0
  %1162 = vmatmul.mubr.bf16.gmra.mrb[0].mxu0 %v1014
  %v1163 = vpop.f32.mrb[0].mxu0
  %v1164 = vadd.f32 %v323, %v1163
  %v1165 = vpop.f32.mrb[0].mxu0
  %v1166 = vpop.f32.mrb[0].mxu0
  %v1167 = vpop.f32.mrb[0].mxu0
  %1168 = vdwg.mxu0
  %v1169 = vxor.u32 %v1164, 2147483648
  %v1170 = vmul.f32 %v1169, 1.442695
  %v1171 = vpow.pop %v1170
  %v1172 = vadd.f32 %v1171, 1.0
  %v1173 = vrcp.pop %v1172
  %v1174 = vmul.f32 1.0, %v1173
  %v1175 = vmul.f32 %v1174, 2.0
  %v1176 = vsub.f32 %v1175, 1.0
  %v1177 = vmul.f32 %v1174, %v1002
  %1179 = vrot.lane.b32.xlu0 %v1176, 64
  %v1180 = vpop.permute.xlu0 %1179
  %v1182 = vmul.f32 %v1174, %v1180
  %1184 = vrot.lane.b32.xlu0 %v1182, 32
  %v1185 = vpop.permute.xlu0 %1184
  %v1187 = vadd.f32 %v1177, %v1185
  %v1188 = vtanh.pop %v1187
  %1190 = vrot.lane.b32.xlu0 %v1188, 64
  %v1191 = vpop.permute.xlu0 %1190
  %v1193 = vmul.f32 %v1174, %v1191
  %v1194 = vpack.c.bf16 %v1193, %v1193
  %1196 = vrot.lane.b32.xlu0 %v1194, 32
  %v1197 = vpop.permute.xlu0 %1196
  %v1199 = vsel %vm362, %v1197, 0
  %1201 = vmatprep.subr.bf16.mxu0 0
  %1202 = vmatpush1.bf16.msra.mxu0 %v449
  %1203 = vmatprep.subr.bf16.mxu0 0
  %1204 = vmatpush1.bf16.msra.mxu0 %v450
  %1205 = vmatprep.subr.bf16.mxu0 0
  %1206 = vmatpush1.bf16.msra.mxu0 0
  %1207 = vmatprep.subr.bf16.mxu0 0
  %1208 = vmatpush1.bf16.msra.mxu0 0
  %1209 = vmatprep.subr.bf16.mxu0 0
  %1210 = vmatpush1.bf16.msra.mxu0 0
  %1211 = vmatprep.subr.bf16.mxu0 0
  %1212 = vmatpush1.bf16.msra.mxu0 0
  %1213 = vmatprep.subr.bf16.mxu0 0
  %1214 = vmatpush1.bf16.msra.mxu0 0
  %1215 = vmatprep.subr.bf16.mxu0 0
  %1216 = vmatpush1.bf16.msra.mxu0 0
  %1217 = vmatprep.subr.bf16.mxu0 0
  %1218 = vmatpush1.bf16.msra.mxu0 0
  %1219 = vmatprep.subr.bf16.mxu0 0
  %1220 = vmatpush1.bf16.msra.mxu0 0
  %1221 = vmatprep.subr.bf16.mxu0 0
  %1222 = vmatpush1.bf16.msra.mxu0 0
  %1223 = vmatprep.subr.bf16.mxu0 0
  %1224 = vmatpush1.bf16.msra.mxu0 0
  %1225 = vmatprep.subr.bf16.mxu0 0
  %1226 = vmatpush1.bf16.msra.mxu0 0
  %1227 = vmatprep.subr.bf16.mxu0 0
  %1228 = vmatpush1.bf16.msra.mxu0 0
  %1229 = vmatprep.subr.bf16.mxu0 0
  %1230 = vmatpush1.bf16.msra.mxu0 0
  %1231 = vmatprep.subr.bf16.mxu0 0
  %1232 = vmatpush1.bf16.msra.mxu0 0
  %1233 = vmatprep.mubr.bf16.mxu0 0
  %1234 = vmatmul.mubr.bf16.gmra.mrb[0].mxu0 %v1199
  %v1235 = vpop.f32.mrb[0].mxu0
  %v1236 = vadd.f32 %v436, %v1235
  %v1237 = vpop.f32.mrb[0].mxu0
  %v1238 = vpop.f32.mrb[0].mxu0
  %v1239 = vpop.f32.mrb[0].mxu0
  %1240 = vdwg.mxu0
  %v1241 = vpack.c.bf16 %v1127, %v1127
  %1243 = vrot.lane.b32.xlu0 %v1241, 32
  %v1244 = vpop.permute.xlu0 %1243
  %v1246 = vsel %vm362, %v1244, 0
  %1248 = vmatprep.subr.bf16.mxu0 0
  %1249 = vmatpush1.bf16.msra.mxu0 %v504
  %1250 = vmatprep.subr.bf16.mxu0 0
  %1251 = vmatpush1.bf16.msra.mxu0 %v505
  %1252 = vmatprep.subr.bf16.mxu0 0
  %1253 = vmatpush1.bf16.msra.mxu0 0
  %1254 = vmatprep.subr.bf16.mxu0 0
  %1255 = vmatpush1.bf16.msra.mxu0 0
  %1256 = vmatprep.subr.bf16.mxu0 0
  %1257 = vmatpush1.bf16.msra.mxu0 0
  %1258 = vmatprep.subr.bf16.mxu0 0
  %1259 = vmatpush1.bf16.msra.mxu0 0
  %1260 = vmatprep.subr.bf16.mxu0 0
  %1261 = vmatpush1.bf16.msra.mxu0 0
  %1262 = vmatprep.subr.bf16.mxu0 0
  %1263 = vmatpush1.bf16.msra.mxu0 0
  %1264 = vmatprep.subr.bf16.mxu0 0
  %1265 = vmatpush1.bf16.msra.mxu0 0
  %1266 = vmatprep.subr.bf16.mxu0 0
  %1267 = vmatpush1.bf16.msra.mxu0 0
  %1268 = vmatprep.subr.bf16.mxu0 0
  %1269 = vmatpush1.bf16.msra.mxu0 0
  %1270 = vmatprep.subr.bf16.mxu0 0
  %1271 = vmatpush1.bf16.msra.mxu0 0
  %1272 = vmatprep.subr.bf16.mxu0 0
  %1273 = vmatpush1.bf16.msra.mxu0 0
  %1274 = vmatprep.subr.bf16.mxu0 0
  %1275 = vmatpush1.bf16.msra.mxu0 0
  %1276 = vmatprep.subr.bf16.mxu0 0
  %1277 = vmatpush1.bf16.msra.mxu0 0
  %1278 = vmatprep.subr.bf16.mxu0 0
  %1279 = vmatpush1.bf16.msra.mxu0 0
  %1280 = vmatprep.mubr.bf16.mxu0 0
  %1281 = vmatmul.mubr.bf16.gmra.mrb[0].mxu0 %v1246
  %v1282 = vpop.f32.mrb[0].mxu0
  %v1283 = vadd.f32 %v1236, %v1282
  %v1284 = vpop.f32.mrb[0].mxu0
  %v1285 = vpop.f32.mrb[0].mxu0
  %v1286 = vpop.f32.mrb[0].mxu0
  %1287 = vdwg.mxu0
  %v1288 = vxor.u32 %v1283, 2147483648
  %v1289 = vmul.f32 %v1288, 1.442695
  %v1290 = vpow.pop %v1289
  %v1291 = vadd.f32 %v1290, 1.0
  %v1292 = vrcp.pop %v1291
  %v1293 = vmul.f32 1.0, %v1292
  %v1294 = vmul.f32 %v1293, 2.0
  %v1295 = vsub.f32 %v1294, 1.0
  %v1296 = vmul.f32 %v1293, %v1121
  %1298 = vrot.lane.b32.xlu0 %v1295, 64
  %v1299 = vpop.permute.xlu0 %1298
  %v1301 = vmul.f32 %v1293, %v1299
  %1303 = vrot.lane.b32.xlu0 %v1301, 32
  %v1304 = vpop.permute.xlu0 %1303
  %v1306 = vadd.f32 %v1296, %v1304
  %v1307 = vtanh.pop %v1306
  %1309 = vrot.lane.b32.xlu0 %v1307, 64
  %v1310 = vpop.permute.xlu0 %1309
  %v1312 = vmul.f32 %v1293, %v1310
  %v1313 = vadd.f32 %v1128, %v1312
  %1314 = vmatprep.subr.bf16.mxu0 0
  %1315 = vmatpush1.bf16.msra.mxu0 %v358
  %1316 = vmatprep.subr.bf16.mxu0 0
  %1317 = vmatpush1.bf16.msra.mxu0 %v359
  %1318 = vmatprep.subr.bf16.mxu0 0
  %1319 = vmatpush1.bf16.msra.mxu0 0
  %1320 = vmatprep.subr.bf16.mxu0 0
  %1321 = vmatpush1.bf16.msra.mxu0 0
  %1322 = vmatprep.subr.bf16.mxu0 0
  %1323 = vmatpush1.bf16.msra.mxu0 0
  %1324 = vmatprep.subr.bf16.mxu0 0
  %1325 = vmatpush1.bf16.msra.mxu0 0
  %1326 = vmatprep.subr.bf16.mxu0 0
  %1327 = vmatpush1.bf16.msra.mxu0 0
  %1328 = vmatprep.subr.bf16.mxu0 0
  %1329 = vmatpush1.bf16.msra.mxu0 0
  %1330 = vmatprep.subr.bf16.mxu0 0
  %1331 = vmatpush1.bf16.msra.mxu0 0
  %1332 = vmatprep.subr.bf16.mxu0 0
  %1333 = vmatpush1.bf16.msra.mxu0 0
  %1334 = vmatprep.subr.bf16.mxu0 0
  %1335 = vmatpush1.bf16.msra.mxu0 0
  %1336 = vmatprep.subr.bf16.mxu0 0
  %1337 = vmatpush1.bf16.msra.mxu0 0
  %1338 = vmatprep.subr.bf16.mxu0 0
  %1339 = vmatpush1.bf16.msra.mxu0 0
  %1340 = vmatprep.subr.bf16.mxu0 0
  %1341 = vmatpush1.bf16.msra.mxu0 0
  %1342 = vmatprep.subr.bf16.mxu0 0
  %1343 = vmatpush1.bf16.msra.mxu0 0
  %1344 = vmatprep.subr.bf16.mxu0 0
  %1345 = vmatpush1.bf16.msra.mxu0 0
  %1346 = vmatprep.mubr.bf16.mxu0 0
  %1347 = vmatmul.mubr.bf16.gmra.mrb[0].mxu0 %v1199
  %v1348 = vpop.f32.mrb[0].mxu0
  %v1349 = vadd.f32 %v326, %v1348
  %v1350 = vpop.f32.mrb[0].mxu0
  %v1351 = vpop.f32.mrb[0].mxu0
  %v1352 = vpop.f32.mrb[0].mxu0
  %1353 = vdwg.mxu0
  %v1354 = vxor.u32 %v1349, 2147483648
  %v1355 = vmul.f32 %v1354, 1.442695
  %v1356 = vpow.pop %v1355
  %v1357 = vadd.f32 %v1356, 1.0
  %v1358 = vrcp.pop %v1357
  %v1359 = vmul.f32 1.0, %v1358
  %v1360 = vmul.f32 %v1359, 2.0
  %v1361 = vsub.f32 %v1360, 1.0
  %v1362 = vmul.f32 %v1359, %v1187
  %1364 = vrot.lane.b32.xlu0 %v1361, 64
  %v1365 = vpop.permute.xlu0 %1364
  %v1367 = vmul.f32 %v1359, %v1365
  %1369 = vrot.lane.b32.xlu0 %v1367, 32
  %v1370 = vpop.permute.xlu0 %1369
  %v1372 = vadd.f32 %v1362, %v1370
  %v1373 = vtanh.pop %v1372
  %1375 = vrot.lane.b32.xlu0 %v1373, 64
  %v1376 = vpop.permute.xlu0 %1375
  %v1378 = vmul.f32 %v1359, %v1376
  %v1379 = vpack.c.bf16 %v1378, %v1378
  %1381 = vrot.lane.b32.xlu0 %v1379, 32
  %v1382 = vpop.permute.xlu0 %1381
  %v1384 = vsel %vm362, %v1382, 0
  %1386 = vmatprep.subr.bf16.mxu0 0
  %1387 = vmatpush1.bf16.msra.mxu0 %v449
  %1388 = vmatprep.subr.bf16.mxu0 0
  %1389 = vmatpush1.bf16.msra.mxu0 %v450
  %1390 = vmatprep.subr.bf16.mxu0 0
  %1391 = vmatpush1.bf16.msra.mxu0 0
  %1392 = vmatprep.subr.bf16.mxu0 0
  %1393 = vmatpush1.bf16.msra.mxu0 0
  %1394 = vmatprep.subr.bf16.mxu0 0
  %1395 = vmatpush1.bf16.msra.mxu0 0
  %1396 = vmatprep.subr.bf16.mxu0 0
  %1397 = vmatpush1.bf16.msra.mxu0 0
  %1398 = vmatprep.subr.bf16.mxu0 0
  %1399 = vmatpush1.bf16.msra.mxu0 0
  %1400 = vmatprep.subr.bf16.mxu0 0
  %1401 = vmatpush1.bf16.msra.mxu0 0
  %1402 = vmatprep.subr.bf16.mxu0 0
  %1403 = vmatpush1.bf16.msra.mxu0 0
  %1404 = vmatprep.subr.bf16.mxu0 0
  %1405 = vmatpush1.bf16.msra.mxu0 0
  %1406 = vmatprep.subr.bf16.mxu0 0
  %1407 = vmatpush1.bf16.msra.mxu0 0
  %1408 = vmatprep.subr.bf16.mxu0 0
  %1409 = vmatpush1.bf16.msra.mxu0 0
  %1410 = vmatprep.subr.bf16.mxu0 0
  %1411 = vmatpush1.bf16.msra.mxu0 0
  %1412 = vmatprep.subr.bf16.mxu0 0
  %1413 = vmatpush1.bf16.msra.mxu0 0
  %1414 = vmatprep.subr.bf16.mxu0 0
  %1415 = vmatpush1.bf16.msra.mxu0 0
  %1416 = vmatprep.subr.bf16.mxu0 0
  %1417 = vmatpush1.bf16.msra.mxu0 0
  %1418 = vmatprep.mubr.bf16.mxu0 0
  %1419 = vmatmul.mubr.bf16.gmra.mrb[0].mxu0 %v1384
  %v1420 = vpop.f32.mrb[0].mxu0
  %v1421 = vadd.f32 %v436, %v1420
  %v1422 = vpop.f32.mrb[0].mxu0
  %v1423 = vpop.f32.mrb[0].mxu0
  %v1424 = vpop.f32.mrb[0].mxu0
  %1425 = vdwg.mxu0
  %v1426 = vpack.c.bf16 %v1312, %v1312
  %1428 = vrot.lane.b32.xlu0 %v1426, 32
  %v1429 = vpop.permute.xlu0 %1428
  %v1431 = vsel %vm362, %v1429, 0
  %1433 = vmatprep.subr.bf16.mxu0 0
  %1434 = vmatpush1.bf16.msra.mxu0 %v504
  %1435 = vmatprep.subr.bf16.mxu0 0
  %1436 = vmatpush1.bf16.msra.mxu0 %v505
  %1437 = vmatprep.subr.bf16.mxu0 0
  %1438 = vmatpush1.bf16.msra.mxu0 0
  %1439 = vmatprep.subr.bf16.mxu0 0
  %1440 = vmatpush1.bf16.msra.mxu0 0
  %1441 = vmatprep.subr.bf16.mxu0 0
  %1442 = vmatpush1.bf16.msra.mxu0 0
  %1443 = vmatprep.subr.bf16.mxu0 0
  %1444 = vmatpush1.bf16.msra.mxu0 0
  %1445 = vmatprep.subr.bf16.mxu0 0
  %1446 = vmatpush1.bf16.msra.mxu0 0
  %1447 = vmatprep.subr.bf16.mxu0 0
  %1448 = vmatpush1.bf16.msra.mxu0 0
  %1449 = vmatprep.subr.bf16.mxu0 0
  %1450 = vmatpush1.bf16.msra.mxu0 0
  %1451 = vmatprep.subr.bf16.mxu0 0
  %1452 = vmatpush1.bf16.msra.mxu0 0
  %1453 = vmatprep.subr.bf16.mxu0 0
  %1454 = vmatpush1.bf16.msra.mxu0 0
  %1455 = vmatprep.subr.bf16.mxu0 0
  %1456 = vmatpush1.bf16.msra.mxu0 0
  %1457 = vmatprep.subr.bf16.mxu0 0
  %1458 = vmatpush1.bf16.msra.mxu0 0
  %1459 = vmatprep.subr.bf16.mxu0 0
  %1460 = vmatpush1.bf16.msra.mxu0 0
  %1461 = vmatprep.subr.bf16.mxu0 0
  %1462 = vmatpush1.bf16.msra.mxu0 0
  %1463 = vmatprep.subr.bf16.mxu0 0
  %1464 = vmatpush1.bf16.msra.mxu0 0
  %1465 = vmatprep.mubr.bf16.mxu0 0
  %1466 = vmatmul.mubr.bf16.gmra.mrb[0].mxu0 %v1431
  %v1467 = vpop.f32.mrb[0].mxu0
  %v1468 = vadd.f32 %v1421, %v1467
  %v1469 = vpop.f32.mrb[0].mxu0
  %v1470 = vpop.f32.mrb[0].mxu0
  %v1471 = vpop.f32.mrb[0].mxu0
  %1472 = vdwg.mxu0
  %v1473 = vxor.u32 %v1468, 2147483648
  %v1474 = vmul.f32 %v1473, 1.442695
  %v1475 = vpow.pop %v1474
  %v1476 = vadd.f32 %v1475, 1.0
  %v1477 = vrcp.pop %v1476
  %v1478 = vmul.f32 1.0, %v1477
  %v1479 = vmul.f32 %v1478, 2.0
  %v1480 = vsub.f32 %v1479, 1.0
  %v1481 = vmul.f32 %v1478, %v1306
  %1483 = vrot.lane.b32.xlu0 %v1480, 64
  %v1484 = vpop.permute.xlu0 %1483
  %v1486 = vmul.f32 %v1478, %v1484
  %1488 = vrot.lane.b32.xlu0 %v1486, 32
  %v1489 = vpop.permute.xlu0 %1488
  %v1491 = vadd.f32 %v1481, %v1489
  %v1492 = vtanh.pop %v1491
  %1494 = vrot.lane.b32.xlu0 %v1492, 64
  %v1495 = vpop.permute.xlu0 %1494
  %v1497 = vmul.f32 %v1478, %v1495
  %v1498 = vadd.f32 %v1313, %v1497
  %1499 = vmatprep.subr.bf16.mxu0 0
  %1500 = vmatpush1.bf16.msra.mxu0 %v358
  %1501 = vmatprep.subr.bf16.mxu0 0
  %1502 = vmatpush1.bf16.msra.mxu0 %v359
  %1503 = vmatprep.subr.bf16.mxu0 0
  %1504 = vmatpush1.bf16.msra.mxu0 0
  %1505 = vmatprep.subr.bf16.mxu0 0
  %1506 = vmatpush1.bf16.msra.mxu0 0
  %1507 = vmatprep.subr.bf16.mxu0 0
  %1508 = vmatpush1.bf16.msra.mxu0 0
  %1509 = vmatprep.subr.bf16.mxu0 0
  %1510 = vmatpush1.bf16.msra.mxu0 0
  %1511 = vmatprep.subr.bf16.mxu0 0
  %1512 = vmatpush1.bf16.msra.mxu0 0
  %1513 = vmatprep.subr.bf16.mxu0 0
  %1514 = vmatpush1.bf16.msra.mxu0 0
  %1515 = vmatprep.subr.bf16.mxu0 0
  %1516 = vmatpush1.bf16.msra.mxu0 0
  %1517 = vmatprep.subr.bf16.mxu0 0
  %1518 = vmatpush1.bf16.msra.mxu0 0
  %1519 = vmatprep.subr.bf16.mxu0 0
  %1520 = vmatpush1.bf16.msra.mxu0 0
  %1521 = vmatprep.subr.bf16.mxu0 0
  %1522 = vmatpush1.bf16.msra.mxu0 0
  %1523 = vmatprep.subr.bf16.mxu0 0
  %1524 = vmatpush1.bf16.msra.mxu0 0
  %1525 = vmatprep.subr.bf16.mxu0 0
  %1526 = vmatpush1.bf16.msra.mxu0 0
  %1527 = vmatprep.subr.bf16.mxu0 0
  %1528 = vmatpush1.bf16.msra.mxu0 0
  %1529 = vmatprep.subr.bf16.mxu0 0
  %1530 = vmatpush1.bf16.msra.mxu0 0
  %1531 = vmatprep.mubr.bf16.mxu0 0
  %1532 = vmatmul.mubr.bf16.gmra.mrb[0].mxu0 %v1384
  %v1533 = vpop.f32.mrb[0].mxu0
  %v1534 = vadd.f32 %v331, %v1533
  %v1535 = vpop.f32.mrb[0].mxu0
  %v1536 = vpop.f32.mrb[0].mxu0
  %v1537 = vpop.f32.mrb[0].mxu0
  %1538 = vdwg.mxu0
  %v1539 = vxor.u32 %v1534, 2147483648
  %v1540 = vmul.f32 %v1539, 1.442695
  %v1541 = vpow.pop %v1540
  %v1542 = vadd.f32 %v1541, 1.0
  %v1543 = vrcp.pop %v1542
  %v1544 = vmul.f32 1.0, %v1543
  %v1545 = vmul.f32 %v1544, 2.0
  %v1546 = vsub.f32 %v1545, 1.0
  %v1547 = vmul.f32 %v1544, %v1372
  %1549 = vrot.lane.b32.xlu0 %v1546, 64
  %v1550 = vpop.permute.xlu0 %1549
  %v1552 = vmul.f32 %v1544, %v1550
  %1554 = vrot.lane.b32.xlu0 %v1552, 32
  %v1555 = vpop.permute.xlu0 %1554
  %v1557 = vadd.f32 %v1547, %v1555
  %v1558 = vtanh.pop %v1557
  %1560 = vrot.lane.b32.xlu0 %v1558, 64
  %v1561 = vpop.permute.xlu0 %1560
  %v1563 = vmul.f32 %v1544, %v1561
  %v1564 = vpack.c.bf16 %v1563, %v1563
  %1566 = vrot.lane.b32.xlu0 %v1564, 32
  %v1567 = vpop.permute.xlu0 %1566
  %v1569 = vsel %vm362, %v1567, 0
  %1571 = vmatprep.subr.bf16.mxu0 0
  %1572 = vmatpush1.bf16.msra.mxu0 %v449
  %1573 = vmatprep.subr.bf16.mxu0 0
  %1574 = vmatpush1.bf16.msra.mxu0 %v450
  %1575 = vmatprep.subr.bf16.mxu0 0
  %1576 = vmatpush1.bf16.msra.mxu0 0
  %1577 = vmatprep.subr.bf16.mxu0 0
  %1578 = vmatpush1.bf16.msra.mxu0 0
  %1579 = vmatprep.subr.bf16.mxu0 0
  %1580 = vmatpush1.bf16.msra.mxu0 0
  %1581 = vmatprep.subr.bf16.mxu0 0
  %1582 = vmatpush1.bf16.msra.mxu0 0
  %1583 = vmatprep.subr.bf16.mxu0 0
  %1584 = vmatpush1.bf16.msra.mxu0 0
  %1585 = vmatprep.subr.bf16.mxu0 0
  %1586 = vmatpush1.bf16.msra.mxu0 0
  %1587 = vmatprep.subr.bf16.mxu0 0
  %1588 = vmatpush1.bf16.msra.mxu0 0
  %1589 = vmatprep.subr.bf16.mxu0 0
  %1590 = vmatpush1.bf16.msra.mxu0 0
  %1591 = vmatprep.subr.bf16.mxu0 0
  %1592 = vmatpush1.bf16.msra.mxu0 0
  %1593 = vmatprep.subr.bf16.mxu0 0
  %1594 = vmatpush1.bf16.msra.mxu0 0
  %1595 = vmatprep.subr.bf16.mxu0 0
  %1596 = vmatpush1.bf16.msra.mxu0 0
  %1597 = vmatprep.subr.bf16.mxu0 0
  %1598 = vmatpush1.bf16.msra.mxu0 0
  %1599 = vmatprep.subr.bf16.mxu0 0
  %1600 = vmatpush1.bf16.msra.mxu0 0
  %1601 = vmatprep.subr.bf16.mxu0 0
  %1602 = vmatpush1.bf16.msra.mxu0 0
  %1603 = vmatprep.mubr.bf16.mxu0 0
  %1604 = vmatmul.mubr.bf16.gmra.mrb[0].mxu0 %v1569
  %v1605 = vpop.f32.mrb[0].mxu0
  %v1606 = vadd.f32 %v436, %v1605
  %v1607 = vpop.f32.mrb[0].mxu0
  %v1608 = vpop.f32.mrb[0].mxu0
  %v1609 = vpop.f32.mrb[0].mxu0
  %1610 = vdwg.mxu0
  %v1611 = vpack.c.bf16 %v1497, %v1497
  %1613 = vrot.lane.b32.xlu0 %v1611, 32
  %v1614 = vpop.permute.xlu0 %1613
  %v1616 = vsel %vm362, %v1614, 0
  %1618 = vmatprep.subr.bf16.mxu0 0
  %1619 = vmatpush1.bf16.msra.mxu0 %v504
  %1620 = vmatprep.subr.bf16.mxu0 0
  %1621 = vmatpush1.bf16.msra.mxu0 %v505
  %1622 = vmatprep.subr.bf16.mxu0 0
  %1623 = vmatpush1.bf16.msra.mxu0 0
  %1624 = vmatprep.subr.bf16.mxu0 0
  %1625 = vmatpush1.bf16.msra.mxu0 0
  %1626 = vmatprep.subr.bf16.mxu0 0
  %1627 = vmatpush1.bf16.msra.mxu0 0
  %1628 = vmatprep.subr.bf16.mxu0 0
  %1629 = vmatpush1.bf16.msra.mxu0 0
  %1630 = vmatprep.subr.bf16.mxu0 0
  %1631 = vmatpush1.bf16.msra.mxu0 0
  %1632 = vmatprep.subr.bf16.mxu0 0
  %1633 = vmatpush1.bf16.msra.mxu0 0
  %1634 = vmatprep.subr.bf16.mxu0 0
  %1635 = vmatpush1.bf16.msra.mxu0 0
  %1636 = vmatprep.subr.bf16.mxu0 0
  %1637 = vmatpush1.bf16.msra.mxu0 0
  %1638 = vmatprep.subr.bf16.mxu0 0
  %1639 = vmatpush1.bf16.msra.mxu0 0
  %1640 = vmatprep.subr.bf16.mxu0 0
  %1641 = vmatpush1.bf16.msra.mxu0 0
  %1642 = vmatprep.subr.bf16.mxu0 0
  %1643 = vmatpush1.bf16.msra.mxu0 0
  %1644 = vmatprep.subr.bf16.mxu0 0
  %1645 = vmatpush1.bf16.msra.mxu0 0
  %1646 = vmatprep.subr.bf16.mxu0 0
  %1647 = vmatpush1.bf16.msra.mxu0 0
  %1648 = vmatprep.subr.bf16.mxu0 0
  %1649 = vmatpush1.bf16.msra.mxu0 0
  %1650 = vmatprep.mubr.bf16.mxu0 0
  %1651 = vmatmul.mubr.bf16.gmra.mrb[0].mxu0 %v1616
  %v1652 = vpop.f32.mrb[0].mxu0
  %v1653 = vadd.f32 %v1606, %v1652
  %v1654 = vpop.f32.mrb[0].mxu0
  %v1655 = vpop.f32.mrb[0].mxu0
  %v1656 = vpop.f32.mrb[0].mxu0
  %1657 = vdwg.mxu0
  %v1658 = vxor.u32 %v1653, 2147483648
  %v1659 = vmul.f32 %v1658, 1.442695
  %v1660 = vpow.pop %v1659
  %v1661 = vadd.f32 %v1660, 1.0
  %v1662 = vrcp.pop %v1661
  %v1663 = vmul.f32 1.0, %v1662
  %v1664 = vmul.f32 %v1663, 2.0
  %v1665 = vsub.f32 %v1664, 1.0
  %v1666 = vmul.f32 %v1663, %v1491
  %1668 = vrot.lane.b32.xlu0 %v1665, 64
  %v1669 = vpop.permute.xlu0 %1668
  %v1671 = vmul.f32 %v1663, %v1669
  %1673 = vrot.lane.b32.xlu0 %v1671, 32
  %v1674 = vpop.permute.xlu0 %1673
  %v1676 = vadd.f32 %v1666, %v1674
  %v1677 = vtanh.pop %v1676
  %1679 = vrot.lane.b32.xlu0 %v1677, 64
  %v1680 = vpop.permute.xlu0 %1679
  %v1682 = vmul.f32 %v1663, %v1680
  %v1683 = vadd.f32 %v1498, %v1682
  %1684 = vmatprep.subr.bf16.mxu0 0
  %1685 = vmatpush1.bf16.msra.mxu0 %v358
  %1686 = vmatprep.subr.bf16.mxu0 0
  %1687 = vmatpush1.bf16.msra.mxu0 %v359
  %1688 = vmatprep.subr.bf16.mxu0 0
  %1689 = vmatpush1.bf16.msra.mxu0 0
  %1690 = vmatprep.subr.bf16.mxu0 0
  %1691 = vmatpush1.bf16.msra.mxu0 0
  %1692 = vmatprep.subr.bf16.mxu0 0
  %1693 = vmatpush1.bf16.msra.mxu0 0
  %1694 = vmatprep.subr.bf16.mxu0 0
  %1695 = vmatpush1.bf16.msra.mxu0 0
  %1696 = vmatprep.subr.bf16.mxu0 0
  %1697 = vmatpush1.bf16.msra.mxu0 0
  %1698 = vmatprep.subr.bf16.mxu0 0
  %1699 = vmatpush1.bf16.msra.mxu0 0
  %1700 = vmatprep.subr.bf16.mxu0 0
  %1701 = vmatpush1.bf16.msra.mxu0 0
  %1702 = vmatprep.subr.bf16.mxu0 0
  %1703 = vmatpush1.bf16.msra.mxu0 0
  %1704 = vmatprep.subr.bf16.mxu0 0
  %1705 = vmatpush1.bf16.msra.mxu0 0
  %1706 = vmatprep.subr.bf16.mxu0 0
  %1707 = vmatpush1.bf16.msra.mxu0 0
  %1708 = vmatprep.subr.bf16.mxu0 0
  %1709 = vmatpush1.bf16.msra.mxu0 0
  %1710 = vmatprep.subr.bf16.mxu0 0
  %1711 = vmatpush1.bf16.msra.mxu0 0
  %1712 = vmatprep.subr.bf16.mxu0 0
  %1713 = vmatpush1.bf16.msra.mxu0 0
  %1714 = vmatprep.subr.bf16.mxu0 0
  %1715 = vmatpush1.bf16.msra.mxu0 0
  %1716 = vmatprep.mubr.bf16.mxu0 0
  %1717 = vmatmul.mubr.bf16.gmra.mrb[0].mxu0 %v1569
  %v1718 = vpop.f32.mrb[0].mxu0
  %v1719 = vadd.f32 %v334, %v1718
  %v1720 = vpop.f32.mrb[0].mxu0
  %v1721 = vpop.f32.mrb[0].mxu0
  %v1722 = vpop.f32.mrb[0].mxu0
  %1723 = vdwg.mxu0
  %v1724 = vxor.u32 %v1719, 2147483648
  %v1725 = vmul.f32 %v1724, 1.442695
  %v1726 = vpow.pop %v1725
  %v1727 = vadd.f32 %v1726, 1.0
  %v1728 = vrcp.pop %v1727
  %v1729 = vmul.f32 1.0, %v1728
  %v1730 = vmul.f32 %v1729, 2.0
  %v1731 = vsub.f32 %v1730, 1.0
  %v1732 = vmul.f32 %v1729, %v1557
  %1734 = vrot.lane.b32.xlu0 %v1731, 64
  %v1735 = vpop.permute.xlu0 %1734
  %v1737 = vmul.f32 %v1729, %v1735
  %1739 = vrot.lane.b32.xlu0 %v1737, 32
  %v1740 = vpop.permute.xlu0 %1739
  %v1742 = vadd.f32 %v1732, %v1740
  %v1743 = vtanh.pop %v1742
  %1745 = vrot.lane.b32.xlu0 %v1743, 64
  %v1746 = vpop.permute.xlu0 %1745
  %v1748 = vmul.f32 %v1729, %v1746
  %v1749 = vpack.c.bf16 %v1748, %v1748
  %1751 = vrot.lane.b32.xlu0 %v1749, 32
  %v1752 = vpop.permute.xlu0 %1751
  %v1754 = vsel %vm362, %v1752, 0
  %1756 = vmatprep.subr.bf16.mxu0 0
  %1757 = vmatpush1.bf16.msra.mxu0 %v449
  %1758 = vmatprep.subr.bf16.mxu0 0
  %1759 = vmatpush1.bf16.msra.mxu0 %v450
  %1760 = vmatprep.subr.bf16.mxu0 0
  %1761 = vmatpush1.bf16.msra.mxu0 0
  %1762 = vmatprep.subr.bf16.mxu0 0
  %1763 = vmatpush1.bf16.msra.mxu0 0
  %1764 = vmatprep.subr.bf16.mxu0 0
  %1765 = vmatpush1.bf16.msra.mxu0 0
  %1766 = vmatprep.subr.bf16.mxu0 0
  %1767 = vmatpush1.bf16.msra.mxu0 0
  %1768 = vmatprep.subr.bf16.mxu0 0
  %1769 = vmatpush1.bf16.msra.mxu0 0
  %1770 = vmatprep.subr.bf16.mxu0 0
  %1771 = vmatpush1.bf16.msra.mxu0 0
  %1772 = vmatprep.subr.bf16.mxu0 0
  %1773 = vmatpush1.bf16.msra.mxu0 0
  %1774 = vmatprep.subr.bf16.mxu0 0
  %1775 = vmatpush1.bf16.msra.mxu0 0
  %1776 = vmatprep.subr.bf16.mxu0 0
  %1777 = vmatpush1.bf16.msra.mxu0 0
  %1778 = vmatprep.subr.bf16.mxu0 0
  %1779 = vmatpush1.bf16.msra.mxu0 0
  %1780 = vmatprep.subr.bf16.mxu0 0
  %1781 = vmatpush1.bf16.msra.mxu0 0
  %1782 = vmatprep.subr.bf16.mxu0 0
  %1783 = vmatpush1.bf16.msra.mxu0 0
  %1784 = vmatprep.subr.bf16.mxu0 0
  %1785 = vmatpush1.bf16.msra.mxu0 0
  %1786 = vmatprep.subr.bf16.mxu0 0
  %1787 = vmatpush1.bf16.msra.mxu0 0
  %1788 = vmatprep.mubr.bf16.mxu0 0
  %1789 = vmatmul.mubr.bf16.gmra.mrb[0].mxu0 %v1754
  %v1790 = vpop.f32.mrb[0].mxu0
  %v1791 = vadd.f32 %v436, %v1790
  %v1792 = vpop.f32.mrb[0].mxu0
  %v1793 = vpop.f32.mrb[0].mxu0
  %v1794 = vpop.f32.mrb[0].mxu0
  %1795 = vdwg.mxu0
  %v1796 = vpack.c.bf16 %v1682, %v1682
  %1798 = vrot.lane.b32.xlu0 %v1796, 32
  %v1799 = vpop.permute.xlu0 %1798
  %v1801 = vsel %vm362, %v1799, 0
  %1803 = vmatprep.subr.bf16.mxu0 0
  %1804 = vmatpush1.bf16.msra.mxu0 %v504
  %1805 = vmatprep.subr.bf16.mxu0 0
  %1806 = vmatpush1.bf16.msra.mxu0 %v505
  %1807 = vmatprep.subr.bf16.mxu0 0
  %1808 = vmatpush1.bf16.msra.mxu0 0
  %1809 = vmatprep.subr.bf16.mxu0 0
  %1810 = vmatpush1.bf16.msra.mxu0 0
  %1811 = vmatprep.subr.bf16.mxu0 0
  %1812 = vmatpush1.bf16.msra.mxu0 0
  %1813 = vmatprep.subr.bf16.mxu0 0
  %1814 = vmatpush1.bf16.msra.mxu0 0
  %1815 = vmatprep.subr.bf16.mxu0 0
  %1816 = vmatpush1.bf16.msra.mxu0 0
  %1817 = vmatprep.subr.bf16.mxu0 0
  %1818 = vmatpush1.bf16.msra.mxu0 0
  %1819 = vmatprep.subr.bf16.mxu0 0
  %1820 = vmatpush1.bf16.msra.mxu0 0
  %1821 = vmatprep.subr.bf16.mxu0 0
  %1822 = vmatpush1.bf16.msra.mxu0 0
  %1823 = vmatprep.subr.bf16.mxu0 0
  %1824 = vmatpush1.bf16.msra.mxu0 0
  %1825 = vmatprep.subr.bf16.mxu0 0
  %1826 = vmatpush1.bf16.msra.mxu0 0
  %1827 = vmatprep.subr.bf16.mxu0 0
  %1828 = vmatpush1.bf16.msra.mxu0 0
  %1829 = vmatprep.subr.bf16.mxu0 0
  %1830 = vmatpush1.bf16.msra.mxu0 0
  %1831 = vmatprep.subr.bf16.mxu0 0
  %1832 = vmatpush1.bf16.msra.mxu0 0
  %1833 = vmatprep.subr.bf16.mxu0 0
  %1834 = vmatpush1.bf16.msra.mxu0 0
  %1835 = vmatprep.mubr.bf16.mxu0 0
  %1836 = vmatmul.mubr.bf16.gmra.mrb[0].mxu0 %v1801
  %v1837 = vpop.f32.mrb[0].mxu0
  %v1838 = vadd.f32 %v1791, %v1837
  %v1839 = vpop.f32.mrb[0].mxu0
  %v1840 = vpop.f32.mrb[0].mxu0
  %v1841 = vpop.f32.mrb[0].mxu0
  %1842 = vdwg.mxu0
  %v1843 = vxor.u32 %v1838, 2147483648
  %v1844 = vmul.f32 %v1843, 1.442695
  %v1845 = vpow.pop %v1844
  %v1846 = vadd.f32 %v1845, 1.0
  %v1847 = vrcp.pop %v1846
  %v1848 = vmul.f32 1.0, %v1847
  %v1849 = vmul.f32 %v1848, 2.0
  %v1850 = vsub.f32 %v1849, 1.0
  %v1851 = vmul.f32 %v1848, %v1676
  %1853 = vrot.lane.b32.xlu0 %v1850, 64
  %v1854 = vpop.permute.xlu0 %1853
  %v1856 = vmul.f32 %v1848, %v1854
  %1858 = vrot.lane.b32.xlu0 %v1856, 32
  %v1859 = vpop.permute.xlu0 %1858
  %v1861 = vadd.f32 %v1851, %v1859
  %v1862 = vtanh.pop %v1861
  %1864 = vrot.lane.b32.xlu0 %v1862, 64
  %v1865 = vpop.permute.xlu0 %1864
  %v1867 = vmul.f32 %v1848, %v1865
  %v1868 = vadd.f32 %v1683, %v1867
  %v1869 = vmul.f32 %v1868, 0.125
  %1871 = vrot.lane.b32.xlu0 %v1869, 32
  %v1872 = vpop.permute.xlu0 %1871
  %1874 = vst.msk [vmem:[%s12] sm:$0xff] %vm362, %v1872
  %v1875 = vpack.c.bf16 %v1869, %v1869
  %v1876 = vld [vmem:[%s9] sm:$0xf]
  %v1877 = vld [vmem:[%s9 + $0x4] sm:$0xf]
  %v1878 = vld [vmem:[%s9 + $0x8] sm:$0xf]
  %v1879 = vld [vmem:[%s9 + $0xc] sm:$0xf]
  %v1880 = vld [vmem:[%s10] sm:$0x1]
  %v1882 = vlaneseq
  %v1883 = vshrl.u32 %v1882, 7
  %v1884 = vsub.s32 0, %v1883
  %v1885 = vrot.slane %v1880, %v1884
  %1888 = vrot.lane.b32.xlu0 %v1875, 32
  %v1889 = vpop.permute.xlu0 %1888
  %v1894 = vunpack.c.l.b16 %v1876
  %v1895 = vunpack.c.l.b16 %v1877
  %v1896 = vunpack.c.l.b16 %v1878
  %v1897 = vunpack.c.l.b16 %v1879
  %v1898 = vpack.c.b16 %v1895, %v1894
  %v1899 = vpack.c.b16 %v1897, %v1896
  %v1903 = vsel %vm362, %v1889, 0
  %1905 = vmatprep.subr.bf16.mxu0 0
  %1906 = vmatpush1.bf16.msra.mxu0 %v1898
  %1907 = vmatprep.subr.bf16.mxu0 0
  %1908 = vmatpush1.bf16.msra.mxu0 %v1899
  %1909 = vmatprep.subr.bf16.mxu0 0
  %1910 = vmatpush1.bf16.msra.mxu0 0
  %1911 = vmatprep.subr.bf16.mxu0 0
  %1912 = vmatpush1.bf16.msra.mxu0 0
  %1913 = vmatprep.subr.bf16.mxu0 0
  %1914 = vmatpush1.bf16.msra.mxu0 0
  %1915 = vmatprep.subr.bf16.mxu0 0
  %1916 = vmatpush1.bf16.msra.mxu0 0
  %1917 = vmatprep.subr.bf16.mxu0 0
  %1918 = vmatpush1.bf16.msra.mxu0 0
  %1919 = vmatprep.subr.bf16.mxu0 0
  %1920 = vmatpush1.bf16.msra.mxu0 0
  %1921 = vmatprep.subr.bf16.mxu0 0
  %1922 = vmatpush1.bf16.msra.mxu0 0
  %1923 = vmatprep.subr.bf16.mxu0 0
  %1924 = vmatpush1.bf16.msra.mxu0 0
  %1925 = vmatprep.subr.bf16.mxu0 0
  %1926 = vmatpush1.bf16.msra.mxu0 0
  %1927 = vmatprep.subr.bf16.mxu0 0
  %1928 = vmatpush1.bf16.msra.mxu0 0
  %1929 = vmatprep.subr.bf16.mxu0 0
  %1930 = vmatpush1.bf16.msra.mxu0 0
  %1931 = vmatprep.subr.bf16.mxu0 0
  %1932 = vmatpush1.bf16.msra.mxu0 0
  %1933 = vmatprep.subr.bf16.mxu0 0
  %1934 = vmatpush1.bf16.msra.mxu0 0
  %1935 = vmatprep.subr.bf16.mxu0 0
  %1936 = vmatpush1.bf16.msra.mxu0 0
  %1937 = vmatprep.mubr.bf16.mxu0 0
  %1938 = vmatmul.mubr.bf16.gmra.mrb[0].mxu0 %v1903
  %v1939 = vpop.f32.mrb[0].mxu0
  %v1940 = vadd.f32 %v1885, %v1939
  %v1941 = vpop.f32.mrb[0].mxu0
  %v1942 = vpop.f32.mrb[0].mxu0
  %v1943 = vpop.f32.mrb[0].mxu0
  %1944 = vdwg.mxu0
  %vm1945 = vcmask 48128
  %1946 = vst.msk [vmem:[%s11] sm:$0xff] %vm1945, %v1940
  // Predicated region
  $region46: #{har_forward.1} parent=0 // pred_check
    _
  $region47: #{har_forward.1} parent=0 // pred_check_branch
    %1948 = sbr.rel (0) target = $region49
  $region48: #{har_forward.1} parent=0 // pred_region
    _
  $region49: #{har_forward.1} parent=0 // pred_fallthru
    _
  // Predicated region
  $region50: #{har_forward.1} parent=0 // pred_check
    _
  $region51: #{har_forward.1} parent=0 // pred_check_branch
    %1950 = sbr.rel (0) target = $region53
  $region52: #{har_forward.1} parent=0 // pred_region
    _
  $region53: #{har_forward.1} parent=0 // pred_fallthru
    _
  // Predicated region
  $region54: #{har_forward.1} parent=0 // pred_check
    _
  $region55: #{har_forward.1} parent=0 // pred_check_branch
    %1952 = sbr.rel (0) target = $region57
  $region56: #{har_forward.1} parent=0 // pred_region
    _
  $region57: #{har_forward.1} parent=0 // pred_fallthru
    _
  // Predicated region
  $region58: #{har_forward.1} parent=0 // pred_check
    _
  $region59: #{har_forward.1} parent=0 // pred_check_branch
    %1954 = sbr.rel (0) target = $region61
  $region60: #{har_forward.1} parent=0 // pred_region
    _
  $region61: #{har_forward.1} parent=0 // pred_fallthru
    _

</llo_original>
